<compile_context>
chip_gen: v7x
topology: tpu7x:2x2x1
jax: 0.10.0
libtpu: 0.0.40
codegen_flags: <defaults>
</compile_context>

<pallas_src>
import functools

import jax
import jax.numpy as jnp
import numpy as np
from jax.experimental import pallas as pl
from jax.experimental.pallas import tpu as pltpu

LANE = 128


def _round_up(x, m):
    return (x + m - 1) // m * m


def _recurrent_block_kernel(x_ref, w_ref, scale_ref, shift_ref, o_ref, *, t):
    # x_ref    : (1, H, W, Cp)   input, channels zero-padded to Cp (lane-dense)
    # w_ref    : (3, 3*Cp, Cp)   w_ref[ky, kx*Cp + ci, co] = W[ky, kx, ci, co]
    # scale_ref: (1, 1, Cp)      gamma / sqrt(var + eps)            (0 in pad)
    # shift_ref: (1, 1, Cp)      (conv_bias - mean) * scale + beta  (0 in pad)
    # o_ref    : (1, H, W, Cp)
    _, H, W, Cp = x_ref.shape

    x = x_ref[0]                         # (H, W, Cp) f32
    scale = scale_ref[...]               # (1, 1, Cp) — broadcasts over (H, W, Cp)
    shift = shift_ref[...]
    w_top = w_ref[0]                     # ky = 0   (3*Cp, Cp)
    w_mid = w_ref[1]                     # ky = 1
    w_bot = w_ref[2]                     # ky = 2

    zero_col = jnp.zeros((H, 1, Cp), jnp.float32)
    zero_row = jnp.zeros((1, W, Cp), jnp.float32)

    def conv_bn_relu(z):
        # Column (kx) shifted copies: c0(h,w)=z(h,w-1), c2(h,w)=z(h,w+1), 0 at edges.
        c0 = jnp.concatenate([zero_col, z[:, : W - 1, :]], axis=1)
        c2 = jnp.concatenate([z[:, 1:, :], zero_col], axis=1)
        # im2col over kx only -> single lane-dense contraction of depth 3*Cp.
        bcat = jnp.concatenate([c0, z, c2], axis=-1).reshape(H * W, 3 * Cp)

        a_top = jnp.dot(bcat, w_top, preferred_element_type=jnp.float32)
        a_mid = jnp.dot(bcat, w_mid, preferred_element_type=jnp.float32)
        a_bot = jnp.dot(bcat, w_bot, preferred_element_type=jnp.float32)
        a_top = a_top.reshape(H, W, Cp)
        a_mid = a_mid.reshape(H, W, Cp)
        a_bot = a_bot.reshape(H, W, Cp)

        # Row (ky) shifts applied to the matmul OUTPUTS: leading-axis slices, cheap.
        #   out[h] = A_top[h-1] + A_mid[h] + A_bot[h+1]   (zeros outside)
        acc = (a_mid
               + jnp.concatenate([zero_row, a_top[: H - 1]], axis=0)
               + jnp.concatenate([a_bot[1:], zero_row], axis=0))

        y = acc * scale + shift          # fused BN (eval) + conv bias
        return jnp.maximum(y, 0.0)       # ReLU

    # Recurrence: x1 = f(x); then t times x1 = f(x + x1)   (t static -> unrolled)
    x1 = conv_bn_relu(x)
    for _ in range(t):
        x1 = conv_bn_relu(x + x1)

    o_ref[0] = x1.astype(o_ref.dtype)


def recurrent_block_forward(x_nchw, w, b, gamma, beta, r_mean, r_var,
                            *, t=2, eps=1e-5):
    """x_nchw: (N, C, H, W) f32; conv weight w: (C, C, 3, 3). Returns (N, C, H, W)."""
    N, C, H, W = x_nchw.shape
    assert w.shape == (C, C, 3, 3)
    assert t >= 1
    Cp = _round_up(C, LANE)

    # ---- boundary glue (plain JAX): layout + zero channel padding -----------
    x = jnp.transpose(x_nchw, (0, 2, 3, 1))                      # NHWC
    x = jnp.pad(x, ((0, 0), (0, 0), (0, 0), (0, Cp - C)))        # (N,H,W,Cp)

    # weights OIHW -> (ky, kx, ci, co), pad ci/co -> Cp, fold kx into K axis.
    w_t = jnp.transpose(w, (2, 3, 1, 0))                         # (3,3,C,C)
    w_t = jnp.pad(w_t, ((0, 0), (0, 0), (0, Cp - C), (0, Cp - C)))
    w_taps = w_t.reshape(3, 3 * Cp, Cp)                          # (3, 3*Cp, Cp)

    # fold eval-mode BN + conv bias into per-channel scale / shift (0 in padding)
    inv_std = 1.0 / jnp.sqrt(r_var + eps)
    scale = gamma * inv_std
    shift = (b - r_mean) * scale + beta
    scale = jnp.pad(scale, (0, Cp - C)).reshape(1, 1, Cp)
    shift = jnp.pad(shift, (0, Cp - C)).reshape(1, 1, Cp)

    n_apply = t + 1
    cost = pl.CostEstimate(
        flops=int(2 * N * H * W * 9 * Cp * Cp * n_apply),
        transcendentals=0,
        bytes_accessed=int(4 * (x.size + w_taps.size + 2 * Cp + N * H * W * Cp)),
    )

    kernel = functools.partial(_recurrent_block_kernel, t=t)

    out_nhwc = pl.pallas_call(
        kernel,
        out_shape=jax.ShapeDtypeStruct((N, H, W, Cp), jnp.float32),
        grid_spec=pltpu.PrefetchScalarGridSpec(
            num_scalar_prefetch=0,
            grid=(N,),
            in_specs=[
                pl.BlockSpec((1, H, W, Cp), lambda n: (n, 0, 0, 0)),
                pl.BlockSpec((3, 3 * Cp, Cp), lambda n: (0, 0, 0)),
                pl.BlockSpec((1, 1, Cp), lambda n: (0, 0, 0)),
                pl.BlockSpec((1, 1, Cp), lambda n: (0, 0, 0)),
            ],
            out_specs=pl.BlockSpec((1, H, W, Cp), lambda n: (n, 0, 0, 0)),
        ),
        compiler_params=pltpu.CompilerParams(
            dimension_semantics=("parallel",),
            vmem_limit_bytes=64 * 1024 * 1024,
        ),
        cost_estimate=cost,
    )(x, w_taps, scale, shift)

    out = out_nhwc[..., :C]                                      # drop lane padding
    return jnp.transpose(out, (0, 3, 1, 2))                      # back to NCHW


def _reference_forward(x, w, b, gamma, beta, r_mean, r_var, *, t=2, eps=1e-5):
    # pure-JAX replica of the PyTorch forward (eval-mode BatchNorm)
    def f(z):
        y = jax.lax.conv_general_dilated(
            z, w, window_strides=(1, 1), padding=((1, 1), (1, 1)),
            dimension_numbers=("NCHW", "OIHW", "NCHW"),
            precision=jax.lax.Precision.HIGHEST)
        y = y + b[None, :, None, None]
        y = (y - r_mean[None, :, None, None]) * (
            gamma[None, :, None, None]
            / jnp.sqrt(r_var[None, :, None, None] + eps)) + beta[None, :, None, None]
        return jnp.maximum(y, 0.0)

    x1 = None
    for i in range(t):
        if i == 0:
            x1 = f(x)
        x1 = f(x + x1)
    return x1


if __name__ == "__main__":
    N, C, H, W = 2, 4, 16, 16
    t = 2

    key = jax.random.PRNGKey(0)
    kx, kw, kb, kg, kbe, km, kv = jax.random.split(key, 7)

    x = jax.random.normal(kx, (N, C, H, W), jnp.float32)
    # deterministic parameter init (shapes per nn.Conv2d / nn.BatchNorm2d)
    w = jax.random.normal(kw, (C, C, 3, 3), jnp.float32) * 0.1
    b = jax.random.normal(kb, (C,), jnp.float32) * 0.1
    gamma = 1.0 + 0.1 * jax.random.normal(kg, (C,), jnp.float32)
    beta = 0.1 * jax.random.normal(kbe, (C,), jnp.float32)
    r_mean = 0.1 * jax.random.normal(km, (C,), jnp.float32)
    r_var = jnp.abs(jax.random.normal(kv, (C,), jnp.float32)) + 0.5

    out = recurrent_block_forward(x, w, b, gamma, beta, r_mean, r_var, t=t)
    out = jax.block_until_ready(out)

    ref = _reference_forward(x, w, b, gamma, beta, r_mean, r_var, t=t)
    np.testing.assert_allclose(np.asarray(out), np.asarray(ref),
                               rtol=1e-4, atol=1e-4)
    print("KERNEL_OK")
</pallas_src>

<mosaic_0001>
module attributes {stable_mosaic.version = 11 : i64} {
  func.func @_recurrent_block_kernel(%arg0: i32, %arg1: memref<1x16x16x128xf32, #tpu.memory_space<vmem>>, %arg2: memref<3x384x128xf32, #tpu.memory_space<vmem>>, %arg3: memref<1x1x128xf32, #tpu.memory_space<vmem>>, %arg4: memref<1x1x128xf32, #tpu.memory_space<vmem>>, %arg5: memref<1x16x16x128xf32, #tpu.memory_space<vmem>>) attributes {dimension_semantics = [#tpu.dimension_semantics<parallel>], iteration_bounds = array<i64: 2>, scalar_prefetch = 0 : i64, scratch_operands = 0 : i64, tpu.core_type = #tpu.core_type<tc>, window_params = [{transform_indices = @transform_0, window_bounds = array<i64: 1, 16, 16, 128>}, {pipeline_mode = #tpu.pipeline_mode<synchronous>, transform_indices = @transform_1, window_bounds = array<i64: 3, 384, 128>}, {pipeline_mode = #tpu.pipeline_mode<synchronous>, transform_indices = @transform_2, window_bounds = array<i64: 1, 1, 128>}, {pipeline_mode = #tpu.pipeline_mode<synchronous>, transform_indices = @transform_3, window_bounds = array<i64: 1, 1, 128>}, {transform_indices = @transform_4, window_bounds = array<i64: 1, 16, 16, 128>}]} {
    %c0 = arith.constant 0 : index
    %c0_0 = arith.constant 0 : index
    %c0_1 = arith.constant 0 : index
    %c0_2 = arith.constant 0 : index
    %0 = vector.load %arg1[%c0, %c0_0, %c0_1, %c0_2] : memref<1x16x16x128xf32, #tpu.memory_space<vmem>>, vector<1x16x16x128xf32>
    %1 = vector.shape_cast %0 : vector<1x16x16x128xf32> to vector<16x16x128xf32>
    %c0_3 = arith.constant 0 : index
    %c0_4 = arith.constant 0 : index
    %c0_5 = arith.constant 0 : index
    %2 = vector.load %arg3[%c0_3, %c0_4, %c0_5] : memref<1x1x128xf32, #tpu.memory_space<vmem>>, vector<1x1x128xf32>
    %c0_6 = arith.constant 0 : index
    %c0_7 = arith.constant 0 : index
    %c0_8 = arith.constant 0 : index
    %3 = vector.load %arg4[%c0_6, %c0_7, %c0_8] : memref<1x1x128xf32, #tpu.memory_space<vmem>>, vector<1x1x128xf32>
    %c0_9 = arith.constant 0 : index
    %c0_10 = arith.constant 0 : index
    %c0_11 = arith.constant 0 : index
    %4 = vector.load %arg2[%c0_9, %c0_10, %c0_11] : memref<3x384x128xf32, #tpu.memory_space<vmem>>, vector<1x384x128xf32>
    %5 = vector.shape_cast %4 : vector<1x384x128xf32> to vector<384x128xf32>
    %c1 = arith.constant 1 : index
    %c0_12 = arith.constant 0 : index
    %c0_13 = arith.constant 0 : index
    %6 = vector.load %arg2[%c1, %c0_12, %c0_13] : memref<3x384x128xf32, #tpu.memory_space<vmem>>, vector<1x384x128xf32>
    %7 = vector.shape_cast %6 : vector<1x384x128xf32> to vector<384x128xf32>
    %c2 = arith.constant 2 : index
    %c0_14 = arith.constant 0 : index
    %c0_15 = arith.constant 0 : index
    %8 = vector.load %arg2[%c2, %c0_14, %c0_15] : memref<3x384x128xf32, #tpu.memory_space<vmem>>, vector<1x384x128xf32>
    %9 = vector.shape_cast %8 : vector<1x384x128xf32> to vector<384x128xf32>
    %cst = arith.constant 0.000000e+00 : f32
    %10 = vector.broadcast %cst : f32 to vector<16x1x128xf32>
    %cst_16 = arith.constant 0.000000e+00 : f32
    %11 = vector.broadcast %cst_16 : f32 to vector<1x16x128xf32>
    %12 = vector.extract_strided_slice %1 {offsets = [0, 0, 0], sizes = [16, 15, 128], strides = [1, 1, 1]} : vector<16x16x128xf32> to vector<16x15x128xf32>
    %13 = tpu.concatenate %10, %12 in 1 : vector<16x1x128xf32>, vector<16x15x128xf32> -> vector<16x16x128xf32>
    %14 = vector.extract_strided_slice %1 {offsets = [0, 1, 0], sizes = [16, 15, 128], strides = [1, 1, 1]} : vector<16x16x128xf32> to vector<16x15x128xf32>
    %15 = tpu.concatenate %14, %10 in 1 : vector<16x15x128xf32>, vector<16x1x128xf32> -> vector<16x16x128xf32>
    %16 = tpu.concatenate %13, %1, %15 in 2 : vector<16x16x128xf32>, vector<16x16x128xf32>, vector<16x16x128xf32> -> vector<16x16x384xf32>
    %17 = vector.shape_cast %16 : vector<16x16x384xf32> to vector<256x384xf32>
    %cst_17 = arith.constant dense<0.000000e+00> : vector<256x128xf32>
    %18 = tpu.matmul %17, %5, %cst_17 {dimension_numbers = #tpu.dot_dimension_numbers<[1], [0], [0], [1], [0, 0, 1, 1], [], []>} : vector<256x384xf32>, vector<384x128xf32>, vector<256x128xf32> -> vector<256x128xf32>
    %cst_18 = arith.constant dense<0.000000e+00> : vector<256x128xf32>
    %19 = tpu.matmul %17, %7, %cst_18 {dimension_numbers = #tpu.dot_dimension_numbers<[1], [0], [0], [1], [0, 0, 1, 1], [], []>} : vector<256x384xf32>, vector<384x128xf32>, vector<256x128xf32> -> vector<256x128xf32>
    %cst_19 = arith.constant dense<0.000000e+00> : vector<256x128xf32>
    %20 = tpu.matmul %17, %9, %cst_19 {dimension_numbers = #tpu.dot_dimension_numbers<[1], [0], [0], [1], [0, 0, 1, 1], [], []>} : vector<256x384xf32>, vector<384x128xf32>, vector<256x128xf32> -> vector<256x128xf32>
    %21 = vector.shape_cast %18 : vector<256x128xf32> to vector<16x16x128xf32>
    %22 = vector.shape_cast %19 : vector<256x128xf32> to vector<16x16x128xf32>
    %23 = vector.shape_cast %20 : vector<256x128xf32> to vector<16x16x128xf32>
    %24 = vector.extract_strided_slice %21 {offsets = [0, 0, 0], sizes = [15, 16, 128], strides = [1, 1, 1]} : vector<16x16x128xf32> to vector<15x16x128xf32>
    %25 = tpu.concatenate %11, %24 in 0 : vector<1x16x128xf32>, vector<15x16x128xf32> -> vector<16x16x128xf32>
    %26 = arith.addf %22, %25 : vector<16x16x128xf32>
    %27 = vector.extract_strided_slice %23 {offsets = [1, 0, 0], sizes = [15, 16, 128], strides = [1, 1, 1]} : vector<16x16x128xf32> to vector<15x16x128xf32>
    %28 = tpu.concatenate %27, %11 in 0 : vector<15x16x128xf32>, vector<1x16x128xf32> -> vector<16x16x128xf32>
    %29 = arith.addf %26, %28 : vector<16x16x128xf32>
    %30 = vector.broadcast %2 : vector<1x1x128xf32> to vector<16x16x128xf32>
    %31 = arith.mulf %29, %30 : vector<16x16x128xf32>
    %32 = vector.broadcast %3 : vector<1x1x128xf32> to vector<16x16x128xf32>
    %33 = arith.addf %31, %32 : vector<16x16x128xf32>
    %cst_20 = arith.constant 0.000000e+00 : f32
    %34 = vector.broadcast %cst_20 : f32 to vector<16x16x128xf32>
    %35 = arith.maximumf %33, %34 : vector<16x16x128xf32>
    %36 = arith.addf %1, %35 : vector<16x16x128xf32>
    %37 = vector.extract_strided_slice %36 {offsets = [0, 0, 0], sizes = [16, 15, 128], strides = [1, 1, 1]} : vector<16x16x128xf32> to vector<16x15x128xf32>
    %38 = tpu.concatenate %10, %37 in 1 : vector<16x1x128xf32>, vector<16x15x128xf32> -> vector<16x16x128xf32>
    %39 = vector.extract_strided_slice %36 {offsets = [0, 1, 0], sizes = [16, 15, 128], strides = [1, 1, 1]} : vector<16x16x128xf32> to vector<16x15x128xf32>
    %40 = tpu.concatenate %39, %10 in 1 : vector<16x15x128xf32>, vector<16x1x128xf32> -> vector<16x16x128xf32>
    %41 = tpu.concatenate %38, %36, %40 in 2 : vector<16x16x128xf32>, vector<16x16x128xf32>, vector<16x16x128xf32> -> vector<16x16x384xf32>
    %42 = vector.shape_cast %41 : vector<16x16x384xf32> to vector<256x384xf32>
    %cst_21 = arith.constant dense<0.000000e+00> : vector<256x128xf32>
    %43 = tpu.matmul %42, %5, %cst_21 {dimension_numbers = #tpu.dot_dimension_numbers<[1], [0], [0], [1], [0, 0, 1, 1], [], []>} : vector<256x384xf32>, vector<384x128xf32>, vector<256x128xf32> -> vector<256x128xf32>
    %cst_22 = arith.constant dense<0.000000e+00> : vector<256x128xf32>
    %44 = tpu.matmul %42, %7, %cst_22 {dimension_numbers = #tpu.dot_dimension_numbers<[1], [0], [0], [1], [0, 0, 1, 1], [], []>} : vector<256x384xf32>, vector<384x128xf32>, vector<256x128xf32> -> vector<256x128xf32>
    %cst_23 = arith.constant dense<0.000000e+00> : vector<256x128xf32>
    %45 = tpu.matmul %42, %9, %cst_23 {dimension_numbers = #tpu.dot_dimension_numbers<[1], [0], [0], [1], [0, 0, 1, 1], [], []>} : vector<256x384xf32>, vector<384x128xf32>, vector<256x128xf32> -> vector<256x128xf32>
    %46 = vector.shape_cast %43 : vector<256x128xf32> to vector<16x16x128xf32>
    %47 = vector.shape_cast %44 : vector<256x128xf32> to vector<16x16x128xf32>
    %48 = vector.shape_cast %45 : vector<256x128xf32> to vector<16x16x128xf32>
    %49 = vector.extract_strided_slice %46 {offsets = [0, 0, 0], sizes = [15, 16, 128], strides = [1, 1, 1]} : vector<16x16x128xf32> to vector<15x16x128xf32>
    %50 = tpu.concatenate %11, %49 in 0 : vector<1x16x128xf32>, vector<15x16x128xf32> -> vector<16x16x128xf32>
    %51 = arith.addf %47, %50 : vector<16x16x128xf32>
    %52 = vector.extract_strided_slice %48 {offsets = [1, 0, 0], sizes = [15, 16, 128], strides = [1, 1, 1]} : vector<16x16x128xf32> to vector<15x16x128xf32>
    %53 = tpu.concatenate %52, %11 in 0 : vector<15x16x128xf32>, vector<1x16x128xf32> -> vector<16x16x128xf32>
    %54 = arith.addf %51, %53 : vector<16x16x128xf32>
    %55 = vector.broadcast %2 : vector<1x1x128xf32> to vector<16x16x128xf32>
    %56 = arith.mulf %54, %55 : vector<16x16x128xf32>
    %57 = vector.broadcast %3 : vector<1x1x128xf32> to vector<16x16x128xf32>
    %58 = arith.addf %56, %57 : vector<16x16x128xf32>
    %cst_24 = arith.constant 0.000000e+00 : f32
    %59 = vector.broadcast %cst_24 : f32 to vector<16x16x128xf32>
    %60 = arith.maximumf %58, %59 : vector<16x16x128xf32>
    %61 = arith.addf %1, %60 : vector<16x16x128xf32>
    %62 = vector.extract_strided_slice %61 {offsets = [0, 0, 0], sizes = [16, 15, 128], strides = [1, 1, 1]} : vector<16x16x128xf32> to vector<16x15x128xf32>
    %63 = tpu.concatenate %10, %62 in 1 : vector<16x1x128xf32>, vector<16x15x128xf32> -> vector<16x16x128xf32>
    %64 = vector.extract_strided_slice %61 {offsets = [0, 1, 0], sizes = [16, 15, 128], strides = [1, 1, 1]} : vector<16x16x128xf32> to vector<16x15x128xf32>
    %65 = tpu.concatenate %64, %10 in 1 : vector<16x15x128xf32>, vector<16x1x128xf32> -> vector<16x16x128xf32>
    %66 = tpu.concatenate %63, %61, %65 in 2 : vector<16x16x128xf32>, vector<16x16x128xf32>, vector<16x16x128xf32> -> vector<16x16x384xf32>
    %67 = vector.shape_cast %66 : vector<16x16x384xf32> to vector<256x384xf32>
    %cst_25 = arith.constant dense<0.000000e+00> : vector<256x128xf32>
    %68 = tpu.matmul %67, %5, %cst_25 {dimension_numbers = #tpu.dot_dimension_numbers<[1], [0], [0], [1], [0, 0, 1, 1], [], []>} : vector<256x384xf32>, vector<384x128xf32>, vector<256x128xf32> -> vector<256x128xf32>
    %cst_26 = arith.constant dense<0.000000e+00> : vector<256x128xf32>
    %69 = tpu.matmul %67, %7, %cst_26 {dimension_numbers = #tpu.dot_dimension_numbers<[1], [0], [0], [1], [0, 0, 1, 1], [], []>} : vector<256x384xf32>, vector<384x128xf32>, vector<256x128xf32> -> vector<256x128xf32>
    %cst_27 = arith.constant dense<0.000000e+00> : vector<256x128xf32>
    %70 = tpu.matmul %67, %9, %cst_27 {dimension_numbers = #tpu.dot_dimension_numbers<[1], [0], [0], [1], [0, 0, 1, 1], [], []>} : vector<256x384xf32>, vector<384x128xf32>, vector<256x128xf32> -> vector<256x128xf32>
    %71 = vector.shape_cast %68 : vector<256x128xf32> to vector<16x16x128xf32>
    %72 = vector.shape_cast %69 : vector<256x128xf32> to vector<16x16x128xf32>
    %73 = vector.shape_cast %70 : vector<256x128xf32> to vector<16x16x128xf32>
    %74 = vector.extract_strided_slice %71 {offsets = [0, 0, 0], sizes = [15, 16, 128], strides = [1, 1, 1]} : vector<16x16x128xf32> to vector<15x16x128xf32>
    %75 = tpu.concatenate %11, %74 in 0 : vector<1x16x128xf32>, vector<15x16x128xf32> -> vector<16x16x128xf32>
    %76 = arith.addf %72, %75 : vector<16x16x128xf32>
    %77 = vector.extract_strided_slice %73 {offsets = [1, 0, 0], sizes = [15, 16, 128], strides = [1, 1, 1]} : vector<16x16x128xf32> to vector<15x16x128xf32>
    %78 = tpu.concatenate %77, %11 in 0 : vector<15x16x128xf32>, vector<1x16x128xf32> -> vector<16x16x128xf32>
    %79 = arith.addf %76, %78 : vector<16x16x128xf32>
    %80 = vector.broadcast %2 : vector<1x1x128xf32> to vector<16x16x128xf32>
    %81 = arith.mulf %79, %80 : vector<16x16x128xf32>
    %82 = vector.broadcast %3 : vector<1x1x128xf32> to vector<16x16x128xf32>
    %83 = arith.addf %81, %82 : vector<16x16x128xf32>
    %cst_28 = arith.constant 0.000000e+00 : f32
    %84 = vector.broadcast %cst_28 : f32 to vector<16x16x128xf32>
    %85 = arith.maximumf %83, %84 : vector<16x16x128xf32>
    %c0_29 = arith.constant 0 : index
    %c0_30 = arith.constant 0 : index
    %c0_31 = arith.constant 0 : index
    %c0_32 = arith.constant 0 : index
    %86 = vector.load %arg5[%c0_29, %c0_30, %c0_31, %c0_32] : memref<1x16x16x128xf32, #tpu.memory_space<vmem>>, vector<1x16x16x128xf32>
    %87 = vector.shape_cast %86 : vector<1x16x16x128xf32> to vector<16x16x128xf32>
    %88 = vector.shape_cast %85 : vector<16x16x128xf32> to vector<1x16x16x128xf32>
    tpu.vector_store %arg5[%c0_29, %c0_30, %c0_31, %c0_32], %88 {strides = array<i32>} : memref<1x16x16x128xf32, #tpu.memory_space<vmem>>, vector<1x16x16x128xf32>,
    return
  }
  func.func @transform_0(%arg0: i32) -> (i32, i32, i32, i32) {
    %c0_i32 = arith.constant 0 : i32
    %c0_i32_0 = arith.constant 0 : i32
    %c0_i32_1 = arith.constant 0 : i32
    %c0_i32_2 = arith.constant 0 : i32
    return %arg0, %c0_i32, %c0_i32_0, %c0_i32_1 : i32, i32, i32, i32
  }
  func.func @transform_1(%arg0: i32) -> (i32, i32, i32) {
    %c0_i32 = arith.constant 0 : i32
    %c0_i32_0 = arith.constant 0 : i32
    %c0_i32_1 = arith.constant 0 : i32
    %c0_i32_2 = arith.constant 0 : i32
    return %c0_i32, %c0_i32_0, %c0_i32_1 : i32, i32, i32
  }
  func.func @transform_2(%arg0: i32) -> (i32, i32, i32) {
    %c0_i32 = arith.constant 0 : i32
    %c0_i32_0 = arith.constant 0 : i32
    %c0_i32_1 = arith.constant 0 : i32
    %c0_i32_2 = arith.constant 0 : i32
    return %c0_i32, %c0_i32_0, %c0_i32_1 : i32, i32, i32
  }
  func.func @transform_3(%arg0: i32) -> (i32, i32, i32) {
    %c0_i32 = arith.constant 0 : i32
    %c0_i32_0 = arith.constant 0 : i32
    %c0_i32_1 = arith.constant 0 : i32
    %c0_i32_2 = arith.constant 0 : i32
    return %c0_i32, %c0_i32_0, %c0_i32_1 : i32, i32, i32
  }
  func.func @transform_4(%arg0: i32) -> (i32, i32, i32, i32) {
    %c0_i32 = arith.constant 0 : i32
    %c0_i32_0 = arith.constant 0 : i32
    %c0_i32_1 = arith.constant 0 : i32
    %c0_i32_2 = arith.constant 0 : i32
    return %arg0, %c0_i32, %c0_i32_0, %c0_i32_1 : i32, i32, i32, i32
  }
}

</mosaic_0001>

<llo_original>
// kernel: tpu_custom_call.1
$region0: #{tpu_custom_call.1}
  #allocation0 [shape = 'u32[]', space=smem, size = 0x4, offset = 0x4, fixed_abs, tag = 'smem constant byte address 0x4 - core index']
  #allocation1 [shape = 'u32[144,128]{1,0:T(1,128)}', space=vmem, size = 0x12000, scoped, tag = 'internal scratch']
  %s0 = inlined_call_operand.hbm [shape: f32[2,16,16,128], index: 0, kind: input, shape index: {}]
  %s1 = inlined_call_operand.hbm [shape: f32[3,384,128], index: 1, kind: input, shape index: {}]
  %s2 = inlined_call_operand.hbm [shape: f32[1,1,128], index: 2, kind: input, shape index: {}]
  %s3 = inlined_call_operand.hbm [shape: f32[1,1,128], index: 3, kind: input, shape index: {}]
  %s4 = inlined_call_operand.hbm [shape: f32[2,16,16,128], index: 4, kind: output, shape index: {}]
  %s5 = sld [smem:[#allocation0]]
  $region65: #{tpu_custom_call.1} parent=0
    _
  %s7 = ssub.s32 1, %s5
  %s8 = scalar_select 0, %s7, %s5
  $region1: #{tpu_custom_call.1} parent=0
    #allocation2 [shape = 'u8[262144]{0}', space=vmem, size = 0x40000, scoped, tag = 'input window, operand 0']
    #allocation3 [shape = 's32[2]{0}', space=sflag, size = 0x8, scoped, tag = 'scoped memory for tpu_custom_call.1']
    #allocation4 [shape = 's32[2]{0}', space=sflag, size = 0x8, scoped, tag = 'scoped memory for tpu_custom_call.1']
    #allocation5 [shape = 'u8[589824]{0}', space=vmem, size = 0x90000, scoped, tag = 'input window, operand 1, single buffered']
    #allocation6 [shape = 's32[1]{0}', space=sflag, size = 0x4, scoped, tag = 'scoped memory for tpu_custom_call.1']
    #allocation7 [shape = 'u8[512]{0}', space=vmem, size = 0x400, scoped, tag = 'input window, operand 2, single buffered']
    #allocation8 [shape = 'u8[512]{0}', space=vmem, size = 0x400, scoped, tag = 'input window, operand 3, single buffered']
    #allocation9 [shape = 's32[1]{0}', space=sflag, size = 0x4, scoped, tag = 'scoped memory for tpu_custom_call.1']
    #allocation10 [shape = 'u8[262144]{0}', space=vmem, size = 0x40000, scoped, tag = 'output window, operand 0']
    %9 = vsyncpa [#allocation3], 0
    %s10 = scalar_lea.sflag [#allocation3], 1
    %11 = vsyncpa %s10, 0
    %12 = vsyncpa [#allocation6], 0
    %13 = vsyncpa [#allocation9], 0
    %14 = vsyncpa [#allocation4], 0
    %s15 = scalar_lea.sflag [#allocation4], 1
    %16 = vsyncpa %s15, 0
    loop: start=0, step=1, limit=4
    $region2: #{tpu_custom_call.1} parent=1 // loop_pre_header
      _
    $region3: #{tpu_custom_call.1} parent=1 // loop_header
      %s18 = sphi 0, %s22
      %p19 = scmp.ge.s32.totalorder %s18, 4
      %s28 = sphi 0, %s30
      %s31 = sphi 0, %s28
      %s32 = sphi 0, %s31
      %s48 = sphi 0, %s32
      %s52 = sphi 0, %s52
      %s54 = sphi 0, %s52
      %s55 = sphi 0, %s54
      %s69 = sphi 0, %s55
      %s73 = sphi 0, %s73
      %s75 = sphi 0, %s73
      %s76 = sphi 0, %s75
      %s90 = sphi 0, %s76
      %s94 = sphi 0, %s94
      %s96 = sphi 0, %s94
      %s97 = sphi 0, %s96
      %s111 = sphi 0, %s97
      %s117 = sphi 0, %s119
      %s120 = sphi 0, %s117
      %s121 = sphi 0, %s120
      %s137 = sphi 0, %s121
    $region4: #{tpu_custom_call.1} parent=1 // loop_header_branch
      %21 = sbr.rel (%p19) target = $region8
    $region5: #{tpu_custom_call.1} parent=1 // loop_body
      %s23 = ssub.s32 %s18, 1
      %s24 = ssub.s32 %s18, 2
      %s25 = sadd.s32 %s18, 1
      %s26 = ssub.s32 %s18, %s25
      %p27 = scmp.eq.s32.totalorder %s26, 0
      %s29 = sadd.s32 %s28, 1
      %s30 = scalar_select %p27, %s28, %s29
      %p33 = pneg %p27
      %p34 = scmp.eq.s32.totalorder %s18, 1
      %p35 = por %p33, %p34
      %p36 = scmp.ne.s32.totalorder %s28, %s31
      %p37 = scmp.eq.s32.totalorder %s18, 0
      %p38 = por %p36, %p37
      %p39 = scmp.ne.s32.totalorder %s28, %s31
      %p40 = scmp.eq.s32.totalorder %s23, 1
      %p41 = por %p39, %p40
      %p42 = scmp.ne.s32.totalorder %s31, %s32
      %p43 = scmp.eq.s32.totalorder %s23, 0
      %p44 = por %p42, %p43
      %p45 = scmp.ne.s32.totalorder %s31, %s32
      %p46 = scmp.eq.s32.totalorder %s24, 1
      %p47 = por %p45, %p46
      %p49 = scmp.ne.s32.totalorder %s32, %s48
      %p50 = scmp.eq.s32.totalorder %s24, 0
      %p51 = por %p49, %p50
      %s53 = sadd.s32 %s52, 1
      %p56 = scmp.eq.s32.totalorder %s18, 1
      %p57 = scmp.ne.s32.totalorder %s52, %s54
      %p58 = scmp.eq.s32.totalorder %s18, 0
      %p59 = por %p57, %p58
      %p60 = scmp.ne.s32.totalorder %s52, %s54
      %p61 = scmp.eq.s32.totalorder %s23, 1
      %p62 = por %p60, %p61
      %p63 = scmp.ne.s32.totalorder %s54, %s55
      %p64 = scmp.eq.s32.totalorder %s23, 0
      %p65 = por %p63, %p64
      %p66 = scmp.ne.s32.totalorder %s54, %s55
      %p67 = scmp.eq.s32.totalorder %s24, 1
      %p68 = por %p66, %p67
      %p70 = scmp.ne.s32.totalorder %s55, %s69
      %p71 = scmp.eq.s32.totalorder %s24, 0
      %p72 = por %p70, %p71
      %s74 = sadd.s32 %s73, 1
      %p77 = scmp.eq.s32.totalorder %s18, 1
      %p78 = scmp.ne.s32.totalorder %s73, %s75
      %p79 = scmp.eq.s32.totalorder %s18, 0
      %p80 = por %p78, %p79
      %p81 = scmp.ne.s32.totalorder %s73, %s75
      %p82 = scmp.eq.s32.totalorder %s23, 1
      %p83 = por %p81, %p82
      %p84 = scmp.ne.s32.totalorder %s75, %s76
      %p85 = scmp.eq.s32.totalorder %s23, 0
      %p86 = por %p84, %p85
      %p87 = scmp.ne.s32.totalorder %s75, %s76
      %p88 = scmp.eq.s32.totalorder %s24, 1
      %p89 = por %p87, %p88
      %p91 = scmp.ne.s32.totalorder %s76, %s90
      %p92 = scmp.eq.s32.totalorder %s24, 0
      %p93 = por %p91, %p92
      %s95 = sadd.s32 %s94, 1
      %p98 = scmp.eq.s32.totalorder %s18, 1
      %p99 = scmp.ne.s32.totalorder %s94, %s96
      %p100 = scmp.eq.s32.totalorder %s18, 0
      %p101 = por %p99, %p100
      %p102 = scmp.ne.s32.totalorder %s94, %s96
      %p103 = scmp.eq.s32.totalorder %s23, 1
      %p104 = por %p102, %p103
      %p105 = scmp.ne.s32.totalorder %s96, %s97
      %p106 = scmp.eq.s32.totalorder %s23, 0
      %p107 = por %p105, %p106
      %p108 = scmp.ne.s32.totalorder %s96, %s97
      %p109 = scmp.eq.s32.totalorder %s24, 1
      %p110 = por %p108, %p109
      %p112 = scmp.ne.s32.totalorder %s97, %s111
      %p113 = scmp.eq.s32.totalorder %s24, 0
      %p114 = por %p112, %p113
      %s115 = ssub.s32 %s18, %s25
      %p116 = scmp.eq.s32.totalorder %s115, 0
      %s118 = sadd.s32 %s117, 1
      %s119 = scalar_select %p116, %s117, %s118
      %p122 = pneg %p116
      %p123 = scmp.eq.s32.totalorder %s18, 1
      %p124 = por %p122, %p123
      %p125 = scmp.ne.s32.totalorder %s117, %s120
      %p126 = scmp.eq.s32.totalorder %s18, 0
      %p127 = por %p125, %p126
      %p128 = scmp.ne.s32.totalorder %s117, %s120
      %p129 = scmp.eq.s32.totalorder %s23, 1
      %p130 = por %p128, %p129
      %p131 = scmp.ne.s32.totalorder %s120, %s121
      %p132 = scmp.eq.s32.totalorder %s23, 0
      %p133 = por %p131, %p132
      %p134 = scmp.ne.s32.totalorder %s120, %s121
      %p135 = scmp.eq.s32.totalorder %s24, 1
      %p136 = por %p134, %p135
      %p138 = scmp.ne.s32.totalorder %s121, %s137
      %p139 = scmp.eq.s32.totalorder %s24, 0
      %p140 = por %p138, %p139
      %p141 = scmp.le.s32.totalorder 1, %s18
      %p142 = scmp.lt.s32.totalorder %s18, 3
      %p143 = pnand %p141, %p142
      %p144 = pneg %p143
      // Predicated region
      $region9: #{tpu_custom_call.1} parent=5 // pred_check
        _
      $region10: #{tpu_custom_call.1} parent=5 // pred_check_branch
        %146 = sbr.rel (%p143) target = $region12
      $region11: #{tpu_custom_call.1} parent=5 // pred_region
        %s147 = ssub.s32 %s18, 1
        // Predicated region
        $region13: #{tpu_custom_call.1} parent=11 // pred_check
          %p148 = pneg %p65
        $region14: #{tpu_custom_call.1} parent=11 // pred_check_branch
          %150 = sbr.rel (%p148) target = $region16
        $region15: #{tpu_custom_call.1} parent=11 // pred_region
          %s152 = ssub.s32 18432, 18432
          %153 = vsyncadd [#allocation6], %s152
          %s154 = sshll.u32 [#allocation5], 4
          %s155 = int_to_ptr.vmem [resolvable:$true] %s154
          %160 = dma.hbm_to_vmem [thread:$0]  %s1, 18432, %s155, [#allocation6], 128, 128, 8
        $region16: #{tpu_custom_call.1} parent=11 // pred_fallthru
          _
        // Predicated region
        $region17: #{tpu_custom_call.1} parent=11 // pred_check
          %p161 = pneg %p86
        $region18: #{tpu_custom_call.1} parent=11 // pred_check_branch
          %163 = sbr.rel (%p161) target = $region20
        $region19: #{tpu_custom_call.1} parent=11 // pred_region
          %s165 = ssub.s32 16, 16
          %166 = vsyncadd [#allocation6], %s165
          %s168 = sshll.u32 [#allocation7], 4
          %s169 = int_to_ptr.vmem [resolvable:$true] %s168
          %171 = dma.hbm_to_vmem [thread:$0]  %s2, 16, %s169, [#allocation6]
        $region20: #{tpu_custom_call.1} parent=11 // pred_fallthru
          _
        // Predicated region
        $region21: #{tpu_custom_call.1} parent=11 // pred_check
          %p172 = pneg %p107
        $region22: #{tpu_custom_call.1} parent=11 // pred_check_branch
          %174 = sbr.rel (%p172) target = $region24
        $region23: #{tpu_custom_call.1} parent=11 // pred_region
          %s176 = ssub.s32 16, 16
          %177 = vsyncadd [#allocation9], %s176
          %s179 = sshll.u32 [#allocation8], 4
          %s180 = int_to_ptr.vmem [resolvable:$true] %s179
          %182 = dma.hbm_to_vmem [thread:$0]  %s3, 16, %s180, [#allocation9]
        $region24: #{tpu_custom_call.1} parent=11 // pred_fallthru
          _
      $region12: #{tpu_custom_call.1} parent=5 // pred_fallthru
        _
      %p183 = scmp.lt.s32.totalorder %s18, 2
      // Predicated region
      $region25: #{tpu_custom_call.1} parent=5 // pred_check
        %p184 = pneg %p183
      $region26: #{tpu_custom_call.1} parent=5 // pred_check_branch
        %186 = sbr.rel (%p184) target = $region28
      $region27: #{tpu_custom_call.1} parent=5 // pred_region
        // Predicated region
        $region29: #{tpu_custom_call.1} parent=27 // pred_check
          %p187 = pneg %p38
        $region30: #{tpu_custom_call.1} parent=27 // pred_check_branch
          %189 = sbr.rel (%p187) target = $region32
        $region31: #{tpu_custom_call.1} parent=27 // pred_region
          %s190 = sand.u32 %s28, 1
          %s191 = scalar_lea.sflag [#allocation3], %s190
          %s192 = sand.u32 %s28, 1
          %s193 = smul.addr %s192, 256
          %s194 = scalar_lea.vmem [#allocation2], %s193
          %s196 = ssub.s32 4096, 4096
          %197 = vsyncadd %s191, %s196
          %s198 = smul.addr %s18, 32
          %s199 = smul.addr %s198, 128
          %s200 = scalar_lea.hbm %s0, %s199
          %s201 = sshll.u32 %s194, 4
          %s202 = int_to_ptr.vmem [resolvable:$true] %s201
          %207 = dma.hbm_to_vmem [thread:$0]  %s200, 4096, %s202, %s191, 128, 128, 8
        $region32: #{tpu_custom_call.1} parent=27 // pred_fallthru
          _
      $region28: #{tpu_custom_call.1} parent=5 // pred_fallthru
        _
      %p208 = scmp.le.s32.totalorder 1, %s18
      %p209 = scmp.lt.s32.totalorder %s18, 3
      %p210 = pnand %p208, %p209
      %p211 = pneg %p210
      // Predicated region
      $region33: #{tpu_custom_call.1} parent=5 // pred_check
        _
      $region34: #{tpu_custom_call.1} parent=5 // pred_check_branch
        %213 = sbr.rel (%p210) target = $region36
      $region35: #{tpu_custom_call.1} parent=5 // pred_region
        %s214 = ssub.s32 %s18, 1
        %s215 = sand.u32 %s31, 1
        %s216 = scalar_lea.sflag [#allocation3], %s215
        %s217 = sand.u32 %s31, 1
        %s218 = smul.addr %s217, 256
        %s219 = scalar_lea.vmem [#allocation2], %s218
        // Predicated region
        $region37: #{tpu_custom_call.1} parent=35 // pred_check
          %p220 = pneg %p44
        $region38: #{tpu_custom_call.1} parent=35 // pred_check_branch
          %222 = sbr.rel (%p220) target = $region40
        $region39: #{tpu_custom_call.1} parent=35 // pred_region
          %223 = dma.done %s216, 4096
        $region40: #{tpu_custom_call.1} parent=35 // pred_fallthru
          _
        // Predicated region
        $region41: #{tpu_custom_call.1} parent=35 // pred_check
          %p224 = pneg %p65
        $region42: #{tpu_custom_call.1} parent=35 // pred_check_branch
          %226 = sbr.rel (%p224) target = $region44
        $region43: #{tpu_custom_call.1} parent=35 // pred_region
          %227 = dma.done [#allocation6], 18432
        $region44: #{tpu_custom_call.1} parent=35 // pred_fallthru
          _
        // Predicated region
        $region45: #{tpu_custom_call.1} parent=35 // pred_check
          %p228 = pneg %p86
        $region46: #{tpu_custom_call.1} parent=35 // pred_check_branch
          %230 = sbr.rel (%p228) target = $region48
        $region47: #{tpu_custom_call.1} parent=35 // pred_region
          %231 = dma.done [#allocation6], 16
        $region48: #{tpu_custom_call.1} parent=35 // pred_fallthru
          _
        // Predicated region
        $region49: #{tpu_custom_call.1} parent=35 // pred_check
          %p232 = pneg %p107
        $region50: #{tpu_custom_call.1} parent=35 // pred_check_branch
          %234 = sbr.rel (%p232) target = $region52
        $region51: #{tpu_custom_call.1} parent=35 // pred_region
          %235 = dma.done [#allocation9], 16
        $region52: #{tpu_custom_call.1} parent=35 // pred_fallthru
          _
        %s236 = sand.u32 %s31, 1
        %s237 = scalar_lea.sflag [#allocation3], %s236
        %s238 = sand.u32 %s31, 1
        %s239 = smul.addr %s238, 256
        %s240 = scalar_lea.vmem [#allocation2], %s239
        %p241 = pneg %p44
        %p242 = pneg %p41
        %p243 = pneg %p65
        %p244 = pneg %p62
        %p245 = pneg %p86
        %p246 = pneg %p83
        %p247 = pneg %p107
        %p248 = pneg %p104
        %p249 = pneg %p133
        %p250 = pneg %p130
        %s251 = sand.u32 %s120, 1
        %s252 = scalar_lea.sflag [#allocation4], %s251
        %s253 = sand.u32 %s120, 1
        %s254 = smul.addr %s253, 256
        %s255 = scalar_lea.vmem [#allocation10], %s254
        %v256 = vld [vmem:[%s219] sm:$0xff]
        %v257 = vld [vmem:[%s219 + $0x8] sm:$0xff]
        %v258 = vld [vmem:[%s219 + $0x10] sm:$0xff]
        %v259 = vld [vmem:[%s219 + $0x18] sm:$0xff]
        %v260 = vld [vmem:[%s219 + $0x20] sm:$0xff]
        %v261 = vld [vmem:[%s219 + $0x28] sm:$0xff]
        %v262 = vld [vmem:[%s219 + $0x30] sm:$0xff]
        %v263 = vld [vmem:[%s219 + $0x38] sm:$0xff]
        %v264 = vld [vmem:[%s219 + $0x40] sm:$0xff]
        %v265 = vld [vmem:[%s219 + $0x48] sm:$0xff]
        %v266 = vld [vmem:[%s219 + $0x50] sm:$0xff]
        %v267 = vld [vmem:[%s219 + $0x58] sm:$0xff]
        %v268 = vld [vmem:[%s219 + $0x60] sm:$0xff]
        %v269 = vld [vmem:[%s219 + $0x68] sm:$0xff]
        %v270 = vld [vmem:[%s219 + $0x70] sm:$0xff]
        %v271 = vld [vmem:[%s219 + $0x78] sm:$0xff]
        %v272 = vld [vmem:[%s219 + $0x80] sm:$0xff]
        %v273 = vld [vmem:[%s219 + $0x88] sm:$0xff]
        %v274 = vld [vmem:[%s219 + $0x90] sm:$0xff]
        %v275 = vld [vmem:[%s219 + $0x98] sm:$0xff]
        %v276 = vld [vmem:[%s219 + $0xa0] sm:$0xff]
        %v277 = vld [vmem:[%s219 + $0xa8] sm:$0xff]
        %v278 = vld [vmem:[%s219 + $0xb0] sm:$0xff]
        %v279 = vld [vmem:[%s219 + $0xb8] sm:$0xff]
        %v280 = vld [vmem:[%s219 + $0xc0] sm:$0xff]
        %v281 = vld [vmem:[%s219 + $0xc8] sm:$0xff]
        %v282 = vld [vmem:[%s219 + $0xd0] sm:$0xff]
        %v283 = vld [vmem:[%s219 + $0xd8] sm:$0xff]
        %v284 = vld [vmem:[%s219 + $0xe0] sm:$0xff]
        %v285 = vld [vmem:[%s219 + $0xe8] sm:$0xff]
        %v286 = vld [vmem:[%s219 + $0xf0] sm:$0xff]
        %v287 = vld [vmem:[%s219 + $0xf8] sm:$0xff]
        %v288 = vld [vmem:[#allocation7] sm:$0x1]
        %v289 = vld [vmem:[#allocation8] sm:$0x1]
        %v290 = vld [vmem:[#allocation5] sm:$0xff]
        %v291 = vld [vmem:[#allocation5 + $0x8] sm:$0xff]
        %v292 = vld [vmem:[#allocation5 + $0x10] sm:$0xff]
        %v293 = vld [vmem:[#allocation5 + $0x18] sm:$0xff]
        %v294 = vld [vmem:[#allocation5 + $0x20] sm:$0xff]
        %v295 = vld [vmem:[#allocation5 + $0x28] sm:$0xff]
        %v296 = vld [vmem:[#allocation5 + $0x30] sm:$0xff]
        %v297 = vld [vmem:[#allocation5 + $0x38] sm:$0xff]
        %v298 = vld [vmem:[#allocation5 + $0x40] sm:$0xff]
        %v299 = vld [vmem:[#allocation5 + $0x48] sm:$0xff]
        %v300 = vld [vmem:[#allocation5 + $0x50] sm:$0xff]
        %v301 = vld [vmem:[#allocation5 + $0x58] sm:$0xff]
        %v302 = vld [vmem:[#allocation5 + $0x60] sm:$0xff]
        %v303 = vld [vmem:[#allocation5 + $0x68] sm:$0xff]
        %v304 = vld [vmem:[#allocation5 + $0x70] sm:$0xff]
        %v305 = vld [vmem:[#allocation5 + $0x78] sm:$0xff]
        %v306 = vld [vmem:[#allocation5 + $0x80] sm:$0xff]
        %v307 = vld [vmem:[#allocation5 + $0x88] sm:$0xff]
        %v308 = vld [vmem:[#allocation5 + $0x90] sm:$0xff]
        %v309 = vld [vmem:[#allocation5 + $0x98] sm:$0xff]
        %v310 = vld [vmem:[#allocation5 + $0xa0] sm:$0xff]
        %v311 = vld [vmem:[#allocation5 + $0xa8] sm:$0xff]
        %v312 = vld [vmem:[#allocation5 + $0xb0] sm:$0xff]
        %v313 = vld [vmem:[#allocation5 + $0xb8] sm:$0xff]
        %v314 = vld [vmem:[#allocation5 + $0xc0] sm:$0xff]
        %v315 = vld [vmem:[#allocation5 + $0xc8] sm:$0xff]
        %v316 = vld [vmem:[#allocation5 + $0xd0] sm:$0xff]
        %v317 = vld [vmem:[#allocation5 + $0xd8] sm:$0xff]
        %v318 = vld [vmem:[#allocation5 + $0xe0] sm:$0xff]
        %v319 = vld [vmem:[#allocation5 + $0xe8] sm:$0xff]
        %v320 = vld [vmem:[#allocation5 + $0xf0] sm:$0xff]
        %v321 = vld [vmem:[#allocation5 + $0xf8] sm:$0xff]
        %v322 = vld [vmem:[#allocation5 + $0x100] sm:$0xff]
        %v323 = vld [vmem:[#allocation5 + $0x108] sm:$0xff]
        %v324 = vld [vmem:[#allocation5 + $0x110] sm:$0xff]
        %v325 = vld [vmem:[#allocation5 + $0x118] sm:$0xff]
        %v326 = vld [vmem:[#allocation5 + $0x120] sm:$0xff]
        %v327 = vld [vmem:[#allocation5 + $0x128] sm:$0xff]
        %v328 = vld [vmem:[#allocation5 + $0x130] sm:$0xff]
        %v329 = vld [vmem:[#allocation5 + $0x138] sm:$0xff]
        %v330 = vld [vmem:[#allocation5 + $0x140] sm:$0xff]
        %v331 = vld [vmem:[#allocation5 + $0x148] sm:$0xff]
        %v332 = vld [vmem:[#allocation5 + $0x150] sm:$0xff]
        %v333 = vld [vmem:[#allocation5 + $0x158] sm:$0xff]
        %v334 = vld [vmem:[#allocation5 + $0x160] sm:$0xff]
        %v335 = vld [vmem:[#allocation5 + $0x168] sm:$0xff]
        %v336 = vld [vmem:[#allocation5 + $0x170] sm:$0xff]
        %v337 = vld [vmem:[#allocation5 + $0x178] sm:$0xff]
        %s338 = scalar_lea.vmem [#allocation5], 384
        %v339 = vld [vmem:[%s338] sm:$0xff]
        %v340 = vld [vmem:[%s338 + $0x8] sm:$0xff]
        %v341 = vld [vmem:[%s338 + $0x10] sm:$0xff]
        %v342 = vld [vmem:[%s338 + $0x18] sm:$0xff]
        %v343 = vld [vmem:[%s338 + $0x20] sm:$0xff]
        %v344 = vld [vmem:[%s338 + $0x28] sm:$0xff]
        %v345 = vld [vmem:[%s338 + $0x30] sm:$0xff]
        %v346 = vld [vmem:[%s338 + $0x38] sm:$0xff]
        %v347 = vld [vmem:[%s338 + $0x40] sm:$0xff]
        %v348 = vld [vmem:[%s338 + $0x48] sm:$0xff]
        %v349 = vld [vmem:[%s338 + $0x50] sm:$0xff]
        %v350 = vld [vmem:[%s338 + $0x58] sm:$0xff]
        %v351 = vld [vmem:[%s338 + $0x60] sm:$0xff]
        %v352 = vld [vmem:[%s338 + $0x68] sm:$0xff]
        %v353 = vld [vmem:[%s338 + $0x70] sm:$0xff]
        %v354 = vld [vmem:[%s338 + $0x78] sm:$0xff]
        %v355 = vld [vmem:[%s338 + $0x80] sm:$0xff]
        %v356 = vld [vmem:[%s338 + $0x88] sm:$0xff]
        %v357 = vld [vmem:[%s338 + $0x90] sm:$0xff]
        %v358 = vld [vmem:[%s338 + $0x98] sm:$0xff]
        %v359 = vld [vmem:[%s338 + $0xa0] sm:$0xff]
        %v360 = vld [vmem:[%s338 + $0xa8] sm:$0xff]
        %v361 = vld [vmem:[%s338 + $0xb0] sm:$0xff]
        %v362 = vld [vmem:[%s338 + $0xb8] sm:$0xff]
        %v363 = vld [vmem:[%s338 + $0xc0] sm:$0xff]
        %v364 = vld [vmem:[%s338 + $0xc8] sm:$0xff]
        %v365 = vld [vmem:[%s338 + $0xd0] sm:$0xff]
        %v366 = vld [vmem:[%s338 + $0xd8] sm:$0xff]
        %v367 = vld [vmem:[%s338 + $0xe0] sm:$0xff]
        %v368 = vld [vmem:[%s338 + $0xe8] sm:$0xff]
        %v369 = vld [vmem:[%s338 + $0xf0] sm:$0xff]
        %v370 = vld [vmem:[%s338 + $0xf8] sm:$0xff]
        %v371 = vld [vmem:[%s338 + $0x100] sm:$0xff]
        %v372 = vld [vmem:[%s338 + $0x108] sm:$0xff]
        %v373 = vld [vmem:[%s338 + $0x110] sm:$0xff]
        %v374 = vld [vmem:[%s338 + $0x118] sm:$0xff]
        %v375 = vld [vmem:[%s338 + $0x120] sm:$0xff]
        %v376 = vld [vmem:[%s338 + $0x128] sm:$0xff]
        %v377 = vld [vmem:[%s338 + $0x130] sm:$0xff]
        %v378 = vld [vmem:[%s338 + $0x138] sm:$0xff]
        %v379 = vld [vmem:[%s338 + $0x140] sm:$0xff]
        %v380 = vld [vmem:[%s338 + $0x148] sm:$0xff]
        %v381 = vld [vmem:[%s338 + $0x150] sm:$0xff]
        %v382 = vld [vmem:[%s338 + $0x158] sm:$0xff]
        %v383 = vld [vmem:[%s338 + $0x160] sm:$0xff]
        %v384 = vld [vmem:[%s338 + $0x168] sm:$0xff]
        %v385 = vld [vmem:[%s338 + $0x170] sm:$0xff]
        %v386 = vld [vmem:[%s338 + $0x178] sm:$0xff]
        %s387 = scalar_lea.vmem [#allocation5], 768
        %v388 = vld [vmem:[%s387] sm:$0xff]
        %v389 = vld [vmem:[%s387 + $0x8] sm:$0xff]
        %v390 = vld [vmem:[%s387 + $0x10] sm:$0xff]
        %v391 = vld [vmem:[%s387 + $0x18] sm:$0xff]
        %v392 = vld [vmem:[%s387 + $0x20] sm:$0xff]
        %v393 = vld [vmem:[%s387 + $0x28] sm:$0xff]
        %v394 = vld [vmem:[%s387 + $0x30] sm:$0xff]
        %v395 = vld [vmem:[%s387 + $0x38] sm:$0xff]
        %v396 = vld [vmem:[%s387 + $0x40] sm:$0xff]
        %v397 = vld [vmem:[%s387 + $0x48] sm:$0xff]
        %v398 = vld [vmem:[%s387 + $0x50] sm:$0xff]
        %v399 = vld [vmem:[%s387 + $0x58] sm:$0xff]
        %v400 = vld [vmem:[%s387 + $0x60] sm:$0xff]
        %v401 = vld [vmem:[%s387 + $0x68] sm:$0xff]
        %v402 = vld [vmem:[%s387 + $0x70] sm:$0xff]
        %v403 = vld [vmem:[%s387 + $0x78] sm:$0xff]
        %v404 = vld [vmem:[%s387 + $0x80] sm:$0xff]
        %v405 = vld [vmem:[%s387 + $0x88] sm:$0xff]
        %v406 = vld [vmem:[%s387 + $0x90] sm:$0xff]
        %v407 = vld [vmem:[%s387 + $0x98] sm:$0xff]
        %v408 = vld [vmem:[%s387 + $0xa0] sm:$0xff]
        %v409 = vld [vmem:[%s387 + $0xa8] sm:$0xff]
        %v410 = vld [vmem:[%s387 + $0xb0] sm:$0xff]
        %v411 = vld [vmem:[%s387 + $0xb8] sm:$0xff]
        %v412 = vld [vmem:[%s387 + $0xc0] sm:$0xff]
        %v413 = vld [vmem:[%s387 + $0xc8] sm:$0xff]
        %v414 = vld [vmem:[%s387 + $0xd0] sm:$0xff]
        %v415 = vld [vmem:[%s387 + $0xd8] sm:$0xff]
        %v416 = vld [vmem:[%s387 + $0xe0] sm:$0xff]
        %v417 = vld [vmem:[%s387 + $0xe8] sm:$0xff]
        %v418 = vld [vmem:[%s387 + $0xf0] sm:$0xff]
        %v419 = vld [vmem:[%s387 + $0xf8] sm:$0xff]
        %v420 = vld [vmem:[%s387 + $0x100] sm:$0xff]
        %v421 = vld [vmem:[%s387 + $0x108] sm:$0xff]
        %v422 = vld [vmem:[%s387 + $0x110] sm:$0xff]
        %v423 = vld [vmem:[%s387 + $0x118] sm:$0xff]
        %v424 = vld [vmem:[%s387 + $0x120] sm:$0xff]
        %v425 = vld [vmem:[%s387 + $0x128] sm:$0xff]
        %v426 = vld [vmem:[%s387 + $0x130] sm:$0xff]
        %v427 = vld [vmem:[%s387 + $0x138] sm:$0xff]
        %v428 = vld [vmem:[%s387 + $0x140] sm:$0xff]
        %v429 = vld [vmem:[%s387 + $0x148] sm:$0xff]
        %v430 = vld [vmem:[%s387 + $0x150] sm:$0xff]
        %v431 = vld [vmem:[%s387 + $0x158] sm:$0xff]
        %v432 = vld [vmem:[%s387 + $0x160] sm:$0xff]
        %v433 = vld [vmem:[%s387 + $0x168] sm:$0xff]
        %v434 = vld [vmem:[%s387 + $0x170] sm:$0xff]
        %v435 = vld [vmem:[%s387 + $0x178] sm:$0xff]
        %vm468 = vcmask 1040384
        %v469 = vrot.slane %v256, 7
        %v470 = vrot.slane %v257, 7
        %v471 = vsel %vm468, %v469, %v470
        %v472 = vrot.slane %v258, 7
        %v473 = vrot.slane %v259, 7
        %v474 = vsel %vm468, %v472, %v473
        %v475 = vrot.slane %v260, 7
        %v476 = vrot.slane %v261, 7
        %v477 = vsel %vm468, %v475, %v476
        %v478 = vrot.slane %v262, 7
        %v479 = vrot.slane %v263, 7
        %v480 = vsel %vm468, %v478, %v479
        %v481 = vrot.slane %v264, 7
        %v482 = vrot.slane %v265, 7
        %v483 = vsel %vm468, %v481, %v482
        %v484 = vrot.slane %v266, 7
        %v485 = vrot.slane %v267, 7
        %v486 = vsel %vm468, %v484, %v485
        %v487 = vrot.slane %v268, 7
        %v488 = vrot.slane %v269, 7
        %v489 = vsel %vm468, %v487, %v488
        %v490 = vrot.slane %v270, 7
        %v491 = vrot.slane %v271, 7
        %v492 = vsel %vm468, %v490, %v491
        %v493 = vrot.slane %v272, 7
        %v494 = vrot.slane %v273, 7
        %v495 = vsel %vm468, %v493, %v494
        %v496 = vrot.slane %v274, 7
        %v497 = vrot.slane %v275, 7
        %v498 = vsel %vm468, %v496, %v497
        %v499 = vrot.slane %v276, 7
        %v500 = vrot.slane %v277, 7
        %v501 = vsel %vm468, %v499, %v500
        %v502 = vrot.slane %v278, 7
        %v503 = vrot.slane %v279, 7
        %v504 = vsel %vm468, %v502, %v503
        %v505 = vrot.slane %v280, 7
        %v506 = vrot.slane %v281, 7
        %v507 = vsel %vm468, %v505, %v506
        %v508 = vrot.slane %v282, 7
        %v509 = vrot.slane %v283, 7
        %v510 = vsel %vm468, %v508, %v509
        %v511 = vrot.slane %v284, 7
        %v512 = vrot.slane %v285, 7
        %v513 = vsel %vm468, %v511, %v512
        %v514 = vrot.slane %v286, 7
        %v515 = vrot.slane %v287, 7
        %v516 = vsel %vm468, %v514, %v515
        %v549 = vsel %vm468, 0.0, %v469
        %v550 = vsel %vm468, 0.0, %v472
        %v551 = vsel %vm468, 0.0, %v475
        %v552 = vsel %vm468, 0.0, %v478
        %v553 = vsel %vm468, 0.0, %v481
        %v554 = vsel %vm468, 0.0, %v484
        %v555 = vsel %vm468, 0.0, %v487
        %v556 = vsel %vm468, 0.0, %v490
        %v557 = vsel %vm468, 0.0, %v493
        %v558 = vsel %vm468, 0.0, %v496
        %v559 = vsel %vm468, 0.0, %v499
        %v560 = vsel %vm468, 0.0, %v502
        %v561 = vsel %vm468, 0.0, %v505
        %v562 = vsel %vm468, 0.0, %v508
        %v563 = vsel %vm468, 0.0, %v511
        %v564 = vsel %vm468, 0.0, %v514
        %vm565 = vcmask 1046528
        %v566 = vrot.slane %v256, 1
        %v567 = vrot.slane %v257, 1
        %v568 = vsel %vm565, %v566, %v567
        %v569 = vrot.slane %v258, 1
        %v570 = vrot.slane %v259, 1
        %v571 = vsel %vm565, %v569, %v570
        %v572 = vrot.slane %v260, 1
        %v573 = vrot.slane %v261, 1
        %v574 = vsel %vm565, %v572, %v573
        %v575 = vrot.slane %v262, 1
        %v576 = vrot.slane %v263, 1
        %v577 = vsel %vm565, %v575, %v576
        %v578 = vrot.slane %v264, 1
        %v579 = vrot.slane %v265, 1
        %v580 = vsel %vm565, %v578, %v579
        %v581 = vrot.slane %v266, 1
        %v582 = vrot.slane %v267, 1
        %v583 = vsel %vm565, %v581, %v582
        %v584 = vrot.slane %v268, 1
        %v585 = vrot.slane %v269, 1
        %v586 = vsel %vm565, %v584, %v585
        %v587 = vrot.slane %v270, 1
        %v588 = vrot.slane %v271, 1
        %v589 = vsel %vm565, %v587, %v588
        %v590 = vrot.slane %v272, 1
        %v591 = vrot.slane %v273, 1
        %v592 = vsel %vm565, %v590, %v591
        %v593 = vrot.slane %v274, 1
        %v594 = vrot.slane %v275, 1
        %v595 = vsel %vm565, %v593, %v594
        %v596 = vrot.slane %v276, 1
        %v597 = vrot.slane %v277, 1
        %v598 = vsel %vm565, %v596, %v597
        %v599 = vrot.slane %v278, 1
        %v600 = vrot.slane %v279, 1
        %v601 = vsel %vm565, %v599, %v600
        %v602 = vrot.slane %v280, 1
        %v603 = vrot.slane %v281, 1
        %v604 = vsel %vm565, %v602, %v603
        %v605 = vrot.slane %v282, 1
        %v606 = vrot.slane %v283, 1
        %v607 = vsel %vm565, %v605, %v606
        %v608 = vrot.slane %v284, 1
        %v609 = vrot.slane %v285, 1
        %v610 = vsel %vm565, %v608, %v609
        %v611 = vrot.slane %v286, 1
        %v612 = vrot.slane %v287, 1
        %v613 = vsel %vm565, %v611, %v612
        %v646 = vsel %vm565, %v567, 0.0
        %v647 = vsel %vm565, %v570, 0.0
        %v648 = vsel %vm565, %v573, 0.0
        %v649 = vsel %vm565, %v576, 0.0
        %v650 = vsel %vm565, %v579, 0.0
        %v651 = vsel %vm565, %v582, 0.0
        %v652 = vsel %vm565, %v585, 0.0
        %v653 = vsel %vm565, %v588, 0.0
        %v654 = vsel %vm565, %v591, 0.0
        %v655 = vsel %vm565, %v594, 0.0
        %v656 = vsel %vm565, %v597, 0.0
        %v657 = vsel %vm565, %v600, 0.0
        %v658 = vsel %vm565, %v603, 0.0
        %v659 = vsel %vm565, %v606, 0.0
        %v660 = vsel %vm565, %v609, 0.0
        %v661 = vsel %vm565, %v612, 0.0
        %662 = vmatprep.subr.mxu0 0.0
        %663 = vmatpush1.msra.mxu0 %v290
        %664 = vmatprep.subr.mxu0 0.0
        %665 = vmatpush1.msra.mxu0 %v291
        %666 = vmatprep.subr.mxu0 0.0
        %667 = vmatpush1.msra.mxu0 %v292
        %668 = vmatprep.subr.mxu0 0.0
        %669 = vmatpush1.msra.mxu0 %v293
        %670 = vmatprep.subr.mxu0 0.0
        %671 = vmatpush1.msra.mxu0 %v294
        %672 = vmatprep.subr.mxu0 0.0
        %673 = vmatpush1.msra.mxu0 %v295
        %674 = vmatprep.subr.mxu0 0.0
        %675 = vmatpush1.msra.mxu0 %v296
        %676 = vmatprep.subr.mxu0 0.0
        %677 = vmatpush1.msra.mxu0 %v297
        %678 = vmatprep.subr.mxu0 0.0
        %679 = vmatpush1.msra.mxu0 %v298
        %680 = vmatprep.subr.mxu0 0.0
        %681 = vmatpush1.msra.mxu0 %v299
        %682 = vmatprep.subr.mxu0 0.0
        %683 = vmatpush1.msra.mxu0 %v300
        %684 = vmatprep.subr.mxu0 0.0
        %685 = vmatpush1.msra.mxu0 %v301
        %686 = vmatprep.subr.mxu0 0.0
        %687 = vmatpush1.msra.mxu0 %v302
        %688 = vmatprep.subr.mxu0 0.0
        %689 = vmatpush1.msra.mxu0 %v303
        %690 = vmatprep.subr.mxu0 0.0
        %691 = vmatpush1.msra.mxu0 %v304
        %692 = vmatprep.subr.mxu0 0.0
        %693 = vmatpush1.msra.mxu0 %v305
        %694 = vmatprep.subr.mxu0 0.0
        %695 = vmatpush1.msra.mxu0 %v306
        %696 = vmatprep.subr.mxu0 0.0
        %697 = vmatpush1.msra.mxu0 %v307
        %698 = vmatprep.subr.mxu0 0.0
        %699 = vmatpush1.msra.mxu0 %v308
        %700 = vmatprep.subr.mxu0 0.0
        %701 = vmatpush1.msra.mxu0 %v309
        %702 = vmatprep.subr.mxu0 0.0
        %703 = vmatpush1.msra.mxu0 %v310
        %704 = vmatprep.subr.mxu0 0.0
        %705 = vmatpush1.msra.mxu0 %v311
        %706 = vmatprep.subr.mxu0 0.0
        %707 = vmatpush1.msra.mxu0 %v312
        %708 = vmatprep.subr.mxu0 0.0
        %709 = vmatpush1.msra.mxu0 %v313
        %710 = vmatprep.subr.mxu0 0.0
        %711 = vmatpush1.msra.mxu0 %v314
        %712 = vmatprep.subr.mxu0 0.0
        %713 = vmatpush1.msra.mxu0 %v315
        %714 = vmatprep.subr.mxu0 0.0
        %715 = vmatpush1.msra.mxu0 %v316
        %716 = vmatprep.subr.mxu0 0.0
        %717 = vmatpush1.msra.mxu0 %v317
        %718 = vmatprep.subr.mxu0 0.0
        %719 = vmatpush1.msra.mxu0 %v318
        %720 = vmatprep.subr.mxu0 0.0
        %721 = vmatpush1.msra.mxu0 %v319
        %722 = vmatprep.subr.mxu0 0.0
        %723 = vmatpush1.msra.mxu0 %v320
        %724 = vmatprep.subr.mxu0 0.0
        %725 = vmatpush1.msra.mxu0 %v321
        %726 = vmatprep.mubr.f32.mxu0 %v256
        %727 = vmatmul.mubr.f32.gmra.mrb[0].mxu0 %v549
        %v728 = vpop.f32.mrb[0].mxu0
        %v729 = vadd.f32 0.0, %v728
        %v730 = vpop.f32.mrb[0].mxu0
        %731 = vmatprep.mubr.f32.mxu0 %v257
        %732 = vmatmul.mubr.f32.gmra.mrb[0].mxu0 %v471
        %v733 = vpop.f32.mrb[0].mxu0
        %v734 = vadd.f32 0.0, %v733
        %v735 = vpop.f32.mrb[0].mxu0
        %736 = vmatprep.mubr.f32.mxu0 %v258
        %737 = vmatmul.mubr.f32.gmra.mrb[0].mxu0 %v550
        %v738 = vpop.f32.mrb[0].mxu0
        %v739 = vadd.f32 0.0, %v738
        %v740 = vpop.f32.mrb[0].mxu0
        %741 = vmatprep.mubr.f32.mxu0 %v259
        %742 = vmatmul.mubr.f32.gmra.mrb[0].mxu0 %v474
        %v743 = vpop.f32.mrb[0].mxu0
        %v744 = vadd.f32 0.0, %v743
        %v745 = vpop.f32.mrb[0].mxu0
        %746 = vmatprep.mubr.f32.mxu0 %v260
        %747 = vmatmul.mubr.f32.gmra.mrb[0].mxu0 %v551
        %v748 = vpop.f32.mrb[0].mxu0
        %v749 = vadd.f32 0.0, %v748
        %v750 = vpop.f32.mrb[0].mxu0
        %751 = vmatprep.mubr.f32.mxu0 %v261
        %752 = vmatmul.mubr.f32.gmra.mrb[0].mxu0 %v477
        %v753 = vpop.f32.mrb[0].mxu0
        %v754 = vadd.f32 0.0, %v753
        %v755 = vpop.f32.mrb[0].mxu0
        %756 = vmatprep.mubr.f32.mxu0 %v262
        %757 = vmatmul.mubr.f32.gmra.mrb[0].mxu0 %v552
        %v758 = vpop.f32.mrb[0].mxu0
        %v759 = vadd.f32 0.0, %v758
        %v760 = vpop.f32.mrb[0].mxu0
        %761 = vmatprep.mubr.f32.mxu0 %v263
        %762 = vmatmul.mubr.f32.gmra.mrb[0].mxu0 %v480
        %v763 = vpop.f32.mrb[0].mxu0
        %v764 = vadd.f32 0.0, %v763
        %v765 = vpop.f32.mrb[0].mxu0
        %766 = vmatprep.mubr.f32.mxu0 %v264
        %767 = vmatmul.mubr.f32.gmra.mrb[0].mxu0 %v553
        %v768 = vpop.f32.mrb[0].mxu0
        %v769 = vadd.f32 0.0, %v768
        %v770 = vpop.f32.mrb[0].mxu0
        %771 = vmatprep.mubr.f32.mxu0 %v265
        %772 = vmatmul.mubr.f32.gmra.mrb[0].mxu0 %v483
        %v773 = vpop.f32.mrb[0].mxu0
        %v774 = vadd.f32 0.0, %v773
        %v775 = vpop.f32.mrb[0].mxu0
        %776 = vmatprep.mubr.f32.mxu0 %v266
        %777 = vmatmul.mubr.f32.gmra.mrb[0].mxu0 %v554
        %v778 = vpop.f32.mrb[0].mxu0
        %v779 = vadd.f32 0.0, %v778
        %v780 = vpop.f32.mrb[0].mxu0
        %781 = vmatprep.mubr.f32.mxu0 %v267
        %782 = vmatmul.mubr.f32.gmra.mrb[0].mxu0 %v486
        %v783 = vpop.f32.mrb[0].mxu0
        %v784 = vadd.f32 0.0, %v783
        %v785 = vpop.f32.mrb[0].mxu0
        %786 = vmatprep.mubr.f32.mxu0 %v268
        %787 = vmatmul.mubr.f32.gmra.mrb[0].mxu0 %v555
        %v788 = vpop.f32.mrb[0].mxu0
        %v789 = vadd.f32 0.0, %v788
        %v790 = vpop.f32.mrb[0].mxu0
        %791 = vmatprep.mubr.f32.mxu0 %v269
        %792 = vmatmul.mubr.f32.gmra.mrb[0].mxu0 %v489
        %v793 = vpop.f32.mrb[0].mxu0
        %v794 = vadd.f32 0.0, %v793
        %v795 = vpop.f32.mrb[0].mxu0
        %796 = vmatprep.mubr.f32.mxu0 %v270
        %797 = vmatmul.mubr.f32.gmra.mrb[0].mxu0 %v556
        %v798 = vpop.f32.mrb[0].mxu0
        %v799 = vadd.f32 0.0, %v798
        %v800 = vpop.f32.mrb[0].mxu0
        %801 = vmatprep.mubr.f32.mxu0 %v271
        %802 = vmatmul.mubr.f32.gmra.mrb[0].mxu0 %v492
        %v803 = vpop.f32.mrb[0].mxu0
        %v804 = vadd.f32 0.0, %v803
        %v805 = vpop.f32.mrb[0].mxu0
        %806 = vmatprep.mubr.f32.mxu0 %v272
        %807 = vmatmul.mubr.f32.gmra.mrb[0].mxu0 %v557
        %v808 = vpop.f32.mrb[0].mxu0
        %v809 = vadd.f32 0.0, %v808
        %v810 = vpop.f32.mrb[0].mxu0
        %811 = vmatprep.mubr.f32.mxu0 %v273
        %812 = vmatmul.mubr.f32.gmra.mrb[0].mxu0 %v495
        %v813 = vpop.f32.mrb[0].mxu0
        %v814 = vadd.f32 0.0, %v813
        %v815 = vpop.f32.mrb[0].mxu0
        %816 = vmatprep.mubr.f32.mxu0 %v274
        %817 = vmatmul.mubr.f32.gmra.mrb[0].mxu0 %v558
        %v818 = vpop.f32.mrb[0].mxu0
        %v819 = vadd.f32 0.0, %v818
        %v820 = vpop.f32.mrb[0].mxu0
        %821 = vmatprep.mubr.f32.mxu0 %v275
        %822 = vmatmul.mubr.f32.gmra.mrb[0].mxu0 %v498
        %v823 = vpop.f32.mrb[0].mxu0
        %v824 = vadd.f32 0.0, %v823
        %v825 = vpop.f32.mrb[0].mxu0
        %826 = vmatprep.mubr.f32.mxu0 %v276
        %827 = vmatmul.mubr.f32.gmra.mrb[0].mxu0 %v559
        %v828 = vpop.f32.mrb[0].mxu0
        %v829 = vadd.f32 0.0, %v828
        %v830 = vpop.f32.mrb[0].mxu0
        %831 = vmatprep.mubr.f32.mxu0 %v277
        %832 = vmatmul.mubr.f32.gmra.mrb[0].mxu0 %v501
        %v833 = vpop.f32.mrb[0].mxu0
        %v834 = vadd.f32 0.0, %v833
        %v835 = vpop.f32.mrb[0].mxu0
        %836 = vmatprep.mubr.f32.mxu0 %v278
        %837 = vmatmul.mubr.f32.gmra.mrb[0].mxu0 %v560
        %v838 = vpop.f32.mrb[0].mxu0
        %v839 = vadd.f32 0.0, %v838
        %v840 = vpop.f32.mrb[0].mxu0
        %841 = vmatprep.mubr.f32.mxu0 %v279
        %842 = vmatmul.mubr.f32.gmra.mrb[0].mxu0 %v504
        %v843 = vpop.f32.mrb[0].mxu0
        %v844 = vadd.f32 0.0, %v843
        %v845 = vpop.f32.mrb[0].mxu0
        %846 = vmatprep.mubr.f32.mxu0 %v280
        %847 = vmatmul.mubr.f32.gmra.mrb[0].mxu0 %v561
        %v848 = vpop.f32.mrb[0].mxu0
        %v849 = vadd.f32 0.0, %v848
        %v850 = vpop.f32.mrb[0].mxu0
        %851 = vmatprep.mubr.f32.mxu0 %v281
        %852 = vmatmul.mubr.f32.gmra.mrb[0].mxu0 %v507
        %v853 = vpop.f32.mrb[0].mxu0
        %v854 = vadd.f32 0.0, %v853
        %v855 = vpop.f32.mrb[0].mxu0
        %856 = vmatprep.mubr.f32.mxu0 %v282
        %857 = vmatmul.mubr.f32.gmra.mrb[0].mxu0 %v562
        %v858 = vpop.f32.mrb[0].mxu0
        %v859 = vadd.f32 0.0, %v858
        %v860 = vpop.f32.mrb[0].mxu0
        %861 = vmatprep.mubr.f32.mxu0 %v283
        %862 = vmatmul.mubr.f32.gmra.mrb[0].mxu0 %v510
        %v863 = vpop.f32.mrb[0].mxu0
        %v864 = vadd.f32 0.0, %v863
        %v865 = vpop.f32.mrb[0].mxu0
        %866 = vmatprep.mubr.f32.mxu0 %v284
        %867 = vmatmul.mubr.f32.gmra.mrb[0].mxu0 %v563
        %v868 = vpop.f32.mrb[0].mxu0
        %v869 = vadd.f32 0.0, %v868
        %v870 = vpop.f32.mrb[0].mxu0
        %871 = vmatprep.mubr.f32.mxu0 %v285
        %872 = vmatmul.mubr.f32.gmra.mrb[0].mxu0 %v513
        %v873 = vpop.f32.mrb[0].mxu0
        %v874 = vadd.f32 0.0, %v873
        %v875 = vpop.f32.mrb[0].mxu0
        %876 = vmatprep.mubr.f32.mxu0 %v286
        %877 = vmatmul.mubr.f32.gmra.mrb[0].mxu0 %v564
        %v878 = vpop.f32.mrb[0].mxu0
        %v879 = vpop.f32.mrb[0].mxu0
        %880 = vmatprep.mubr.f32.mxu0 %v287
        %881 = vmatmul.mubr.f32.gmra.mrb[0].mxu0 %v516
        %v882 = vpop.f32.mrb[0].mxu0
        %v883 = vpop.f32.mrb[0].mxu0
        %884 = vdwg.mxu0
        %885 = vmatprep.subr.mxu0 0.0
        %886 = vmatpush1.msra.mxu0 %v322
        %887 = vmatprep.subr.mxu0 0.0
        %888 = vmatpush1.msra.mxu0 %v323
        %889 = vmatprep.subr.mxu0 0.0
        %890 = vmatpush1.msra.mxu0 %v324
        %891 = vmatprep.subr.mxu0 0.0
        %892 = vmatpush1.msra.mxu0 %v325
        %893 = vmatprep.subr.mxu0 0.0
        %894 = vmatpush1.msra.mxu0 %v326
        %895 = vmatprep.subr.mxu0 0.0
        %896 = vmatpush1.msra.mxu0 %v327
        %897 = vmatprep.subr.mxu0 0.0
        %898 = vmatpush1.msra.mxu0 %v328
        %899 = vmatprep.subr.mxu0 0.0
        %900 = vmatpush1.msra.mxu0 %v329
        %901 = vmatprep.subr.mxu0 0.0
        %902 = vmatpush1.msra.mxu0 %v330
        %903 = vmatprep.subr.mxu0 0.0
        %904 = vmatpush1.msra.mxu0 %v331
        %905 = vmatprep.subr.mxu0 0.0
        %906 = vmatpush1.msra.mxu0 %v332
        %907 = vmatprep.subr.mxu0 0.0
        %908 = vmatpush1.msra.mxu0 %v333
        %909 = vmatprep.subr.mxu0 0.0
        %910 = vmatpush1.msra.mxu0 %v334
        %911 = vmatprep.subr.mxu0 0.0
        %912 = vmatpush1.msra.mxu0 %v335
        %913 = vmatprep.subr.mxu0 0.0
        %914 = vmatpush1.msra.mxu0 %v336
        %915 = vmatprep.subr.mxu0 0.0
        %916 = vmatpush1.msra.mxu0 %v337
        %917 = vmatprep.subr.mxu0 0.0
        %918 = vmatpush1.msra.mxu0 0.0
        %919 = vmatprep.subr.mxu0 0.0
        %920 = vmatpush1.msra.mxu0 0.0
        %921 = vmatprep.subr.mxu0 0.0
        %922 = vmatpush1.msra.mxu0 0.0
        %923 = vmatprep.subr.mxu0 0.0
        %924 = vmatpush1.msra.mxu0 0.0
        %925 = vmatprep.subr.mxu0 0.0
        %926 = vmatpush1.msra.mxu0 0.0
        %927 = vmatprep.subr.mxu0 0.0
        %928 = vmatpush1.msra.mxu0 0.0
        %929 = vmatprep.subr.mxu0 0.0
        %930 = vmatpush1.msra.mxu0 0.0
        %931 = vmatprep.subr.mxu0 0.0
        %932 = vmatpush1.msra.mxu0 0.0
        %933 = vmatprep.subr.mxu0 0.0
        %934 = vmatpush1.msra.mxu0 0.0
        %935 = vmatprep.subr.mxu0 0.0
        %936 = vmatpush1.msra.mxu0 0.0
        %937 = vmatprep.subr.mxu0 0.0
        %938 = vmatpush1.msra.mxu0 0.0
        %939 = vmatprep.subr.mxu0 0.0
        %940 = vmatpush1.msra.mxu0 0.0
        %941 = vmatprep.subr.mxu0 0.0
        %942 = vmatpush1.msra.mxu0 0.0
        %943 = vmatprep.subr.mxu0 0.0
        %944 = vmatpush1.msra.mxu0 0.0
        %945 = vmatprep.subr.mxu0 0.0
        %946 = vmatpush1.msra.mxu0 0.0
        %947 = vmatprep.subr.mxu0 0.0
        %948 = vmatpush1.msra.mxu0 0.0
        %949 = vmatprep.mubr.f32.mxu0 0.0
        %950 = vmatmul.mubr.f32.gmra.mrb[0].mxu0 %v568
        %v951 = vpop.f32.mrb[0].mxu0
        %v952 = vadd.f32 %v729, %v951
        %v953 = vpop.f32.mrb[0].mxu0
        %954 = vmatprep.mubr.f32.mxu0 0.0
        %955 = vmatmul.mubr.f32.gmra.mrb[0].mxu0 %v646
        %v956 = vpop.f32.mrb[0].mxu0
        %v957 = vadd.f32 %v734, %v956
        %v958 = vpop.f32.mrb[0].mxu0
        %959 = vmatprep.mubr.f32.mxu0 0.0
        %960 = vmatmul.mubr.f32.gmra.mrb[0].mxu0 %v571
        %v961 = vpop.f32.mrb[0].mxu0
        %v962 = vadd.f32 %v739, %v961
        %v963 = vpop.f32.mrb[0].mxu0
        %964 = vmatprep.mubr.f32.mxu0 0.0
        %965 = vmatmul.mubr.f32.gmra.mrb[0].mxu0 %v647
        %v966 = vpop.f32.mrb[0].mxu0
        %v967 = vadd.f32 %v744, %v966
        %v968 = vpop.f32.mrb[0].mxu0
        %969 = vmatprep.mubr.f32.mxu0 0.0
        %970 = vmatmul.mubr.f32.gmra.mrb[0].mxu0 %v574
        %v971 = vpop.f32.mrb[0].mxu0
        %v972 = vadd.f32 %v749, %v971
        %v973 = vpop.f32.mrb[0].mxu0
        %974 = vmatprep.mubr.f32.mxu0 0.0
        %975 = vmatmul.mubr.f32.gmra.mrb[0].mxu0 %v648
        %v976 = vpop.f32.mrb[0].mxu0
        %v977 = vadd.f32 %v754, %v976
        %v978 = vpop.f32.mrb[0].mxu0
        %979 = vmatprep.mubr.f32.mxu0 0.0
        %980 = vmatmul.mubr.f32.gmra.mrb[0].mxu0 %v577
        %v981 = vpop.f32.mrb[0].mxu0
        %v982 = vadd.f32 %v759, %v981
        %v983 = vpop.f32.mrb[0].mxu0
        %984 = vmatprep.mubr.f32.mxu0 0.0
        %985 = vmatmul.mubr.f32.gmra.mrb[0].mxu0 %v649
        %v986 = vpop.f32.mrb[0].mxu0
        %v987 = vadd.f32 %v764, %v986
        %v988 = vpop.f32.mrb[0].mxu0
        %989 = vmatprep.mubr.f32.mxu0 0.0
        %990 = vmatmul.mubr.f32.gmra.mrb[0].mxu0 %v580
        %v991 = vpop.f32.mrb[0].mxu0
        %v992 = vadd.f32 %v769, %v991
        %v993 = vpop.f32.mrb[0].mxu0
        %994 = vmatprep.mubr.f32.mxu0 0.0
        %995 = vmatmul.mubr.f32.gmra.mrb[0].mxu0 %v650
        %v996 = vpop.f32.mrb[0].mxu0
        %v997 = vadd.f32 %v774, %v996
        %v998 = vpop.f32.mrb[0].mxu0
        %999 = vmatprep.mubr.f32.mxu0 0.0
        %1000 = vmatmul.mubr.f32.gmra.mrb[0].mxu0 %v583
        %v1001 = vpop.f32.mrb[0].mxu0
        %v1002 = vadd.f32 %v779, %v1001
        %v1003 = vpop.f32.mrb[0].mxu0
        %1004 = vmatprep.mubr.f32.mxu0 0.0
        %1005 = vmatmul.mubr.f32.gmra.mrb[0].mxu0 %v651
        %v1006 = vpop.f32.mrb[0].mxu0
        %v1007 = vadd.f32 %v784, %v1006
        %v1008 = vpop.f32.mrb[0].mxu0
        %1009 = vmatprep.mubr.f32.mxu0 0.0
        %1010 = vmatmul.mubr.f32.gmra.mrb[0].mxu0 %v586
        %v1011 = vpop.f32.mrb[0].mxu0
        %v1012 = vadd.f32 %v789, %v1011
        %v1013 = vpop.f32.mrb[0].mxu0
        %1014 = vmatprep.mubr.f32.mxu0 0.0
        %1015 = vmatmul.mubr.f32.gmra.mrb[0].mxu0 %v652
        %v1016 = vpop.f32.mrb[0].mxu0
        %v1017 = vadd.f32 %v794, %v1016
        %v1018 = vpop.f32.mrb[0].mxu0
        %1019 = vmatprep.mubr.f32.mxu0 0.0
        %1020 = vmatmul.mubr.f32.gmra.mrb[0].mxu0 %v589
        %v1021 = vpop.f32.mrb[0].mxu0
        %v1022 = vadd.f32 %v799, %v1021
        %v1023 = vpop.f32.mrb[0].mxu0
        %1024 = vmatprep.mubr.f32.mxu0 0.0
        %1025 = vmatmul.mubr.f32.gmra.mrb[0].mxu0 %v653
        %v1026 = vpop.f32.mrb[0].mxu0
        %v1027 = vadd.f32 %v804, %v1026
        %v1028 = vpop.f32.mrb[0].mxu0
        %1029 = vmatprep.mubr.f32.mxu0 0.0
        %1030 = vmatmul.mubr.f32.gmra.mrb[0].mxu0 %v592
        %v1031 = vpop.f32.mrb[0].mxu0
        %v1032 = vadd.f32 %v809, %v1031
        %v1033 = vpop.f32.mrb[0].mxu0
        %1034 = vmatprep.mubr.f32.mxu0 0.0
        %1035 = vmatmul.mubr.f32.gmra.mrb[0].mxu0 %v654
        %v1036 = vpop.f32.mrb[0].mxu0
        %v1037 = vadd.f32 %v814, %v1036
        %v1038 = vpop.f32.mrb[0].mxu0
        %1039 = vmatprep.mubr.f32.mxu0 0.0
        %1040 = vmatmul.mubr.f32.gmra.mrb[0].mxu0 %v595
        %v1041 = vpop.f32.mrb[0].mxu0
        %v1042 = vadd.f32 %v819, %v1041
        %v1043 = vpop.f32.mrb[0].mxu0
        %1044 = vmatprep.mubr.f32.mxu0 0.0
        %1045 = vmatmul.mubr.f32.gmra.mrb[0].mxu0 %v655
        %v1046 = vpop.f32.mrb[0].mxu0
        %v1047 = vadd.f32 %v824, %v1046
        %v1048 = vpop.f32.mrb[0].mxu0
        %1049 = vmatprep.mubr.f32.mxu0 0.0
        %1050 = vmatmul.mubr.f32.gmra.mrb[0].mxu0 %v598
        %v1051 = vpop.f32.mrb[0].mxu0
        %v1052 = vadd.f32 %v829, %v1051
        %v1053 = vpop.f32.mrb[0].mxu0
        %1054 = vmatprep.mubr.f32.mxu0 0.0
        %1055 = vmatmul.mubr.f32.gmra.mrb[0].mxu0 %v656
        %v1056 = vpop.f32.mrb[0].mxu0
        %v1057 = vadd.f32 %v834, %v1056
        %v1058 = vpop.f32.mrb[0].mxu0
        %1059 = vmatprep.mubr.f32.mxu0 0.0
        %1060 = vmatmul.mubr.f32.gmra.mrb[0].mxu0 %v601
        %v1061 = vpop.f32.mrb[0].mxu0
        %v1062 = vadd.f32 %v839, %v1061
        %v1063 = vpop.f32.mrb[0].mxu0
        %1064 = vmatprep.mubr.f32.mxu0 0.0
        %1065 = vmatmul.mubr.f32.gmra.mrb[0].mxu0 %v657
        %v1066 = vpop.f32.mrb[0].mxu0
        %v1067 = vadd.f32 %v844, %v1066
        %v1068 = vpop.f32.mrb[0].mxu0
        %1069 = vmatprep.mubr.f32.mxu0 0.0
        %1070 = vmatmul.mubr.f32.gmra.mrb[0].mxu0 %v604
        %v1071 = vpop.f32.mrb[0].mxu0
        %v1072 = vadd.f32 %v849, %v1071
        %v1073 = vpop.f32.mrb[0].mxu0
        %1074 = vmatprep.mubr.f32.mxu0 0.0
        %1075 = vmatmul.mubr.f32.gmra.mrb[0].mxu0 %v658
        %v1076 = vpop.f32.mrb[0].mxu0
        %v1077 = vadd.f32 %v854, %v1076
        %v1078 = vpop.f32.mrb[0].mxu0
        %1079 = vmatprep.mubr.f32.mxu0 0.0
        %1080 = vmatmul.mubr.f32.gmra.mrb[0].mxu0 %v607
        %v1081 = vpop.f32.mrb[0].mxu0
        %v1082 = vadd.f32 %v859, %v1081
        %v1083 = vpop.f32.mrb[0].mxu0
        %1084 = vmatprep.mubr.f32.mxu0 0.0
        %1085 = vmatmul.mubr.f32.gmra.mrb[0].mxu0 %v659
        %v1086 = vpop.f32.mrb[0].mxu0
        %v1087 = vadd.f32 %v864, %v1086
        %v1088 = vpop.f32.mrb[0].mxu0
        %1089 = vmatprep.mubr.f32.mxu0 0.0
        %1090 = vmatmul.mubr.f32.gmra.mrb[0].mxu0 %v610
        %v1091 = vpop.f32.mrb[0].mxu0
        %v1092 = vadd.f32 %v869, %v1091
        %v1093 = vpop.f32.mrb[0].mxu0
        %1094 = vmatprep.mubr.f32.mxu0 0.0
        %1095 = vmatmul.mubr.f32.gmra.mrb[0].mxu0 %v660
        %v1096 = vpop.f32.mrb[0].mxu0
        %v1097 = vadd.f32 %v874, %v1096
        %v1098 = vpop.f32.mrb[0].mxu0
        %1099 = vmatprep.mubr.f32.mxu0 0.0
        %1100 = vmatmul.mubr.f32.gmra.mrb[0].mxu0 %v613
        %v1101 = vpop.f32.mrb[0].mxu0
        %v1102 = vpop.f32.mrb[0].mxu0
        %1103 = vmatprep.mubr.f32.mxu0 0.0
        %1104 = vmatmul.mubr.f32.gmra.mrb[0].mxu0 %v661
        %v1105 = vpop.f32.mrb[0].mxu0
        %v1106 = vpop.f32.mrb[0].mxu0
        %1107 = vdwg.mxu0
        %1108 = vmatprep.subr.mxu0 0.0
        %1109 = vmatpush1.msra.mxu0 %v339
        %1110 = vmatprep.subr.mxu0 0.0
        %1111 = vmatpush1.msra.mxu0 %v340
        %1112 = vmatprep.subr.mxu0 0.0
        %1113 = vmatpush1.msra.mxu0 %v341
        %1114 = vmatprep.subr.mxu0 0.0
        %1115 = vmatpush1.msra.mxu0 %v342
        %1116 = vmatprep.subr.mxu0 0.0
        %1117 = vmatpush1.msra.mxu0 %v343
        %1118 = vmatprep.subr.mxu0 0.0
        %1119 = vmatpush1.msra.mxu0 %v344
        %1120 = vmatprep.subr.mxu0 0.0
        %1121 = vmatpush1.msra.mxu0 %v345
        %1122 = vmatprep.subr.mxu0 0.0
        %1123 = vmatpush1.msra.mxu0 %v346
        %1124 = vmatprep.subr.mxu0 0.0
        %1125 = vmatpush1.msra.mxu0 %v347
        %1126 = vmatprep.subr.mxu0 0.0
        %1127 = vmatpush1.msra.mxu0 %v348
        %1128 = vmatprep.subr.mxu0 0.0
        %1129 = vmatpush1.msra.mxu0 %v349
        %1130 = vmatprep.subr.mxu0 0.0
        %1131 = vmatpush1.msra.mxu0 %v350
        %1132 = vmatprep.subr.mxu0 0.0
        %1133 = vmatpush1.msra.mxu0 %v351
        %1134 = vmatprep.subr.mxu0 0.0
        %1135 = vmatpush1.msra.mxu0 %v352
        %1136 = vmatprep.subr.mxu0 0.0
        %1137 = vmatpush1.msra.mxu0 %v353
        %1138 = vmatprep.subr.mxu0 0.0
        %1139 = vmatpush1.msra.mxu0 %v354
        %1140 = vmatprep.subr.mxu0 0.0
        %1141 = vmatpush1.msra.mxu0 %v355
        %1142 = vmatprep.subr.mxu0 0.0
        %1143 = vmatpush1.msra.mxu0 %v356
        %1144 = vmatprep.subr.mxu0 0.0
        %1145 = vmatpush1.msra.mxu0 %v357
        %1146 = vmatprep.subr.mxu0 0.0
        %1147 = vmatpush1.msra.mxu0 %v358
        %1148 = vmatprep.subr.mxu0 0.0
        %1149 = vmatpush1.msra.mxu0 %v359
        %1150 = vmatprep.subr.mxu0 0.0
        %1151 = vmatpush1.msra.mxu0 %v360
        %1152 = vmatprep.subr.mxu0 0.0
        %1153 = vmatpush1.msra.mxu0 %v361
        %1154 = vmatprep.subr.mxu0 0.0
        %1155 = vmatpush1.msra.mxu0 %v362
        %1156 = vmatprep.subr.mxu0 0.0
        %1157 = vmatpush1.msra.mxu0 %v363
        %1158 = vmatprep.subr.mxu0 0.0
        %1159 = vmatpush1.msra.mxu0 %v364
        %1160 = vmatprep.subr.mxu0 0.0
        %1161 = vmatpush1.msra.mxu0 %v365
        %1162 = vmatprep.subr.mxu0 0.0
        %1163 = vmatpush1.msra.mxu0 %v366
        %1164 = vmatprep.subr.mxu0 0.0
        %1165 = vmatpush1.msra.mxu0 %v367
        %1166 = vmatprep.subr.mxu0 0.0
        %1167 = vmatpush1.msra.mxu0 %v368
        %1168 = vmatprep.subr.mxu0 0.0
        %1169 = vmatpush1.msra.mxu0 %v369
        %1170 = vmatprep.subr.mxu0 0.0
        %1171 = vmatpush1.msra.mxu0 %v370
        %1172 = vmatprep.mubr.f32.mxu0 %v256
        %1173 = vmatmul.mubr.f32.gmra.mrb[0].mxu0 %v549
        %v1174 = vpop.f32.mrb[0].mxu0
        %v1175 = vadd.f32 0.0, %v1174
        %v1176 = vpop.f32.mrb[0].mxu0
        %1177 = vmatprep.mubr.f32.mxu0 %v257
        %1178 = vmatmul.mubr.f32.gmra.mrb[0].mxu0 %v471
        %v1179 = vpop.f32.mrb[0].mxu0
        %v1180 = vadd.f32 0.0, %v1179
        %v1181 = vpop.f32.mrb[0].mxu0
        %1182 = vmatprep.mubr.f32.mxu0 %v258
        %1183 = vmatmul.mubr.f32.gmra.mrb[0].mxu0 %v550
        %v1184 = vpop.f32.mrb[0].mxu0
        %v1185 = vadd.f32 0.0, %v1184
        %v1186 = vpop.f32.mrb[0].mxu0
        %1187 = vmatprep.mubr.f32.mxu0 %v259
        %1188 = vmatmul.mubr.f32.gmra.mrb[0].mxu0 %v474
        %v1189 = vpop.f32.mrb[0].mxu0
        %v1190 = vadd.f32 0.0, %v1189
        %v1191 = vpop.f32.mrb[0].mxu0
        %1192 = vmatprep.mubr.f32.mxu0 %v260
        %1193 = vmatmul.mubr.f32.gmra.mrb[0].mxu0 %v551
        %v1194 = vpop.f32.mrb[0].mxu0
        %v1195 = vadd.f32 0.0, %v1194
        %v1196 = vpop.f32.mrb[0].mxu0
        %1197 = vmatprep.mubr.f32.mxu0 %v261
        %1198 = vmatmul.mubr.f32.gmra.mrb[0].mxu0 %v477
        %v1199 = vpop.f32.mrb[0].mxu0
        %v1200 = vadd.f32 0.0, %v1199
        %v1201 = vpop.f32.mrb[0].mxu0
        %1202 = vmatprep.mubr.f32.mxu0 %v262
        %1203 = vmatmul.mubr.f32.gmra.mrb[0].mxu0 %v552
        %v1204 = vpop.f32.mrb[0].mxu0
        %v1205 = vadd.f32 0.0, %v1204
        %v1206 = vpop.f32.mrb[0].mxu0
        %1207 = vmatprep.mubr.f32.mxu0 %v263
        %1208 = vmatmul.mubr.f32.gmra.mrb[0].mxu0 %v480
        %v1209 = vpop.f32.mrb[0].mxu0
        %v1210 = vadd.f32 0.0, %v1209
        %v1211 = vpop.f32.mrb[0].mxu0
        %1212 = vmatprep.mubr.f32.mxu0 %v264
        %1213 = vmatmul.mubr.f32.gmra.mrb[0].mxu0 %v553
        %v1214 = vpop.f32.mrb[0].mxu0
        %v1215 = vadd.f32 0.0, %v1214
        %v1216 = vpop.f32.mrb[0].mxu0
        %1217 = vmatprep.mubr.f32.mxu0 %v265
        %1218 = vmatmul.mubr.f32.gmra.mrb[0].mxu0 %v483
        %v1219 = vpop.f32.mrb[0].mxu0
        %v1220 = vadd.f32 0.0, %v1219
        %v1221 = vpop.f32.mrb[0].mxu0
        %1222 = vmatprep.mubr.f32.mxu0 %v266
        %1223 = vmatmul.mubr.f32.gmra.mrb[0].mxu0 %v554
        %v1224 = vpop.f32.mrb[0].mxu0
        %v1225 = vadd.f32 0.0, %v1224
        %v1226 = vpop.f32.mrb[0].mxu0
        %1227 = vmatprep.mubr.f32.mxu0 %v267
        %1228 = vmatmul.mubr.f32.gmra.mrb[0].mxu0 %v486
        %v1229 = vpop.f32.mrb[0].mxu0
        %v1230 = vadd.f32 0.0, %v1229
        %v1231 = vpop.f32.mrb[0].mxu0
        %1232 = vmatprep.mubr.f32.mxu0 %v268
        %1233 = vmatmul.mubr.f32.gmra.mrb[0].mxu0 %v555
        %v1234 = vpop.f32.mrb[0].mxu0
        %v1235 = vadd.f32 0.0, %v1234
        %v1236 = vpop.f32.mrb[0].mxu0
        %1237 = vmatprep.mubr.f32.mxu0 %v269
        %1238 = vmatmul.mubr.f32.gmra.mrb[0].mxu0 %v489
        %v1239 = vpop.f32.mrb[0].mxu0
        %v1240 = vadd.f32 0.0, %v1239
        %v1241 = vpop.f32.mrb[0].mxu0
        %1242 = vmatprep.mubr.f32.mxu0 %v270
        %1243 = vmatmul.mubr.f32.gmra.mrb[0].mxu0 %v556
        %v1244 = vpop.f32.mrb[0].mxu0
        %v1245 = vadd.f32 0.0, %v1244
        %v1246 = vpop.f32.mrb[0].mxu0
        %1247 = vmatprep.mubr.f32.mxu0 %v271
        %1248 = vmatmul.mubr.f32.gmra.mrb[0].mxu0 %v492
        %v1249 = vpop.f32.mrb[0].mxu0
        %v1250 = vadd.f32 0.0, %v1249
        %v1251 = vpop.f32.mrb[0].mxu0
        %1252 = vmatprep.mubr.f32.mxu0 %v272
        %1253 = vmatmul.mubr.f32.gmra.mrb[0].mxu0 %v557
        %v1254 = vpop.f32.mrb[0].mxu0
        %v1255 = vadd.f32 0.0, %v1254
        %v1256 = vpop.f32.mrb[0].mxu0
        %1257 = vmatprep.mubr.f32.mxu0 %v273
        %1258 = vmatmul.mubr.f32.gmra.mrb[0].mxu0 %v495
        %v1259 = vpop.f32.mrb[0].mxu0
        %v1260 = vadd.f32 0.0, %v1259
        %v1261 = vpop.f32.mrb[0].mxu0
        %1262 = vmatprep.mubr.f32.mxu0 %v274
        %1263 = vmatmul.mubr.f32.gmra.mrb[0].mxu0 %v558
        %v1264 = vpop.f32.mrb[0].mxu0
        %v1265 = vadd.f32 0.0, %v1264
        %v1266 = vpop.f32.mrb[0].mxu0
        %1267 = vmatprep.mubr.f32.mxu0 %v275
        %1268 = vmatmul.mubr.f32.gmra.mrb[0].mxu0 %v498
        %v1269 = vpop.f32.mrb[0].mxu0
        %v1270 = vadd.f32 0.0, %v1269
        %v1271 = vpop.f32.mrb[0].mxu0
        %1272 = vmatprep.mubr.f32.mxu0 %v276
        %1273 = vmatmul.mubr.f32.gmra.mrb[0].mxu0 %v559
        %v1274 = vpop.f32.mrb[0].mxu0
        %v1275 = vadd.f32 0.0, %v1274
        %v1276 = vpop.f32.mrb[0].mxu0
        %1277 = vmatprep.mubr.f32.mxu0 %v277
        %1278 = vmatmul.mubr.f32.gmra.mrb[0].mxu0 %v501
        %v1279 = vpop.f32.mrb[0].mxu0
        %v1280 = vadd.f32 0.0, %v1279
        %v1281 = vpop.f32.mrb[0].mxu0
        %1282 = vmatprep.mubr.f32.mxu0 %v278
        %1283 = vmatmul.mubr.f32.gmra.mrb[0].mxu0 %v560
        %v1284 = vpop.f32.mrb[0].mxu0
        %v1285 = vadd.f32 0.0, %v1284
        %v1286 = vpop.f32.mrb[0].mxu0
        %1287 = vmatprep.mubr.f32.mxu0 %v279
        %1288 = vmatmul.mubr.f32.gmra.mrb[0].mxu0 %v504
        %v1289 = vpop.f32.mrb[0].mxu0
        %v1290 = vadd.f32 0.0, %v1289
        %v1291 = vpop.f32.mrb[0].mxu0
        %1292 = vmatprep.mubr.f32.mxu0 %v280
        %1293 = vmatmul.mubr.f32.gmra.mrb[0].mxu0 %v561
        %v1294 = vpop.f32.mrb[0].mxu0
        %v1295 = vadd.f32 0.0, %v1294
        %v1296 = vpop.f32.mrb[0].mxu0
        %1297 = vmatprep.mubr.f32.mxu0 %v281
        %1298 = vmatmul.mubr.f32.gmra.mrb[0].mxu0 %v507
        %v1299 = vpop.f32.mrb[0].mxu0
        %v1300 = vadd.f32 0.0, %v1299
        %v1301 = vpop.f32.mrb[0].mxu0
        %1302 = vmatprep.mubr.f32.mxu0 %v282
        %1303 = vmatmul.mubr.f32.gmra.mrb[0].mxu0 %v562
        %v1304 = vpop.f32.mrb[0].mxu0
        %v1305 = vadd.f32 0.0, %v1304
        %v1306 = vpop.f32.mrb[0].mxu0
        %1307 = vmatprep.mubr.f32.mxu0 %v283
        %1308 = vmatmul.mubr.f32.gmra.mrb[0].mxu0 %v510
        %v1309 = vpop.f32.mrb[0].mxu0
        %v1310 = vadd.f32 0.0, %v1309
        %v1311 = vpop.f32.mrb[0].mxu0
        %1312 = vmatprep.mubr.f32.mxu0 %v284
        %1313 = vmatmul.mubr.f32.gmra.mrb[0].mxu0 %v563
        %v1314 = vpop.f32.mrb[0].mxu0
        %v1315 = vadd.f32 0.0, %v1314
        %v1316 = vpop.f32.mrb[0].mxu0
        %1317 = vmatprep.mubr.f32.mxu0 %v285
        %1318 = vmatmul.mubr.f32.gmra.mrb[0].mxu0 %v513
        %v1319 = vpop.f32.mrb[0].mxu0
        %v1320 = vadd.f32 0.0, %v1319
        %v1321 = vpop.f32.mrb[0].mxu0
        %1322 = vmatprep.mubr.f32.mxu0 %v286
        %1323 = vmatmul.mubr.f32.gmra.mrb[0].mxu0 %v564
        %v1324 = vpop.f32.mrb[0].mxu0
        %v1325 = vadd.f32 0.0, %v1324
        %v1326 = vpop.f32.mrb[0].mxu0
        %1327 = vmatprep.mubr.f32.mxu0 %v287
        %1328 = vmatmul.mubr.f32.gmra.mrb[0].mxu0 %v516
        %v1329 = vpop.f32.mrb[0].mxu0
        %v1330 = vadd.f32 0.0, %v1329
        %v1331 = vpop.f32.mrb[0].mxu0
        %1332 = vdwg.mxu0
        %1333 = vmatprep.subr.mxu0 0.0
        %1334 = vmatpush1.msra.mxu0 %v371
        %1335 = vmatprep.subr.mxu0 0.0
        %1336 = vmatpush1.msra.mxu0 %v372
        %1337 = vmatprep.subr.mxu0 0.0
        %1338 = vmatpush1.msra.mxu0 %v373
        %1339 = vmatprep.subr.mxu0 0.0
        %1340 = vmatpush1.msra.mxu0 %v374
        %1341 = vmatprep.subr.mxu0 0.0
        %1342 = vmatpush1.msra.mxu0 %v375
        %1343 = vmatprep.subr.mxu0 0.0
        %1344 = vmatpush1.msra.mxu0 %v376
        %1345 = vmatprep.subr.mxu0 0.0
        %1346 = vmatpush1.msra.mxu0 %v377
        %1347 = vmatprep.subr.mxu0 0.0
        %1348 = vmatpush1.msra.mxu0 %v378
        %1349 = vmatprep.subr.mxu0 0.0
        %1350 = vmatpush1.msra.mxu0 %v379
        %1351 = vmatprep.subr.mxu0 0.0
        %1352 = vmatpush1.msra.mxu0 %v380
        %1353 = vmatprep.subr.mxu0 0.0
        %1354 = vmatpush1.msra.mxu0 %v381
        %1355 = vmatprep.subr.mxu0 0.0
        %1356 = vmatpush1.msra.mxu0 %v382
        %1357 = vmatprep.subr.mxu0 0.0
        %1358 = vmatpush1.msra.mxu0 %v383
        %1359 = vmatprep.subr.mxu0 0.0
        %1360 = vmatpush1.msra.mxu0 %v384
        %1361 = vmatprep.subr.mxu0 0.0
        %1362 = vmatpush1.msra.mxu0 %v385
        %1363 = vmatprep.subr.mxu0 0.0
        %1364 = vmatpush1.msra.mxu0 %v386
        %1365 = vmatprep.subr.mxu0 0.0
        %1366 = vmatpush1.msra.mxu0 0.0
        %1367 = vmatprep.subr.mxu0 0.0
        %1368 = vmatpush1.msra.mxu0 0.0
        %1369 = vmatprep.subr.mxu0 0.0
        %1370 = vmatpush1.msra.mxu0 0.0
        %1371 = vmatprep.subr.mxu0 0.0
        %1372 = vmatpush1.msra.mxu0 0.0
        %1373 = vmatprep.subr.mxu0 0.0
        %1374 = vmatpush1.msra.mxu0 0.0
        %1375 = vmatprep.subr.mxu0 0.0
        %1376 = vmatpush1.msra.mxu0 0.0
        %1377 = vmatprep.subr.mxu0 0.0
        %1378 = vmatpush1.msra.mxu0 0.0
        %1379 = vmatprep.subr.mxu0 0.0
        %1380 = vmatpush1.msra.mxu0 0.0
        %1381 = vmatprep.subr.mxu0 0.0
        %1382 = vmatpush1.msra.mxu0 0.0
        %1383 = vmatprep.subr.mxu0 0.0
        %1384 = vmatpush1.msra.mxu0 0.0
        %1385 = vmatprep.subr.mxu0 0.0
        %1386 = vmatpush1.msra.mxu0 0.0
        %1387 = vmatprep.subr.mxu0 0.0
        %1388 = vmatpush1.msra.mxu0 0.0
        %1389 = vmatprep.subr.mxu0 0.0
        %1390 = vmatpush1.msra.mxu0 0.0
        %1391 = vmatprep.subr.mxu0 0.0
        %1392 = vmatpush1.msra.mxu0 0.0
        %1393 = vmatprep.subr.mxu0 0.0
        %1394 = vmatpush1.msra.mxu0 0.0
        %1395 = vmatprep.subr.mxu0 0.0
        %1396 = vmatpush1.msra.mxu0 0.0
        %1397 = vmatprep.mubr.f32.mxu0 0.0
        %1398 = vmatmul.mubr.f32.gmra.mrb[0].mxu0 %v568
        %v1399 = vpop.f32.mrb[0].mxu0
        %v1400 = vadd.f32 %v1175, %v1399
        %v1401 = vpop.f32.mrb[0].mxu0
        %1402 = vmatprep.mubr.f32.mxu0 0.0
        %1403 = vmatmul.mubr.f32.gmra.mrb[0].mxu0 %v646
        %v1404 = vpop.f32.mrb[0].mxu0
        %v1405 = vadd.f32 %v1180, %v1404
        %v1406 = vpop.f32.mrb[0].mxu0
        %1407 = vmatprep.mubr.f32.mxu0 0.0
        %1408 = vmatmul.mubr.f32.gmra.mrb[0].mxu0 %v571
        %v1409 = vpop.f32.mrb[0].mxu0
        %v1410 = vadd.f32 %v1185, %v1409
        %v1411 = vpop.f32.mrb[0].mxu0
        %1412 = vmatprep.mubr.f32.mxu0 0.0
        %1413 = vmatmul.mubr.f32.gmra.mrb[0].mxu0 %v647
        %v1414 = vpop.f32.mrb[0].mxu0
        %v1415 = vadd.f32 %v1190, %v1414
        %v1416 = vpop.f32.mrb[0].mxu0
        %1417 = vmatprep.mubr.f32.mxu0 0.0
        %1418 = vmatmul.mubr.f32.gmra.mrb[0].mxu0 %v574
        %v1419 = vpop.f32.mrb[0].mxu0
        %v1420 = vadd.f32 %v1195, %v1419
        %v1421 = vpop.f32.mrb[0].mxu0
        %1422 = vmatprep.mubr.f32.mxu0 0.0
        %1423 = vmatmul.mubr.f32.gmra.mrb[0].mxu0 %v648
        %v1424 = vpop.f32.mrb[0].mxu0
        %v1425 = vadd.f32 %v1200, %v1424
        %v1426 = vpop.f32.mrb[0].mxu0
        %1427 = vmatprep.mubr.f32.mxu0 0.0
        %1428 = vmatmul.mubr.f32.gmra.mrb[0].mxu0 %v577
        %v1429 = vpop.f32.mrb[0].mxu0
        %v1430 = vadd.f32 %v1205, %v1429
        %v1431 = vpop.f32.mrb[0].mxu0
        %1432 = vmatprep.mubr.f32.mxu0 0.0
        %1433 = vmatmul.mubr.f32.gmra.mrb[0].mxu0 %v649
        %v1434 = vpop.f32.mrb[0].mxu0
        %v1435 = vadd.f32 %v1210, %v1434
        %v1436 = vpop.f32.mrb[0].mxu0
        %1437 = vmatprep.mubr.f32.mxu0 0.0
        %1438 = vmatmul.mubr.f32.gmra.mrb[0].mxu0 %v580
        %v1439 = vpop.f32.mrb[0].mxu0
        %v1440 = vadd.f32 %v1215, %v1439
        %v1441 = vpop.f32.mrb[0].mxu0
        %1442 = vmatprep.mubr.f32.mxu0 0.0
        %1443 = vmatmul.mubr.f32.gmra.mrb[0].mxu0 %v650
        %v1444 = vpop.f32.mrb[0].mxu0
        %v1445 = vadd.f32 %v1220, %v1444
        %v1446 = vpop.f32.mrb[0].mxu0
        %1447 = vmatprep.mubr.f32.mxu0 0.0
        %1448 = vmatmul.mubr.f32.gmra.mrb[0].mxu0 %v583
        %v1449 = vpop.f32.mrb[0].mxu0
        %v1450 = vadd.f32 %v1225, %v1449
        %v1451 = vpop.f32.mrb[0].mxu0
        %1452 = vmatprep.mubr.f32.mxu0 0.0
        %1453 = vmatmul.mubr.f32.gmra.mrb[0].mxu0 %v651
        %v1454 = vpop.f32.mrb[0].mxu0
        %v1455 = vadd.f32 %v1230, %v1454
        %v1456 = vpop.f32.mrb[0].mxu0
        %1457 = vmatprep.mubr.f32.mxu0 0.0
        %1458 = vmatmul.mubr.f32.gmra.mrb[0].mxu0 %v586
        %v1459 = vpop.f32.mrb[0].mxu0
        %v1460 = vadd.f32 %v1235, %v1459
        %v1461 = vpop.f32.mrb[0].mxu0
        %1462 = vmatprep.mubr.f32.mxu0 0.0
        %1463 = vmatmul.mubr.f32.gmra.mrb[0].mxu0 %v652
        %v1464 = vpop.f32.mrb[0].mxu0
        %v1465 = vadd.f32 %v1240, %v1464
        %v1466 = vpop.f32.mrb[0].mxu0
        %1467 = vmatprep.mubr.f32.mxu0 0.0
        %1468 = vmatmul.mubr.f32.gmra.mrb[0].mxu0 %v589
        %v1469 = vpop.f32.mrb[0].mxu0
        %v1470 = vadd.f32 %v1245, %v1469
        %v1471 = vpop.f32.mrb[0].mxu0
        %1472 = vmatprep.mubr.f32.mxu0 0.0
        %1473 = vmatmul.mubr.f32.gmra.mrb[0].mxu0 %v653
        %v1474 = vpop.f32.mrb[0].mxu0
        %v1475 = vadd.f32 %v1250, %v1474
        %v1476 = vpop.f32.mrb[0].mxu0
        %1477 = vmatprep.mubr.f32.mxu0 0.0
        %1478 = vmatmul.mubr.f32.gmra.mrb[0].mxu0 %v592
        %v1479 = vpop.f32.mrb[0].mxu0
        %v1480 = vadd.f32 %v1255, %v1479
        %v1481 = vpop.f32.mrb[0].mxu0
        %1482 = vmatprep.mubr.f32.mxu0 0.0
        %1483 = vmatmul.mubr.f32.gmra.mrb[0].mxu0 %v654
        %v1484 = vpop.f32.mrb[0].mxu0
        %v1485 = vadd.f32 %v1260, %v1484
        %v1486 = vpop.f32.mrb[0].mxu0
        %1487 = vmatprep.mubr.f32.mxu0 0.0
        %1488 = vmatmul.mubr.f32.gmra.mrb[0].mxu0 %v595
        %v1489 = vpop.f32.mrb[0].mxu0
        %v1490 = vadd.f32 %v1265, %v1489
        %v1491 = vpop.f32.mrb[0].mxu0
        %1492 = vmatprep.mubr.f32.mxu0 0.0
        %1493 = vmatmul.mubr.f32.gmra.mrb[0].mxu0 %v655
        %v1494 = vpop.f32.mrb[0].mxu0
        %v1495 = vadd.f32 %v1270, %v1494
        %v1496 = vpop.f32.mrb[0].mxu0
        %1497 = vmatprep.mubr.f32.mxu0 0.0
        %1498 = vmatmul.mubr.f32.gmra.mrb[0].mxu0 %v598
        %v1499 = vpop.f32.mrb[0].mxu0
        %v1500 = vadd.f32 %v1275, %v1499
        %v1501 = vpop.f32.mrb[0].mxu0
        %1502 = vmatprep.mubr.f32.mxu0 0.0
        %1503 = vmatmul.mubr.f32.gmra.mrb[0].mxu0 %v656
        %v1504 = vpop.f32.mrb[0].mxu0
        %v1505 = vadd.f32 %v1280, %v1504
        %v1506 = vpop.f32.mrb[0].mxu0
        %1507 = vmatprep.mubr.f32.mxu0 0.0
        %1508 = vmatmul.mubr.f32.gmra.mrb[0].mxu0 %v601
        %v1509 = vpop.f32.mrb[0].mxu0
        %v1510 = vadd.f32 %v1285, %v1509
        %v1511 = vpop.f32.mrb[0].mxu0
        %1512 = vmatprep.mubr.f32.mxu0 0.0
        %1513 = vmatmul.mubr.f32.gmra.mrb[0].mxu0 %v657
        %v1514 = vpop.f32.mrb[0].mxu0
        %v1515 = vadd.f32 %v1290, %v1514
        %v1516 = vpop.f32.mrb[0].mxu0
        %1517 = vmatprep.mubr.f32.mxu0 0.0
        %1518 = vmatmul.mubr.f32.gmra.mrb[0].mxu0 %v604
        %v1519 = vpop.f32.mrb[0].mxu0
        %v1520 = vadd.f32 %v1295, %v1519
        %v1521 = vpop.f32.mrb[0].mxu0
        %1522 = vmatprep.mubr.f32.mxu0 0.0
        %1523 = vmatmul.mubr.f32.gmra.mrb[0].mxu0 %v658
        %v1524 = vpop.f32.mrb[0].mxu0
        %v1525 = vadd.f32 %v1300, %v1524
        %v1526 = vpop.f32.mrb[0].mxu0
        %1527 = vmatprep.mubr.f32.mxu0 0.0
        %1528 = vmatmul.mubr.f32.gmra.mrb[0].mxu0 %v607
        %v1529 = vpop.f32.mrb[0].mxu0
        %v1530 = vadd.f32 %v1305, %v1529
        %v1531 = vpop.f32.mrb[0].mxu0
        %1532 = vmatprep.mubr.f32.mxu0 0.0
        %1533 = vmatmul.mubr.f32.gmra.mrb[0].mxu0 %v659
        %v1534 = vpop.f32.mrb[0].mxu0
        %v1535 = vadd.f32 %v1310, %v1534
        %v1536 = vpop.f32.mrb[0].mxu0
        %1537 = vmatprep.mubr.f32.mxu0 0.0
        %1538 = vmatmul.mubr.f32.gmra.mrb[0].mxu0 %v610
        %v1539 = vpop.f32.mrb[0].mxu0
        %v1540 = vadd.f32 %v1315, %v1539
        %v1541 = vpop.f32.mrb[0].mxu0
        %1542 = vmatprep.mubr.f32.mxu0 0.0
        %1543 = vmatmul.mubr.f32.gmra.mrb[0].mxu0 %v660
        %v1544 = vpop.f32.mrb[0].mxu0
        %v1545 = vadd.f32 %v1320, %v1544
        %v1546 = vpop.f32.mrb[0].mxu0
        %1547 = vmatprep.mubr.f32.mxu0 0.0
        %1548 = vmatmul.mubr.f32.gmra.mrb[0].mxu0 %v613
        %v1549 = vpop.f32.mrb[0].mxu0
        %v1550 = vadd.f32 %v1325, %v1549
        %v1551 = vpop.f32.mrb[0].mxu0
        %1552 = vmatprep.mubr.f32.mxu0 0.0
        %1553 = vmatmul.mubr.f32.gmra.mrb[0].mxu0 %v661
        %v1554 = vpop.f32.mrb[0].mxu0
        %v1555 = vadd.f32 %v1330, %v1554
        %v1556 = vpop.f32.mrb[0].mxu0
        %1557 = vdwg.mxu0
        %1558 = vmatprep.subr.mxu0 0.0
        %1559 = vmatpush1.msra.mxu0 %v388
        %1560 = vmatprep.subr.mxu0 0.0
        %1561 = vmatpush1.msra.mxu0 %v389
        %1562 = vmatprep.subr.mxu0 0.0
        %1563 = vmatpush1.msra.mxu0 %v390
        %1564 = vmatprep.subr.mxu0 0.0
        %1565 = vmatpush1.msra.mxu0 %v391
        %1566 = vmatprep.subr.mxu0 0.0
        %1567 = vmatpush1.msra.mxu0 %v392
        %1568 = vmatprep.subr.mxu0 0.0
        %1569 = vmatpush1.msra.mxu0 %v393
        %1570 = vmatprep.subr.mxu0 0.0
        %1571 = vmatpush1.msra.mxu0 %v394
        %1572 = vmatprep.subr.mxu0 0.0
        %1573 = vmatpush1.msra.mxu0 %v395
        %1574 = vmatprep.subr.mxu0 0.0
        %1575 = vmatpush1.msra.mxu0 %v396
        %1576 = vmatprep.subr.mxu0 0.0
        %1577 = vmatpush1.msra.mxu0 %v397
        %1578 = vmatprep.subr.mxu0 0.0
        %1579 = vmatpush1.msra.mxu0 %v398
        %1580 = vmatprep.subr.mxu0 0.0
        %1581 = vmatpush1.msra.mxu0 %v399
        %1582 = vmatprep.subr.mxu0 0.0
        %1583 = vmatpush1.msra.mxu0 %v400
        %1584 = vmatprep.subr.mxu0 0.0
        %1585 = vmatpush1.msra.mxu0 %v401
        %1586 = vmatprep.subr.mxu0 0.0
        %1587 = vmatpush1.msra.mxu0 %v402
        %1588 = vmatprep.subr.mxu0 0.0
        %1589 = vmatpush1.msra.mxu0 %v403
        %1590 = vmatprep.subr.mxu0 0.0
        %1591 = vmatpush1.msra.mxu0 %v404
        %1592 = vmatprep.subr.mxu0 0.0
        %1593 = vmatpush1.msra.mxu0 %v405
        %1594 = vmatprep.subr.mxu0 0.0
        %1595 = vmatpush1.msra.mxu0 %v406
        %1596 = vmatprep.subr.mxu0 0.0
        %1597 = vmatpush1.msra.mxu0 %v407
        %1598 = vmatprep.subr.mxu0 0.0
        %1599 = vmatpush1.msra.mxu0 %v408
        %1600 = vmatprep.subr.mxu0 0.0
        %1601 = vmatpush1.msra.mxu0 %v409
        %1602 = vmatprep.subr.mxu0 0.0
        %1603 = vmatpush1.msra.mxu0 %v410
        %1604 = vmatprep.subr.mxu0 0.0
        %1605 = vmatpush1.msra.mxu0 %v411
        %1606 = vmatprep.subr.mxu0 0.0
        %1607 = vmatpush1.msra.mxu0 %v412
        %1608 = vmatprep.subr.mxu0 0.0
        %1609 = vmatpush1.msra.mxu0 %v413
        %1610 = vmatprep.subr.mxu0 0.0
        %1611 = vmatpush1.msra.mxu0 %v414
        %1612 = vmatprep.subr.mxu0 0.0
        %1613 = vmatpush1.msra.mxu0 %v415
        %1614 = vmatprep.subr.mxu0 0.0
        %1615 = vmatpush1.msra.mxu0 %v416
        %1616 = vmatprep.subr.mxu0 0.0
        %1617 = vmatpush1.msra.mxu0 %v417
        %1618 = vmatprep.subr.mxu0 0.0
        %1619 = vmatpush1.msra.mxu0 %v418
        %1620 = vmatprep.subr.mxu0 0.0
        %1621 = vmatpush1.msra.mxu0 %v419
        %1622 = vmatprep.mubr.f32.mxu0 %v256
        %1623 = vmatmul.mubr.f32.gmra.mrb[0].mxu0 %v549
        %v1624 = vpop.f32.mrb[0].mxu0
        %v1625 = vpop.f32.mrb[0].mxu0
        %1626 = vmatprep.mubr.f32.mxu0 %v257
        %1627 = vmatmul.mubr.f32.gmra.mrb[0].mxu0 %v471
        %v1628 = vpop.f32.mrb[0].mxu0
        %v1629 = vpop.f32.mrb[0].mxu0
        %1630 = vmatprep.mubr.f32.mxu0 %v258
        %1631 = vmatmul.mubr.f32.gmra.mrb[0].mxu0 %v550
        %v1632 = vpop.f32.mrb[0].mxu0
        %v1633 = vadd.f32 0.0, %v1632
        %v1634 = vpop.f32.mrb[0].mxu0
        %1635 = vmatprep.mubr.f32.mxu0 %v259
        %1636 = vmatmul.mubr.f32.gmra.mrb[0].mxu0 %v474
        %v1637 = vpop.f32.mrb[0].mxu0
        %v1638 = vadd.f32 0.0, %v1637
        %v1639 = vpop.f32.mrb[0].mxu0
        %1640 = vmatprep.mubr.f32.mxu0 %v260
        %1641 = vmatmul.mubr.f32.gmra.mrb[0].mxu0 %v551
        %v1642 = vpop.f32.mrb[0].mxu0
        %v1643 = vadd.f32 0.0, %v1642
        %v1644 = vpop.f32.mrb[0].mxu0
        %1645 = vmatprep.mubr.f32.mxu0 %v261
        %1646 = vmatmul.mubr.f32.gmra.mrb[0].mxu0 %v477
        %v1647 = vpop.f32.mrb[0].mxu0
        %v1648 = vadd.f32 0.0, %v1647
        %v1649 = vpop.f32.mrb[0].mxu0
        %1650 = vmatprep.mubr.f32.mxu0 %v262
        %1651 = vmatmul.mubr.f32.gmra.mrb[0].mxu0 %v552
        %v1652 = vpop.f32.mrb[0].mxu0
        %v1653 = vadd.f32 0.0, %v1652
        %v1654 = vpop.f32.mrb[0].mxu0
        %1655 = vmatprep.mubr.f32.mxu0 %v263
        %1656 = vmatmul.mubr.f32.gmra.mrb[0].mxu0 %v480
        %v1657 = vpop.f32.mrb[0].mxu0
        %v1658 = vadd.f32 0.0, %v1657
        %v1659 = vpop.f32.mrb[0].mxu0
        %1660 = vmatprep.mubr.f32.mxu0 %v264
        %1661 = vmatmul.mubr.f32.gmra.mrb[0].mxu0 %v553
        %v1662 = vpop.f32.mrb[0].mxu0
        %v1663 = vadd.f32 0.0, %v1662
        %v1664 = vpop.f32.mrb[0].mxu0
        %1665 = vmatprep.mubr.f32.mxu0 %v265
        %1666 = vmatmul.mubr.f32.gmra.mrb[0].mxu0 %v483
        %v1667 = vpop.f32.mrb[0].mxu0
        %v1668 = vadd.f32 0.0, %v1667
        %v1669 = vpop.f32.mrb[0].mxu0
        %1670 = vmatprep.mubr.f32.mxu0 %v266
        %1671 = vmatmul.mubr.f32.gmra.mrb[0].mxu0 %v554
        %v1672 = vpop.f32.mrb[0].mxu0
        %v1673 = vadd.f32 0.0, %v1672
        %v1674 = vpop.f32.mrb[0].mxu0
        %1675 = vmatprep.mubr.f32.mxu0 %v267
        %1676 = vmatmul.mubr.f32.gmra.mrb[0].mxu0 %v486
        %v1677 = vpop.f32.mrb[0].mxu0
        %v1678 = vadd.f32 0.0, %v1677
        %v1679 = vpop.f32.mrb[0].mxu0
        %1680 = vmatprep.mubr.f32.mxu0 %v268
        %1681 = vmatmul.mubr.f32.gmra.mrb[0].mxu0 %v555
        %v1682 = vpop.f32.mrb[0].mxu0
        %v1683 = vadd.f32 0.0, %v1682
        %v1684 = vpop.f32.mrb[0].mxu0
        %1685 = vmatprep.mubr.f32.mxu0 %v269
        %1686 = vmatmul.mubr.f32.gmra.mrb[0].mxu0 %v489
        %v1687 = vpop.f32.mrb[0].mxu0
        %v1688 = vadd.f32 0.0, %v1687
        %v1689 = vpop.f32.mrb[0].mxu0
        %1690 = vmatprep.mubr.f32.mxu0 %v270
        %1691 = vmatmul.mubr.f32.gmra.mrb[0].mxu0 %v556
        %v1692 = vpop.f32.mrb[0].mxu0
        %v1693 = vadd.f32 0.0, %v1692
        %v1694 = vpop.f32.mrb[0].mxu0
        %1695 = vmatprep.mubr.f32.mxu0 %v271
        %1696 = vmatmul.mubr.f32.gmra.mrb[0].mxu0 %v492
        %v1697 = vpop.f32.mrb[0].mxu0
        %v1698 = vadd.f32 0.0, %v1697
        %v1699 = vpop.f32.mrb[0].mxu0
        %1700 = vmatprep.mubr.f32.mxu0 %v272
        %1701 = vmatmul.mubr.f32.gmra.mrb[0].mxu0 %v557
        %v1702 = vpop.f32.mrb[0].mxu0
        %v1703 = vadd.f32 0.0, %v1702
        %v1704 = vpop.f32.mrb[0].mxu0
        %1705 = vmatprep.mubr.f32.mxu0 %v273
        %1706 = vmatmul.mubr.f32.gmra.mrb[0].mxu0 %v495
        %v1707 = vpop.f32.mrb[0].mxu0
        %v1708 = vadd.f32 0.0, %v1707
        %v1709 = vpop.f32.mrb[0].mxu0
        %1710 = vmatprep.mubr.f32.mxu0 %v274
        %1711 = vmatmul.mubr.f32.gmra.mrb[0].mxu0 %v558
        %v1712 = vpop.f32.mrb[0].mxu0
        %v1713 = vadd.f32 0.0, %v1712
        %v1714 = vpop.f32.mrb[0].mxu0
        %1715 = vmatprep.mubr.f32.mxu0 %v275
        %1716 = vmatmul.mubr.f32.gmra.mrb[0].mxu0 %v498
        %v1717 = vpop.f32.mrb[0].mxu0
        %v1718 = vadd.f32 0.0, %v1717
        %v1719 = vpop.f32.mrb[0].mxu0
        %1720 = vmatprep.mubr.f32.mxu0 %v276
        %1721 = vmatmul.mubr.f32.gmra.mrb[0].mxu0 %v559
        %v1722 = vpop.f32.mrb[0].mxu0
        %v1723 = vadd.f32 0.0, %v1722
        %v1724 = vpop.f32.mrb[0].mxu0
        %1725 = vmatprep.mubr.f32.mxu0 %v277
        %1726 = vmatmul.mubr.f32.gmra.mrb[0].mxu0 %v501
        %v1727 = vpop.f32.mrb[0].mxu0
        %v1728 = vadd.f32 0.0, %v1727
        %v1729 = vpop.f32.mrb[0].mxu0
        %1730 = vmatprep.mubr.f32.mxu0 %v278
        %1731 = vmatmul.mubr.f32.gmra.mrb[0].mxu0 %v560
        %v1732 = vpop.f32.mrb[0].mxu0
        %v1733 = vadd.f32 0.0, %v1732
        %v1734 = vpop.f32.mrb[0].mxu0
        %1735 = vmatprep.mubr.f32.mxu0 %v279
        %1736 = vmatmul.mubr.f32.gmra.mrb[0].mxu0 %v504
        %v1737 = vpop.f32.mrb[0].mxu0
        %v1738 = vadd.f32 0.0, %v1737
        %v1739 = vpop.f32.mrb[0].mxu0
        %1740 = vmatprep.mubr.f32.mxu0 %v280
        %1741 = vmatmul.mubr.f32.gmra.mrb[0].mxu0 %v561
        %v1742 = vpop.f32.mrb[0].mxu0
        %v1743 = vadd.f32 0.0, %v1742
        %v1744 = vpop.f32.mrb[0].mxu0
        %1745 = vmatprep.mubr.f32.mxu0 %v281
        %1746 = vmatmul.mubr.f32.gmra.mrb[0].mxu0 %v507
        %v1747 = vpop.f32.mrb[0].mxu0
        %v1748 = vadd.f32 0.0, %v1747
        %v1749 = vpop.f32.mrb[0].mxu0
        %1750 = vmatprep.mubr.f32.mxu0 %v282
        %1751 = vmatmul.mubr.f32.gmra.mrb[0].mxu0 %v562
        %v1752 = vpop.f32.mrb[0].mxu0
        %v1753 = vadd.f32 0.0, %v1752
        %v1754 = vpop.f32.mrb[0].mxu0
        %1755 = vmatprep.mubr.f32.mxu0 %v283
        %1756 = vmatmul.mubr.f32.gmra.mrb[0].mxu0 %v510
        %v1757 = vpop.f32.mrb[0].mxu0
        %v1758 = vadd.f32 0.0, %v1757
        %v1759 = vpop.f32.mrb[0].mxu0
        %1760 = vmatprep.mubr.f32.mxu0 %v284
        %1761 = vmatmul.mubr.f32.gmra.mrb[0].mxu0 %v563
        %v1762 = vpop.f32.mrb[0].mxu0
        %v1763 = vadd.f32 0.0, %v1762
        %v1764 = vpop.f32.mrb[0].mxu0
        %1765 = vmatprep.mubr.f32.mxu0 %v285
        %1766 = vmatmul.mubr.f32.gmra.mrb[0].mxu0 %v513
        %v1767 = vpop.f32.mrb[0].mxu0
        %v1768 = vadd.f32 0.0, %v1767
        %v1769 = vpop.f32.mrb[0].mxu0
        %1770 = vmatprep.mubr.f32.mxu0 %v286
        %1771 = vmatmul.mubr.f32.gmra.mrb[0].mxu0 %v564
        %v1772 = vpop.f32.mrb[0].mxu0
        %v1773 = vadd.f32 0.0, %v1772
        %v1774 = vpop.f32.mrb[0].mxu0
        %1775 = vmatprep.mubr.f32.mxu0 %v287
        %1776 = vmatmul.mubr.f32.gmra.mrb[0].mxu0 %v516
        %v1777 = vpop.f32.mrb[0].mxu0
        %v1778 = vadd.f32 0.0, %v1777
        %v1779 = vpop.f32.mrb[0].mxu0
        %1780 = vdwg.mxu0
        %1781 = vmatprep.subr.mxu0 0.0
        %1782 = vmatpush1.msra.mxu0 %v420
        %1783 = vmatprep.subr.mxu0 0.0
        %1784 = vmatpush1.msra.mxu0 %v421
        %1785 = vmatprep.subr.mxu0 0.0
        %1786 = vmatpush1.msra.mxu0 %v422
        %1787 = vmatprep.subr.mxu0 0.0
        %1788 = vmatpush1.msra.mxu0 %v423
        %1789 = vmatprep.subr.mxu0 0.0
        %1790 = vmatpush1.msra.mxu0 %v424
        %1791 = vmatprep.subr.mxu0 0.0
        %1792 = vmatpush1.msra.mxu0 %v425
        %1793 = vmatprep.subr.mxu0 0.0
        %1794 = vmatpush1.msra.mxu0 %v426
        %1795 = vmatprep.subr.mxu0 0.0
        %1796 = vmatpush1.msra.mxu0 %v427
        %1797 = vmatprep.subr.mxu0 0.0
        %1798 = vmatpush1.msra.mxu0 %v428
        %1799 = vmatprep.subr.mxu0 0.0
        %1800 = vmatpush1.msra.mxu0 %v429
        %1801 = vmatprep.subr.mxu0 0.0
        %1802 = vmatpush1.msra.mxu0 %v430
        %1803 = vmatprep.subr.mxu0 0.0
        %1804 = vmatpush1.msra.mxu0 %v431
        %1805 = vmatprep.subr.mxu0 0.0
        %1806 = vmatpush1.msra.mxu0 %v432
        %1807 = vmatprep.subr.mxu0 0.0
        %1808 = vmatpush1.msra.mxu0 %v433
        %1809 = vmatprep.subr.mxu0 0.0
        %1810 = vmatpush1.msra.mxu0 %v434
        %1811 = vmatprep.subr.mxu0 0.0
        %1812 = vmatpush1.msra.mxu0 %v435
        %1813 = vmatprep.subr.mxu0 0.0
        %1814 = vmatpush1.msra.mxu0 0.0
        %1815 = vmatprep.subr.mxu0 0.0
        %1816 = vmatpush1.msra.mxu0 0.0
        %1817 = vmatprep.subr.mxu0 0.0
        %1818 = vmatpush1.msra.mxu0 0.0
        %1819 = vmatprep.subr.mxu0 0.0
        %1820 = vmatpush1.msra.mxu0 0.0
        %1821 = vmatprep.subr.mxu0 0.0
        %1822 = vmatpush1.msra.mxu0 0.0
        %1823 = vmatprep.subr.mxu0 0.0
        %1824 = vmatpush1.msra.mxu0 0.0
        %1825 = vmatprep.subr.mxu0 0.0
        %1826 = vmatpush1.msra.mxu0 0.0
        %1827 = vmatprep.subr.mxu0 0.0
        %1828 = vmatpush1.msra.mxu0 0.0
        %1829 = vmatprep.subr.mxu0 0.0
        %1830 = vmatpush1.msra.mxu0 0.0
        %1831 = vmatprep.subr.mxu0 0.0
        %1832 = vmatpush1.msra.mxu0 0.0
        %1833 = vmatprep.subr.mxu0 0.0
        %1834 = vmatpush1.msra.mxu0 0.0
        %1835 = vmatprep.subr.mxu0 0.0
        %1836 = vmatpush1.msra.mxu0 0.0
        %1837 = vmatprep.subr.mxu0 0.0
        %1838 = vmatpush1.msra.mxu0 0.0
        %1839 = vmatprep.subr.mxu0 0.0
        %1840 = vmatpush1.msra.mxu0 0.0
        %1841 = vmatprep.subr.mxu0 0.0
        %1842 = vmatpush1.msra.mxu0 0.0
        %1843 = vmatprep.subr.mxu0 0.0
        %1844 = vmatpush1.msra.mxu0 0.0
        %1845 = vmatprep.mubr.f32.mxu0 0.0
        %1846 = vmatmul.mubr.f32.gmra.mrb[0].mxu0 %v568
        %v1847 = vpop.f32.mrb[0].mxu0
        %v1848 = vpop.f32.mrb[0].mxu0
        %1849 = vmatprep.mubr.f32.mxu0 0.0
        %1850 = vmatmul.mubr.f32.gmra.mrb[0].mxu0 %v646
        %v1851 = vpop.f32.mrb[0].mxu0
        %v1852 = vpop.f32.mrb[0].mxu0
        %1853 = vmatprep.mubr.f32.mxu0 0.0
        %1854 = vmatmul.mubr.f32.gmra.mrb[0].mxu0 %v571
        %v1855 = vpop.f32.mrb[0].mxu0
        %v1856 = vadd.f32 %v1633, %v1855
        %v1857 = vpop.f32.mrb[0].mxu0
        %1858 = vmatprep.mubr.f32.mxu0 0.0
        %1859 = vmatmul.mubr.f32.gmra.mrb[0].mxu0 %v647
        %v1860 = vpop.f32.mrb[0].mxu0
        %v1861 = vadd.f32 %v1638, %v1860
        %v1862 = vpop.f32.mrb[0].mxu0
        %1863 = vmatprep.mubr.f32.mxu0 0.0
        %1864 = vmatmul.mubr.f32.gmra.mrb[0].mxu0 %v574
        %v1865 = vpop.f32.mrb[0].mxu0
        %v1866 = vadd.f32 %v1643, %v1865
        %v1867 = vpop.f32.mrb[0].mxu0
        %1868 = vmatprep.mubr.f32.mxu0 0.0
        %1869 = vmatmul.mubr.f32.gmra.mrb[0].mxu0 %v648
        %v1870 = vpop.f32.mrb[0].mxu0
        %v1871 = vadd.f32 %v1648, %v1870
        %v1872 = vpop.f32.mrb[0].mxu0
        %1873 = vmatprep.mubr.f32.mxu0 0.0
        %1874 = vmatmul.mubr.f32.gmra.mrb[0].mxu0 %v577
        %v1875 = vpop.f32.mrb[0].mxu0
        %v1876 = vadd.f32 %v1653, %v1875
        %v1877 = vpop.f32.mrb[0].mxu0
        %1878 = vmatprep.mubr.f32.mxu0 0.0
        %1879 = vmatmul.mubr.f32.gmra.mrb[0].mxu0 %v649
        %v1880 = vpop.f32.mrb[0].mxu0
        %v1881 = vadd.f32 %v1658, %v1880
        %v1882 = vpop.f32.mrb[0].mxu0
        %1883 = vmatprep.mubr.f32.mxu0 0.0
        %1884 = vmatmul.mubr.f32.gmra.mrb[0].mxu0 %v580
        %v1885 = vpop.f32.mrb[0].mxu0
        %v1886 = vadd.f32 %v1663, %v1885
        %v1887 = vpop.f32.mrb[0].mxu0
        %1888 = vmatprep.mubr.f32.mxu0 0.0
        %1889 = vmatmul.mubr.f32.gmra.mrb[0].mxu0 %v650
        %v1890 = vpop.f32.mrb[0].mxu0
        %v1891 = vadd.f32 %v1668, %v1890
        %v1892 = vpop.f32.mrb[0].mxu0
        %1893 = vmatprep.mubr.f32.mxu0 0.0
        %1894 = vmatmul.mubr.f32.gmra.mrb[0].mxu0 %v583
        %v1895 = vpop.f32.mrb[0].mxu0
        %v1896 = vadd.f32 %v1673, %v1895
        %v1897 = vpop.f32.mrb[0].mxu0
        %1898 = vmatprep.mubr.f32.mxu0 0.0
        %1899 = vmatmul.mubr.f32.gmra.mrb[0].mxu0 %v651
        %v1900 = vpop.f32.mrb[0].mxu0
        %v1901 = vadd.f32 %v1678, %v1900
        %v1902 = vpop.f32.mrb[0].mxu0
        %1903 = vmatprep.mubr.f32.mxu0 0.0
        %1904 = vmatmul.mubr.f32.gmra.mrb[0].mxu0 %v586
        %v1905 = vpop.f32.mrb[0].mxu0
        %v1906 = vadd.f32 %v1683, %v1905
        %v1907 = vpop.f32.mrb[0].mxu0
        %1908 = vmatprep.mubr.f32.mxu0 0.0
        %1909 = vmatmul.mubr.f32.gmra.mrb[0].mxu0 %v652
        %v1910 = vpop.f32.mrb[0].mxu0
        %v1911 = vadd.f32 %v1688, %v1910
        %v1912 = vpop.f32.mrb[0].mxu0
        %1913 = vmatprep.mubr.f32.mxu0 0.0
        %1914 = vmatmul.mubr.f32.gmra.mrb[0].mxu0 %v589
        %v1915 = vpop.f32.mrb[0].mxu0
        %v1916 = vadd.f32 %v1693, %v1915
        %v1917 = vpop.f32.mrb[0].mxu0
        %1918 = vmatprep.mubr.f32.mxu0 0.0
        %1919 = vmatmul.mubr.f32.gmra.mrb[0].mxu0 %v653
        %v1920 = vpop.f32.mrb[0].mxu0
        %v1921 = vadd.f32 %v1698, %v1920
        %v1922 = vpop.f32.mrb[0].mxu0
        %1923 = vmatprep.mubr.f32.mxu0 0.0
        %1924 = vmatmul.mubr.f32.gmra.mrb[0].mxu0 %v592
        %v1925 = vpop.f32.mrb[0].mxu0
        %v1926 = vadd.f32 %v1703, %v1925
        %v1927 = vpop.f32.mrb[0].mxu0
        %1928 = vmatprep.mubr.f32.mxu0 0.0
        %1929 = vmatmul.mubr.f32.gmra.mrb[0].mxu0 %v654
        %v1930 = vpop.f32.mrb[0].mxu0
        %v1931 = vadd.f32 %v1708, %v1930
        %v1932 = vpop.f32.mrb[0].mxu0
        %1933 = vmatprep.mubr.f32.mxu0 0.0
        %1934 = vmatmul.mubr.f32.gmra.mrb[0].mxu0 %v595
        %v1935 = vpop.f32.mrb[0].mxu0
        %v1936 = vadd.f32 %v1713, %v1935
        %v1937 = vpop.f32.mrb[0].mxu0
        %1938 = vmatprep.mubr.f32.mxu0 0.0
        %1939 = vmatmul.mubr.f32.gmra.mrb[0].mxu0 %v655
        %v1940 = vpop.f32.mrb[0].mxu0
        %v1941 = vadd.f32 %v1718, %v1940
        %v1942 = vpop.f32.mrb[0].mxu0
        %1943 = vmatprep.mubr.f32.mxu0 0.0
        %1944 = vmatmul.mubr.f32.gmra.mrb[0].mxu0 %v598
        %v1945 = vpop.f32.mrb[0].mxu0
        %v1946 = vadd.f32 %v1723, %v1945
        %v1947 = vpop.f32.mrb[0].mxu0
        %1948 = vmatprep.mubr.f32.mxu0 0.0
        %1949 = vmatmul.mubr.f32.gmra.mrb[0].mxu0 %v656
        %v1950 = vpop.f32.mrb[0].mxu0
        %v1951 = vadd.f32 %v1728, %v1950
        %v1952 = vpop.f32.mrb[0].mxu0
        %1953 = vmatprep.mubr.f32.mxu0 0.0
        %1954 = vmatmul.mubr.f32.gmra.mrb[0].mxu0 %v601
        %v1955 = vpop.f32.mrb[0].mxu0
        %v1956 = vadd.f32 %v1733, %v1955
        %v1957 = vpop.f32.mrb[0].mxu0
        %1958 = vmatprep.mubr.f32.mxu0 0.0
        %1959 = vmatmul.mubr.f32.gmra.mrb[0].mxu0 %v657
        %v1960 = vpop.f32.mrb[0].mxu0
        %v1961 = vadd.f32 %v1738, %v1960
        %v1962 = vpop.f32.mrb[0].mxu0
        %1963 = vmatprep.mubr.f32.mxu0 0.0
        %1964 = vmatmul.mubr.f32.gmra.mrb[0].mxu0 %v604
        %v1965 = vpop.f32.mrb[0].mxu0
        %v1966 = vadd.f32 %v1743, %v1965
        %v1967 = vpop.f32.mrb[0].mxu0
        %1968 = vmatprep.mubr.f32.mxu0 0.0
        %1969 = vmatmul.mubr.f32.gmra.mrb[0].mxu0 %v658
        %v1970 = vpop.f32.mrb[0].mxu0
        %v1971 = vadd.f32 %v1748, %v1970
        %v1972 = vpop.f32.mrb[0].mxu0
        %1973 = vmatprep.mubr.f32.mxu0 0.0
        %1974 = vmatmul.mubr.f32.gmra.mrb[0].mxu0 %v607
        %v1975 = vpop.f32.mrb[0].mxu0
        %v1976 = vadd.f32 %v1753, %v1975
        %v1977 = vpop.f32.mrb[0].mxu0
        %1978 = vmatprep.mubr.f32.mxu0 0.0
        %1979 = vmatmul.mubr.f32.gmra.mrb[0].mxu0 %v659
        %v1980 = vpop.f32.mrb[0].mxu0
        %v1981 = vadd.f32 %v1758, %v1980
        %v1982 = vpop.f32.mrb[0].mxu0
        %1983 = vmatprep.mubr.f32.mxu0 0.0
        %1984 = vmatmul.mubr.f32.gmra.mrb[0].mxu0 %v610
        %v1985 = vpop.f32.mrb[0].mxu0
        %v1986 = vadd.f32 %v1763, %v1985
        %v1987 = vpop.f32.mrb[0].mxu0
        %1988 = vmatprep.mubr.f32.mxu0 0.0
        %1989 = vmatmul.mubr.f32.gmra.mrb[0].mxu0 %v660
        %v1990 = vpop.f32.mrb[0].mxu0
        %v1991 = vadd.f32 %v1768, %v1990
        %v1992 = vpop.f32.mrb[0].mxu0
        %1993 = vmatprep.mubr.f32.mxu0 0.0
        %1994 = vmatmul.mubr.f32.gmra.mrb[0].mxu0 %v613
        %v1995 = vpop.f32.mrb[0].mxu0
        %v1996 = vadd.f32 %v1773, %v1995
        %v1997 = vpop.f32.mrb[0].mxu0
        %1998 = vmatprep.mubr.f32.mxu0 0.0
        %1999 = vmatmul.mubr.f32.gmra.mrb[0].mxu0 %v661
        %v2000 = vpop.f32.mrb[0].mxu0
        %v2001 = vadd.f32 %v1778, %v2000
        %v2002 = vpop.f32.mrb[0].mxu0
        %2003 = vdwg.mxu0
        %v2004 = vadd.f32 %v1400, 0.0
        %v2005 = vadd.f32 %v1405, 0.0
        %v2006 = vadd.f32 %v1410, %v952
        %v2007 = vadd.f32 %v1415, %v957
        %v2008 = vadd.f32 %v1420, %v962
        %v2009 = vadd.f32 %v1425, %v967
        %v2010 = vadd.f32 %v1430, %v972
        %v2011 = vadd.f32 %v1435, %v977
        %v2012 = vadd.f32 %v1440, %v982
        %v2013 = vadd.f32 %v1445, %v987
        %v2014 = vadd.f32 %v1450, %v992
        %v2015 = vadd.f32 %v1455, %v997
        %v2016 = vadd.f32 %v1460, %v1002
        %v2017 = vadd.f32 %v1465, %v1007
        %v2018 = vadd.f32 %v1470, %v1012
        %v2019 = vadd.f32 %v1475, %v1017
        %v2020 = vadd.f32 %v1480, %v1022
        %v2021 = vadd.f32 %v1485, %v1027
        %v2022 = vadd.f32 %v1490, %v1032
        %v2023 = vadd.f32 %v1495, %v1037
        %v2024 = vadd.f32 %v1500, %v1042
        %v2025 = vadd.f32 %v1505, %v1047
        %v2026 = vadd.f32 %v1510, %v1052
        %v2027 = vadd.f32 %v1515, %v1057
        %v2028 = vadd.f32 %v1520, %v1062
        %v2029 = vadd.f32 %v1525, %v1067
        %v2030 = vadd.f32 %v1530, %v1072
        %v2031 = vadd.f32 %v1535, %v1077
        %v2032 = vadd.f32 %v1540, %v1082
        %v2033 = vadd.f32 %v1545, %v1087
        %v2034 = vadd.f32 %v1550, %v1092
        %v2035 = vadd.f32 %v1555, %v1097
        %v2036 = vadd.f32 %v2004, %v1856
        %v2037 = vadd.f32 %v2005, %v1861
        %v2038 = vadd.f32 %v2006, %v1866
        %v2039 = vadd.f32 %v2007, %v1871
        %v2040 = vadd.f32 %v2008, %v1876
        %v2041 = vadd.f32 %v2009, %v1881
        %v2042 = vadd.f32 %v2010, %v1886
        %v2043 = vadd.f32 %v2011, %v1891
        %v2044 = vadd.f32 %v2012, %v1896
        %v2045 = vadd.f32 %v2013, %v1901
        %v2046 = vadd.f32 %v2014, %v1906
        %v2047 = vadd.f32 %v2015, %v1911
        %v2048 = vadd.f32 %v2016, %v1916
        %v2049 = vadd.f32 %v2017, %v1921
        %v2050 = vadd.f32 %v2018, %v1926
        %v2051 = vadd.f32 %v2019, %v1931
        %v2052 = vadd.f32 %v2020, %v1936
        %v2053 = vadd.f32 %v2021, %v1941
        %v2054 = vadd.f32 %v2022, %v1946
        %v2055 = vadd.f32 %v2023, %v1951
        %v2056 = vadd.f32 %v2024, %v1956
        %v2057 = vadd.f32 %v2025, %v1961
        %v2058 = vadd.f32 %v2026, %v1966
        %v2059 = vadd.f32 %v2027, %v1971
        %v2060 = vadd.f32 %v2028, %v1976
        %v2061 = vadd.f32 %v2029, %v1981
        %v2062 = vadd.f32 %v2030, %v1986
        %v2063 = vadd.f32 %v2031, %v1991
        %v2064 = vadd.f32 %v2032, %v1996
        %v2065 = vadd.f32 %v2033, %v2001
        %v2066 = vadd.f32 %v2034, 0.0
        %v2067 = vadd.f32 %v2035, 0.0
        %v2069 = vlaneseq
        %v2070 = vshrl.u32 %v2069, 7
        %v2071 = vsub.s32 0, %v2070
        %v2072 = vrot.slane %v288, %v2071
        %v2074 = vmul.f32 %v2036, %v2072
        %v2075 = vmul.f32 %v2037, %v2072
        %v2076 = vmul.f32 %v2038, %v2072
        %v2077 = vmul.f32 %v2039, %v2072
        %v2078 = vmul.f32 %v2040, %v2072
        %v2079 = vmul.f32 %v2041, %v2072
        %v2080 = vmul.f32 %v2042, %v2072
        %v2081 = vmul.f32 %v2043, %v2072
        %v2082 = vmul.f32 %v2044, %v2072
        %v2083 = vmul.f32 %v2045, %v2072
        %v2084 = vmul.f32 %v2046, %v2072
        %v2085 = vmul.f32 %v2047, %v2072
        %v2086 = vmul.f32 %v2048, %v2072
        %v2087 = vmul.f32 %v2049, %v2072
        %v2088 = vmul.f32 %v2050, %v2072
        %v2089 = vmul.f32 %v2051, %v2072
        %v2090 = vmul.f32 %v2052, %v2072
        %v2091 = vmul.f32 %v2053, %v2072
        %v2092 = vmul.f32 %v2054, %v2072
        %v2093 = vmul.f32 %v2055, %v2072
        %v2094 = vmul.f32 %v2056, %v2072
        %v2095 = vmul.f32 %v2057, %v2072
        %v2096 = vmul.f32 %v2058, %v2072
        %v2097 = vmul.f32 %v2059, %v2072
        %v2098 = vmul.f32 %v2060, %v2072
        %v2099 = vmul.f32 %v2061, %v2072
        %v2100 = vmul.f32 %v2062, %v2072
        %v2101 = vmul.f32 %v2063, %v2072
        %v2102 = vmul.f32 %v2064, %v2072
        %v2103 = vmul.f32 %v2065, %v2072
        %v2104 = vmul.f32 %v2066, %v2072
        %v2105 = vmul.f32 %v2067, %v2072
        %v2107 = vlaneseq
        %v2108 = vshrl.u32 %v2107, 7
        %v2109 = vsub.s32 0, %v2108
        %v2110 = vrot.slane %v289, %v2109
        %v2112 = vadd.f32 %v2074, %v2110
        %v2113 = vadd.f32 %v2075, %v2110
        %v2114 = vadd.f32 %v2076, %v2110
        %v2115 = vadd.f32 %v2077, %v2110
        %v2116 = vadd.f32 %v2078, %v2110
        %v2117 = vadd.f32 %v2079, %v2110
        %v2118 = vadd.f32 %v2080, %v2110
        %v2119 = vadd.f32 %v2081, %v2110
        %v2120 = vadd.f32 %v2082, %v2110
        %v2121 = vadd.f32 %v2083, %v2110
        %v2122 = vadd.f32 %v2084, %v2110
        %v2123 = vadd.f32 %v2085, %v2110
        %v2124 = vadd.f32 %v2086, %v2110
        %v2125 = vadd.f32 %v2087, %v2110
        %v2126 = vadd.f32 %v2088, %v2110
        %v2127 = vadd.f32 %v2089, %v2110
        %v2128 = vadd.f32 %v2090, %v2110
        %v2129 = vadd.f32 %v2091, %v2110
        %v2130 = vadd.f32 %v2092, %v2110
        %v2131 = vadd.f32 %v2093, %v2110
        %v2132 = vadd.f32 %v2094, %v2110
        %v2133 = vadd.f32 %v2095, %v2110
        %v2134 = vadd.f32 %v2096, %v2110
        %v2135 = vadd.f32 %v2097, %v2110
        %v2136 = vadd.f32 %v2098, %v2110
        %v2137 = vadd.f32 %v2099, %v2110
        %v2138 = vadd.f32 %v2100, %v2110
        %v2139 = vadd.f32 %v2101, %v2110
        %v2140 = vadd.f32 %v2102, %v2110
        %v2141 = vadd.f32 %v2103, %v2110
        %v2142 = vadd.f32 %v2104, %v2110
        %v2143 = vadd.f32 %v2105, %v2110
        %v2144 = vmax.f32 %v2112, 0.0
        %v2145 = vmax.f32 %v2113, 0.0
        %v2146 = vmax.f32 %v2114, 0.0
        %v2147 = vmax.f32 %v2115, 0.0
        %v2148 = vmax.f32 %v2116, 0.0
        %v2149 = vmax.f32 %v2117, 0.0
        %v2150 = vmax.f32 %v2118, 0.0
        %v2151 = vmax.f32 %v2119, 0.0
        %v2152 = vmax.f32 %v2120, 0.0
        %v2153 = vmax.f32 %v2121, 0.0
        %v2154 = vmax.f32 %v2122, 0.0
        %v2155 = vmax.f32 %v2123, 0.0
        %v2156 = vmax.f32 %v2124, 0.0
        %v2157 = vmax.f32 %v2125, 0.0
        %v2158 = vmax.f32 %v2126, 0.0
        %v2159 = vmax.f32 %v2127, 0.0
        %v2160 = vmax.f32 %v2128, 0.0
        %v2161 = vmax.f32 %v2129, 0.0
        %v2162 = vmax.f32 %v2130, 0.0
        %v2163 = vmax.f32 %v2131, 0.0
        %v2164 = vmax.f32 %v2132, 0.0
        %v2165 = vmax.f32 %v2133, 0.0
        %v2166 = vmax.f32 %v2134, 0.0
        %v2167 = vmax.f32 %v2135, 0.0
        %v2168 = vmax.f32 %v2136, 0.0
        %v2169 = vmax.f32 %v2137, 0.0
        %v2170 = vmax.f32 %v2138, 0.0
        %v2171 = vmax.f32 %v2139, 0.0
        %v2172 = vmax.f32 %v2140, 0.0
        %v2173 = vmax.f32 %v2141, 0.0
        %v2174 = vmax.f32 %v2142, 0.0
        %v2175 = vmax.f32 %v2143, 0.0
        %v2176 = vadd.f32 %v256, %v2144
        %v2177 = vadd.f32 %v257, %v2145
        %v2178 = vadd.f32 %v258, %v2146
        %v2179 = vadd.f32 %v259, %v2147
        %v2180 = vadd.f32 %v260, %v2148
        %v2181 = vadd.f32 %v261, %v2149
        %v2182 = vadd.f32 %v262, %v2150
        %v2183 = vadd.f32 %v263, %v2151
        %v2184 = vadd.f32 %v264, %v2152
        %v2185 = vadd.f32 %v265, %v2153
        %v2186 = vadd.f32 %v266, %v2154
        %v2187 = vadd.f32 %v267, %v2155
        %v2188 = vadd.f32 %v268, %v2156
        %v2189 = vadd.f32 %v269, %v2157
        %v2190 = vadd.f32 %v270, %v2158
        %v2191 = vadd.f32 %v271, %v2159
        %v2192 = vadd.f32 %v272, %v2160
        %v2193 = vadd.f32 %v273, %v2161
        %v2194 = vadd.f32 %v274, %v2162
        %v2195 = vadd.f32 %v275, %v2163
        %v2196 = vadd.f32 %v276, %v2164
        %v2197 = vadd.f32 %v277, %v2165
        %v2198 = vadd.f32 %v278, %v2166
        %v2199 = vadd.f32 %v279, %v2167
        %v2200 = vadd.f32 %v280, %v2168
        %v2201 = vadd.f32 %v281, %v2169
        %v2202 = vadd.f32 %v282, %v2170
        %v2203 = vadd.f32 %v283, %v2171
        %v2204 = vadd.f32 %v284, %v2172
        %v2205 = vadd.f32 %v285, %v2173
        %v2206 = vadd.f32 %v286, %v2174
        %v2207 = vadd.f32 %v287, %v2175
        %v2240 = vrot.slane %v2176, 7
        %v2241 = vrot.slane %v2177, 7
        %v2242 = vsel %vm468, %v2240, %v2241
        %v2243 = vrot.slane %v2178, 7
        %v2244 = vrot.slane %v2179, 7
        %v2245 = vsel %vm468, %v2243, %v2244
        %v2246 = vrot.slane %v2180, 7
        %v2247 = vrot.slane %v2181, 7
        %v2248 = vsel %vm468, %v2246, %v2247
        %v2249 = vrot.slane %v2182, 7
        %v2250 = vrot.slane %v2183, 7
        %v2251 = vsel %vm468, %v2249, %v2250
        %v2252 = vrot.slane %v2184, 7
        %v2253 = vrot.slane %v2185, 7
        %v2254 = vsel %vm468, %v2252, %v2253
        %v2255 = vrot.slane %v2186, 7
        %v2256 = vrot.slane %v2187, 7
        %v2257 = vsel %vm468, %v2255, %v2256
        %v2258 = vrot.slane %v2188, 7
        %v2259 = vrot.slane %v2189, 7
        %v2260 = vsel %vm468, %v2258, %v2259
        %v2261 = vrot.slane %v2190, 7
        %v2262 = vrot.slane %v2191, 7
        %v2263 = vsel %vm468, %v2261, %v2262
        %v2264 = vrot.slane %v2192, 7
        %v2265 = vrot.slane %v2193, 7
        %v2266 = vsel %vm468, %v2264, %v2265
        %v2267 = vrot.slane %v2194, 7
        %v2268 = vrot.slane %v2195, 7
        %v2269 = vsel %vm468, %v2267, %v2268
        %v2270 = vrot.slane %v2196, 7
        %v2271 = vrot.slane %v2197, 7
        %v2272 = vsel %vm468, %v2270, %v2271
        %v2273 = vrot.slane %v2198, 7
        %v2274 = vrot.slane %v2199, 7
        %v2275 = vsel %vm468, %v2273, %v2274
        %v2276 = vrot.slane %v2200, 7
        %v2277 = vrot.slane %v2201, 7
        %v2278 = vsel %vm468, %v2276, %v2277
        %v2279 = vrot.slane %v2202, 7
        %v2280 = vrot.slane %v2203, 7
        %v2281 = vsel %vm468, %v2279, %v2280
        %v2282 = vrot.slane %v2204, 7
        %v2283 = vrot.slane %v2205, 7
        %v2284 = vsel %vm468, %v2282, %v2283
        %v2285 = vrot.slane %v2206, 7
        %v2286 = vrot.slane %v2207, 7
        %v2287 = vsel %vm468, %v2285, %v2286
        %v2320 = vsel %vm468, 0.0, %v2240
        %v2321 = vsel %vm468, 0.0, %v2243
        %v2322 = vsel %vm468, 0.0, %v2246
        %v2323 = vsel %vm468, 0.0, %v2249
        %v2324 = vsel %vm468, 0.0, %v2252
        %v2325 = vsel %vm468, 0.0, %v2255
        %v2326 = vsel %vm468, 0.0, %v2258
        %v2327 = vsel %vm468, 0.0, %v2261
        %v2328 = vsel %vm468, 0.0, %v2264
        %v2329 = vsel %vm468, 0.0, %v2267
        %v2330 = vsel %vm468, 0.0, %v2270
        %v2331 = vsel %vm468, 0.0, %v2273
        %v2332 = vsel %vm468, 0.0, %v2276
        %v2333 = vsel %vm468, 0.0, %v2279
        %v2334 = vsel %vm468, 0.0, %v2282
        %v2335 = vsel %vm468, 0.0, %v2285
        %v2336 = vrot.slane %v2176, 1
        %v2337 = vrot.slane %v2177, 1
        %v2338 = vsel %vm565, %v2336, %v2337
        %v2339 = vrot.slane %v2178, 1
        %v2340 = vrot.slane %v2179, 1
        %v2341 = vsel %vm565, %v2339, %v2340
        %v2342 = vrot.slane %v2180, 1
        %v2343 = vrot.slane %v2181, 1
        %v2344 = vsel %vm565, %v2342, %v2343
        %v2345 = vrot.slane %v2182, 1
        %v2346 = vrot.slane %v2183, 1
        %v2347 = vsel %vm565, %v2345, %v2346
        %v2348 = vrot.slane %v2184, 1
        %v2349 = vrot.slane %v2185, 1
        %v2350 = vsel %vm565, %v2348, %v2349
        %v2351 = vrot.slane %v2186, 1
        %v2352 = vrot.slane %v2187, 1
        %v2353 = vsel %vm565, %v2351, %v2352
        %v2354 = vrot.slane %v2188, 1
        %v2355 = vrot.slane %v2189, 1
        %v2356 = vsel %vm565, %v2354, %v2355
        %v2357 = vrot.slane %v2190, 1
        %v2358 = vrot.slane %v2191, 1
        %v2359 = vsel %vm565, %v2357, %v2358
        %v2360 = vrot.slane %v2192, 1
        %v2361 = vrot.slane %v2193, 1
        %v2362 = vsel %vm565, %v2360, %v2361
        %v2363 = vrot.slane %v2194, 1
        %v2364 = vrot.slane %v2195, 1
        %v2365 = vsel %vm565, %v2363, %v2364
        %v2366 = vrot.slane %v2196, 1
        %v2367 = vrot.slane %v2197, 1
        %v2368 = vsel %vm565, %v2366, %v2367
        %v2369 = vrot.slane %v2198, 1
        %v2370 = vrot.slane %v2199, 1
        %v2371 = vsel %vm565, %v2369, %v2370
        %v2372 = vrot.slane %v2200, 1
        %v2373 = vrot.slane %v2201, 1
        %v2374 = vsel %vm565, %v2372, %v2373
        %v2375 = vrot.slane %v2202, 1
        %v2376 = vrot.slane %v2203, 1
        %v2377 = vsel %vm565, %v2375, %v2376
        %v2378 = vrot.slane %v2204, 1
        %v2379 = vrot.slane %v2205, 1
        %v2380 = vsel %vm565, %v2378, %v2379
        %v2381 = vrot.slane %v2206, 1
        %v2382 = vrot.slane %v2207, 1
        %v2383 = vsel %vm565, %v2381, %v2382
        %v2416 = vsel %vm565, %v2337, 0.0
        %v2417 = vsel %vm565, %v2340, 0.0
        %v2418 = vsel %vm565, %v2343, 0.0
        %v2419 = vsel %vm565, %v2346, 0.0
        %v2420 = vsel %vm565, %v2349, 0.0
        %v2421 = vsel %vm565, %v2352, 0.0
        %v2422 = vsel %vm565, %v2355, 0.0
        %v2423 = vsel %vm565, %v2358, 0.0
        %v2424 = vsel %vm565, %v2361, 0.0
        %v2425 = vsel %vm565, %v2364, 0.0
        %v2426 = vsel %vm565, %v2367, 0.0
        %v2427 = vsel %vm565, %v2370, 0.0
        %v2428 = vsel %vm565, %v2373, 0.0
        %v2429 = vsel %vm565, %v2376, 0.0
        %v2430 = vsel %vm565, %v2379, 0.0
        %v2431 = vsel %vm565, %v2382, 0.0
        %2432 = vmatprep.subr.mxu0 0.0
        %2433 = vmatpush1.msra.mxu0 %v290
        %2434 = vmatprep.subr.mxu0 0.0
        %2435 = vmatpush1.msra.mxu0 %v291
        %2436 = vmatprep.subr.mxu0 0.0
        %2437 = vmatpush1.msra.mxu0 %v292
        %2438 = vmatprep.subr.mxu0 0.0
        %2439 = vmatpush1.msra.mxu0 %v293
        %2440 = vmatprep.subr.mxu0 0.0
        %2441 = vmatpush1.msra.mxu0 %v294
        %2442 = vmatprep.subr.mxu0 0.0
        %2443 = vmatpush1.msra.mxu0 %v295
        %2444 = vmatprep.subr.mxu0 0.0
        %2445 = vmatpush1.msra.mxu0 %v296
        %2446 = vmatprep.subr.mxu0 0.0
        %2447 = vmatpush1.msra.mxu0 %v297
        %2448 = vmatprep.subr.mxu0 0.0
        %2449 = vmatpush1.msra.mxu0 %v298
        %2450 = vmatprep.subr.mxu0 0.0
        %2451 = vmatpush1.msra.mxu0 %v299
        %2452 = vmatprep.subr.mxu0 0.0
        %2453 = vmatpush1.msra.mxu0 %v300
        %2454 = vmatprep.subr.mxu0 0.0
        %2455 = vmatpush1.msra.mxu0 %v301
        %2456 = vmatprep.subr.mxu0 0.0
        %2457 = vmatpush1.msra.mxu0 %v302
        %2458 = vmatprep.subr.mxu0 0.0
        %2459 = vmatpush1.msra.mxu0 %v303
        %2460 = vmatprep.subr.mxu0 0.0
        %2461 = vmatpush1.msra.mxu0 %v304
        %2462 = vmatprep.subr.mxu0 0.0
        %2463 = vmatpush1.msra.mxu0 %v305
        %2464 = vmatprep.subr.mxu0 0.0
        %2465 = vmatpush1.msra.mxu0 %v306
        %2466 = vmatprep.subr.mxu0 0.0
        %2467 = vmatpush1.msra.mxu0 %v307
        %2468 = vmatprep.subr.mxu0 0.0
        %2469 = vmatpush1.msra.mxu0 %v308
        %2470 = vmatprep.subr.mxu0 0.0
        %2471 = vmatpush1.msra.mxu0 %v309
        %2472 = vmatprep.subr.mxu0 0.0
        %2473 = vmatpush1.msra.mxu0 %v310
        %2474 = vmatprep.subr.mxu0 0.0
        %2475 = vmatpush1.msra.mxu0 %v311
        %2476 = vmatprep.subr.mxu0 0.0
        %2477 = vmatpush1.msra.mxu0 %v312
        %2478 = vmatprep.subr.mxu0 0.0
        %2479 = vmatpush1.msra.mxu0 %v313
        %2480 = vmatprep.subr.mxu0 0.0
        %2481 = vmatpush1.msra.mxu0 %v314
        %2482 = vmatprep.subr.mxu0 0.0
        %2483 = vmatpush1.msra.mxu0 %v315
        %2484 = vmatprep.subr.mxu0 0.0
        %2485 = vmatpush1.msra.mxu0 %v316
        %2486 = vmatprep.subr.mxu0 0.0
        %2487 = vmatpush1.msra.mxu0 %v317
        %2488 = vmatprep.subr.mxu0 0.0
        %2489 = vmatpush1.msra.mxu0 %v318
        %2490 = vmatprep.subr.mxu0 0.0
        %2491 = vmatpush1.msra.mxu0 %v319
        %2492 = vmatprep.subr.mxu0 0.0
        %2493 = vmatpush1.msra.mxu0 %v320
        %2494 = vmatprep.subr.mxu0 0.0
        %2495 = vmatpush1.msra.mxu0 %v321
        %2496 = vmatprep.mubr.f32.mxu0 %v2176
        %2497 = vmatmul.mubr.f32.gmra.mrb[0].mxu0 %v2320
        %v2498 = vpop.f32.mrb[0].mxu0
        %v2499 = vadd.f32 0.0, %v2498
        %v2500 = vpop.f32.mrb[0].mxu0
        %2501 = vmatprep.mubr.f32.mxu0 %v2177
        %2502 = vmatmul.mubr.f32.gmra.mrb[0].mxu0 %v2242
        %v2503 = vpop.f32.mrb[0].mxu0
        %v2504 = vadd.f32 0.0, %v2503
        %v2505 = vpop.f32.mrb[0].mxu0
        %2506 = vmatprep.mubr.f32.mxu0 %v2178
        %2507 = vmatmul.mubr.f32.gmra.mrb[0].mxu0 %v2321
        %v2508 = vpop.f32.mrb[0].mxu0
        %v2509 = vadd.f32 0.0, %v2508
        %v2510 = vpop.f32.mrb[0].mxu0
        %2511 = vmatprep.mubr.f32.mxu0 %v2179
        %2512 = vmatmul.mubr.f32.gmra.mrb[0].mxu0 %v2245
        %v2513 = vpop.f32.mrb[0].mxu0
        %v2514 = vadd.f32 0.0, %v2513
        %v2515 = vpop.f32.mrb[0].mxu0
        %2516 = vmatprep.mubr.f32.mxu0 %v2180
        %2517 = vmatmul.mubr.f32.gmra.mrb[0].mxu0 %v2322
        %v2518 = vpop.f32.mrb[0].mxu0
        %v2519 = vadd.f32 0.0, %v2518
        %v2520 = vpop.f32.mrb[0].mxu0
        %2521 = vmatprep.mubr.f32.mxu0 %v2181
        %2522 = vmatmul.mubr.f32.gmra.mrb[0].mxu0 %v2248
        %v2523 = vpop.f32.mrb[0].mxu0
        %v2524 = vadd.f32 0.0, %v2523
        %v2525 = vpop.f32.mrb[0].mxu0
        %2526 = vmatprep.mubr.f32.mxu0 %v2182
        %2527 = vmatmul.mubr.f32.gmra.mrb[0].mxu0 %v2323
        %v2528 = vpop.f32.mrb[0].mxu0
        %v2529 = vadd.f32 0.0, %v2528
        %v2530 = vpop.f32.mrb[0].mxu0
        %2531 = vmatprep.mubr.f32.mxu0 %v2183
        %2532 = vmatmul.mubr.f32.gmra.mrb[0].mxu0 %v2251
        %v2533 = vpop.f32.mrb[0].mxu0
        %v2534 = vadd.f32 0.0, %v2533
        %v2535 = vpop.f32.mrb[0].mxu0
        %2536 = vmatprep.mubr.f32.mxu0 %v2184
        %2537 = vmatmul.mubr.f32.gmra.mrb[0].mxu0 %v2324
        %v2538 = vpop.f32.mrb[0].mxu0
        %v2539 = vadd.f32 0.0, %v2538
        %v2540 = vpop.f32.mrb[0].mxu0
        %2541 = vmatprep.mubr.f32.mxu0 %v2185
        %2542 = vmatmul.mubr.f32.gmra.mrb[0].mxu0 %v2254
        %v2543 = vpop.f32.mrb[0].mxu0
        %v2544 = vadd.f32 0.0, %v2543
        %v2545 = vpop.f32.mrb[0].mxu0
        %2546 = vmatprep.mubr.f32.mxu0 %v2186
        %2547 = vmatmul.mubr.f32.gmra.mrb[0].mxu0 %v2325
        %v2548 = vpop.f32.mrb[0].mxu0
        %v2549 = vadd.f32 0.0, %v2548
        %v2550 = vpop.f32.mrb[0].mxu0
        %2551 = vmatprep.mubr.f32.mxu0 %v2187
        %2552 = vmatmul.mubr.f32.gmra.mrb[0].mxu0 %v2257
        %v2553 = vpop.f32.mrb[0].mxu0
        %v2554 = vadd.f32 0.0, %v2553
        %v2555 = vpop.f32.mrb[0].mxu0
        %2556 = vmatprep.mubr.f32.mxu0 %v2188
        %2557 = vmatmul.mubr.f32.gmra.mrb[0].mxu0 %v2326
        %v2558 = vpop.f32.mrb[0].mxu0
        %v2559 = vadd.f32 0.0, %v2558
        %v2560 = vpop.f32.mrb[0].mxu0
        %2561 = vmatprep.mubr.f32.mxu0 %v2189
        %2562 = vmatmul.mubr.f32.gmra.mrb[0].mxu0 %v2260
        %v2563 = vpop.f32.mrb[0].mxu0
        %v2564 = vadd.f32 0.0, %v2563
        %v2565 = vpop.f32.mrb[0].mxu0
        %2566 = vmatprep.mubr.f32.mxu0 %v2190
        %2567 = vmatmul.mubr.f32.gmra.mrb[0].mxu0 %v2327
        %v2568 = vpop.f32.mrb[0].mxu0
        %v2569 = vadd.f32 0.0, %v2568
        %v2570 = vpop.f32.mrb[0].mxu0
        %2571 = vmatprep.mubr.f32.mxu0 %v2191
        %2572 = vmatmul.mubr.f32.gmra.mrb[0].mxu0 %v2263
        %v2573 = vpop.f32.mrb[0].mxu0
        %v2574 = vadd.f32 0.0, %v2573
        %v2575 = vpop.f32.mrb[0].mxu0
        %2576 = vmatprep.mubr.f32.mxu0 %v2192
        %2577 = vmatmul.mubr.f32.gmra.mrb[0].mxu0 %v2328
        %v2578 = vpop.f32.mrb[0].mxu0
        %v2579 = vadd.f32 0.0, %v2578
        %v2580 = vpop.f32.mrb[0].mxu0
        %2581 = vmatprep.mubr.f32.mxu0 %v2193
        %2582 = vmatmul.mubr.f32.gmra.mrb[0].mxu0 %v2266
        %v2583 = vpop.f32.mrb[0].mxu0
        %v2584 = vadd.f32 0.0, %v2583
        %v2585 = vpop.f32.mrb[0].mxu0
        %2586 = vmatprep.mubr.f32.mxu0 %v2194
        %2587 = vmatmul.mubr.f32.gmra.mrb[0].mxu0 %v2329
        %v2588 = vpop.f32.mrb[0].mxu0
        %v2589 = vadd.f32 0.0, %v2588
        %v2590 = vpop.f32.mrb[0].mxu0
        %2591 = vmatprep.mubr.f32.mxu0 %v2195
        %2592 = vmatmul.mubr.f32.gmra.mrb[0].mxu0 %v2269
        %v2593 = vpop.f32.mrb[0].mxu0
        %v2594 = vadd.f32 0.0, %v2593
        %v2595 = vpop.f32.mrb[0].mxu0
        %2596 = vmatprep.mubr.f32.mxu0 %v2196
        %2597 = vmatmul.mubr.f32.gmra.mrb[0].mxu0 %v2330
        %v2598 = vpop.f32.mrb[0].mxu0
        %v2599 = vadd.f32 0.0, %v2598
        %v2600 = vpop.f32.mrb[0].mxu0
        %2601 = vmatprep.mubr.f32.mxu0 %v2197
        %2602 = vmatmul.mubr.f32.gmra.mrb[0].mxu0 %v2272
        %v2603 = vpop.f32.mrb[0].mxu0
        %v2604 = vadd.f32 0.0, %v2603
        %v2605 = vpop.f32.mrb[0].mxu0
        %2606 = vmatprep.mubr.f32.mxu0 %v2198
        %2607 = vmatmul.mubr.f32.gmra.mrb[0].mxu0 %v2331
        %v2608 = vpop.f32.mrb[0].mxu0
        %v2609 = vadd.f32 0.0, %v2608
        %v2610 = vpop.f32.mrb[0].mxu0
        %2611 = vmatprep.mubr.f32.mxu0 %v2199
        %2612 = vmatmul.mubr.f32.gmra.mrb[0].mxu0 %v2275
        %v2613 = vpop.f32.mrb[0].mxu0
        %v2614 = vadd.f32 0.0, %v2613
        %v2615 = vpop.f32.mrb[0].mxu0
        %2616 = vmatprep.mubr.f32.mxu0 %v2200
        %2617 = vmatmul.mubr.f32.gmra.mrb[0].mxu0 %v2332
        %v2618 = vpop.f32.mrb[0].mxu0
        %v2619 = vadd.f32 0.0, %v2618
        %v2620 = vpop.f32.mrb[0].mxu0
        %2621 = vmatprep.mubr.f32.mxu0 %v2201
        %2622 = vmatmul.mubr.f32.gmra.mrb[0].mxu0 %v2278
        %v2623 = vpop.f32.mrb[0].mxu0
        %v2624 = vadd.f32 0.0, %v2623
        %v2625 = vpop.f32.mrb[0].mxu0
        %2626 = vmatprep.mubr.f32.mxu0 %v2202
        %2627 = vmatmul.mubr.f32.gmra.mrb[0].mxu0 %v2333
        %v2628 = vpop.f32.mrb[0].mxu0
        %v2629 = vadd.f32 0.0, %v2628
        %v2630 = vpop.f32.mrb[0].mxu0
        %2631 = vmatprep.mubr.f32.mxu0 %v2203
        %2632 = vmatmul.mubr.f32.gmra.mrb[0].mxu0 %v2281
        %v2633 = vpop.f32.mrb[0].mxu0
        %v2634 = vadd.f32 0.0, %v2633
        %v2635 = vpop.f32.mrb[0].mxu0
        %2636 = vmatprep.mubr.f32.mxu0 %v2204
        %2637 = vmatmul.mubr.f32.gmra.mrb[0].mxu0 %v2334
        %v2638 = vpop.f32.mrb[0].mxu0
        %v2639 = vadd.f32 0.0, %v2638
        %v2640 = vpop.f32.mrb[0].mxu0
        %2641 = vmatprep.mubr.f32.mxu0 %v2205
        %2642 = vmatmul.mubr.f32.gmra.mrb[0].mxu0 %v2284
        %v2643 = vpop.f32.mrb[0].mxu0
        %v2644 = vadd.f32 0.0, %v2643
        %v2645 = vpop.f32.mrb[0].mxu0
        %2646 = vmatprep.mubr.f32.mxu0 %v2206
        %2647 = vmatmul.mubr.f32.gmra.mrb[0].mxu0 %v2335
        %v2648 = vpop.f32.mrb[0].mxu0
        %v2649 = vpop.f32.mrb[0].mxu0
        %2650 = vmatprep.mubr.f32.mxu0 %v2207
        %2651 = vmatmul.mubr.f32.gmra.mrb[0].mxu0 %v2287
        %v2652 = vpop.f32.mrb[0].mxu0
        %v2653 = vpop.f32.mrb[0].mxu0
        %2654 = vdwg.mxu0
        %2655 = vmatprep.subr.mxu0 0.0
        %2656 = vmatpush1.msra.mxu0 %v322
        %2657 = vmatprep.subr.mxu0 0.0
        %2658 = vmatpush1.msra.mxu0 %v323
        %2659 = vmatprep.subr.mxu0 0.0
        %2660 = vmatpush1.msra.mxu0 %v324
        %2661 = vmatprep.subr.mxu0 0.0
        %2662 = vmatpush1.msra.mxu0 %v325
        %2663 = vmatprep.subr.mxu0 0.0
        %2664 = vmatpush1.msra.mxu0 %v326
        %2665 = vmatprep.subr.mxu0 0.0
        %2666 = vmatpush1.msra.mxu0 %v327
        %2667 = vmatprep.subr.mxu0 0.0
        %2668 = vmatpush1.msra.mxu0 %v328
        %2669 = vmatprep.subr.mxu0 0.0
        %2670 = vmatpush1.msra.mxu0 %v329
        %2671 = vmatprep.subr.mxu0 0.0
        %2672 = vmatpush1.msra.mxu0 %v330
        %2673 = vmatprep.subr.mxu0 0.0
        %2674 = vmatpush1.msra.mxu0 %v331
        %2675 = vmatprep.subr.mxu0 0.0
        %2676 = vmatpush1.msra.mxu0 %v332
        %2677 = vmatprep.subr.mxu0 0.0
        %2678 = vmatpush1.msra.mxu0 %v333
        %2679 = vmatprep.subr.mxu0 0.0
        %2680 = vmatpush1.msra.mxu0 %v334
        %2681 = vmatprep.subr.mxu0 0.0
        %2682 = vmatpush1.msra.mxu0 %v335
        %2683 = vmatprep.subr.mxu0 0.0
        %2684 = vmatpush1.msra.mxu0 %v336
        %2685 = vmatprep.subr.mxu0 0.0
        %2686 = vmatpush1.msra.mxu0 %v337
        %2687 = vmatprep.subr.mxu0 0.0
        %2688 = vmatpush1.msra.mxu0 0.0
        %2689 = vmatprep.subr.mxu0 0.0
        %2690 = vmatpush1.msra.mxu0 0.0
        %2691 = vmatprep.subr.mxu0 0.0
        %2692 = vmatpush1.msra.mxu0 0.0
        %2693 = vmatprep.subr.mxu0 0.0
        %2694 = vmatpush1.msra.mxu0 0.0
        %2695 = vmatprep.subr.mxu0 0.0
        %2696 = vmatpush1.msra.mxu0 0.0
        %2697 = vmatprep.subr.mxu0 0.0
        %2698 = vmatpush1.msra.mxu0 0.0
        %2699 = vmatprep.subr.mxu0 0.0
        %2700 = vmatpush1.msra.mxu0 0.0
        %2701 = vmatprep.subr.mxu0 0.0
        %2702 = vmatpush1.msra.mxu0 0.0
        %2703 = vmatprep.subr.mxu0 0.0
        %2704 = vmatpush1.msra.mxu0 0.0
        %2705 = vmatprep.subr.mxu0 0.0
        %2706 = vmatpush1.msra.mxu0 0.0
        %2707 = vmatprep.subr.mxu0 0.0
        %2708 = vmatpush1.msra.mxu0 0.0
        %2709 = vmatprep.subr.mxu0 0.0
        %2710 = vmatpush1.msra.mxu0 0.0
        %2711 = vmatprep.subr.mxu0 0.0
        %2712 = vmatpush1.msra.mxu0 0.0
        %2713 = vmatprep.subr.mxu0 0.0
        %2714 = vmatpush1.msra.mxu0 0.0
        %2715 = vmatprep.subr.mxu0 0.0
        %2716 = vmatpush1.msra.mxu0 0.0
        %2717 = vmatprep.subr.mxu0 0.0
        %2718 = vmatpush1.msra.mxu0 0.0
        %2719 = vmatprep.mubr.f32.mxu0 0.0
        %2720 = vmatmul.mubr.f32.gmra.mrb[0].mxu0 %v2338
        %v2721 = vpop.f32.mrb[0].mxu0
        %v2722 = vadd.f32 %v2499, %v2721
        %v2723 = vpop.f32.mrb[0].mxu0
        %2724 = vmatprep.mubr.f32.mxu0 0.0
        %2725 = vmatmul.mubr.f32.gmra.mrb[0].mxu0 %v2416
        %v2726 = vpop.f32.mrb[0].mxu0
        %v2727 = vadd.f32 %v2504, %v2726
        %v2728 = vpop.f32.mrb[0].mxu0
        %2729 = vmatprep.mubr.f32.mxu0 0.0
        %2730 = vmatmul.mubr.f32.gmra.mrb[0].mxu0 %v2341
        %v2731 = vpop.f32.mrb[0].mxu0
        %v2732 = vadd.f32 %v2509, %v2731
        %v2733 = vpop.f32.mrb[0].mxu0
        %2734 = vmatprep.mubr.f32.mxu0 0.0
        %2735 = vmatmul.mubr.f32.gmra.mrb[0].mxu0 %v2417
        %v2736 = vpop.f32.mrb[0].mxu0
        %v2737 = vadd.f32 %v2514, %v2736
        %v2738 = vpop.f32.mrb[0].mxu0
        %2739 = vmatprep.mubr.f32.mxu0 0.0
        %2740 = vmatmul.mubr.f32.gmra.mrb[0].mxu0 %v2344
        %v2741 = vpop.f32.mrb[0].mxu0
        %v2742 = vadd.f32 %v2519, %v2741
        %v2743 = vpop.f32.mrb[0].mxu0
        %2744 = vmatprep.mubr.f32.mxu0 0.0
        %2745 = vmatmul.mubr.f32.gmra.mrb[0].mxu0 %v2418
        %v2746 = vpop.f32.mrb[0].mxu0
        %v2747 = vadd.f32 %v2524, %v2746
        %v2748 = vpop.f32.mrb[0].mxu0
        %2749 = vmatprep.mubr.f32.mxu0 0.0
        %2750 = vmatmul.mubr.f32.gmra.mrb[0].mxu0 %v2347
        %v2751 = vpop.f32.mrb[0].mxu0
        %v2752 = vadd.f32 %v2529, %v2751
        %v2753 = vpop.f32.mrb[0].mxu0
        %2754 = vmatprep.mubr.f32.mxu0 0.0
        %2755 = vmatmul.mubr.f32.gmra.mrb[0].mxu0 %v2419
        %v2756 = vpop.f32.mrb[0].mxu0
        %v2757 = vadd.f32 %v2534, %v2756
        %v2758 = vpop.f32.mrb[0].mxu0
        %2759 = vmatprep.mubr.f32.mxu0 0.0
        %2760 = vmatmul.mubr.f32.gmra.mrb[0].mxu0 %v2350
        %v2761 = vpop.f32.mrb[0].mxu0
        %v2762 = vadd.f32 %v2539, %v2761
        %v2763 = vpop.f32.mrb[0].mxu0
        %2764 = vmatprep.mubr.f32.mxu0 0.0
        %2765 = vmatmul.mubr.f32.gmra.mrb[0].mxu0 %v2420
        %v2766 = vpop.f32.mrb[0].mxu0
        %v2767 = vadd.f32 %v2544, %v2766
        %v2768 = vpop.f32.mrb[0].mxu0
        %2769 = vmatprep.mubr.f32.mxu0 0.0
        %2770 = vmatmul.mubr.f32.gmra.mrb[0].mxu0 %v2353
        %v2771 = vpop.f32.mrb[0].mxu0
        %v2772 = vadd.f32 %v2549, %v2771
        %v2773 = vpop.f32.mrb[0].mxu0
        %2774 = vmatprep.mubr.f32.mxu0 0.0
        %2775 = vmatmul.mubr.f32.gmra.mrb[0].mxu0 %v2421
        %v2776 = vpop.f32.mrb[0].mxu0
        %v2777 = vadd.f32 %v2554, %v2776
        %v2778 = vpop.f32.mrb[0].mxu0
        %2779 = vmatprep.mubr.f32.mxu0 0.0
        %2780 = vmatmul.mubr.f32.gmra.mrb[0].mxu0 %v2356
        %v2781 = vpop.f32.mrb[0].mxu0
        %v2782 = vadd.f32 %v2559, %v2781
        %v2783 = vpop.f32.mrb[0].mxu0
        %2784 = vmatprep.mubr.f32.mxu0 0.0
        %2785 = vmatmul.mubr.f32.gmra.mrb[0].mxu0 %v2422
        %v2786 = vpop.f32.mrb[0].mxu0
        %v2787 = vadd.f32 %v2564, %v2786
        %v2788 = vpop.f32.mrb[0].mxu0
        %2789 = vmatprep.mubr.f32.mxu0 0.0
        %2790 = vmatmul.mubr.f32.gmra.mrb[0].mxu0 %v2359
        %v2791 = vpop.f32.mrb[0].mxu0
        %v2792 = vadd.f32 %v2569, %v2791
        %v2793 = vpop.f32.mrb[0].mxu0
        %2794 = vmatprep.mubr.f32.mxu0 0.0
        %2795 = vmatmul.mubr.f32.gmra.mrb[0].mxu0 %v2423
        %v2796 = vpop.f32.mrb[0].mxu0
        %v2797 = vadd.f32 %v2574, %v2796
        %v2798 = vpop.f32.mrb[0].mxu0
        %2799 = vmatprep.mubr.f32.mxu0 0.0
        %2800 = vmatmul.mubr.f32.gmra.mrb[0].mxu0 %v2362
        %v2801 = vpop.f32.mrb[0].mxu0
        %v2802 = vadd.f32 %v2579, %v2801
        %v2803 = vpop.f32.mrb[0].mxu0
        %2804 = vmatprep.mubr.f32.mxu0 0.0
        %2805 = vmatmul.mubr.f32.gmra.mrb[0].mxu0 %v2424
        %v2806 = vpop.f32.mrb[0].mxu0
        %v2807 = vadd.f32 %v2584, %v2806
        %v2808 = vpop.f32.mrb[0].mxu0
        %2809 = vmatprep.mubr.f32.mxu0 0.0
        %2810 = vmatmul.mubr.f32.gmra.mrb[0].mxu0 %v2365
        %v2811 = vpop.f32.mrb[0].mxu0
        %v2812 = vadd.f32 %v2589, %v2811
        %v2813 = vpop.f32.mrb[0].mxu0
        %2814 = vmatprep.mubr.f32.mxu0 0.0
        %2815 = vmatmul.mubr.f32.gmra.mrb[0].mxu0 %v2425
        %v2816 = vpop.f32.mrb[0].mxu0
        %v2817 = vadd.f32 %v2594, %v2816
        %v2818 = vpop.f32.mrb[0].mxu0
        %2819 = vmatprep.mubr.f32.mxu0 0.0
        %2820 = vmatmul.mubr.f32.gmra.mrb[0].mxu0 %v2368
        %v2821 = vpop.f32.mrb[0].mxu0
        %v2822 = vadd.f32 %v2599, %v2821
        %v2823 = vpop.f32.mrb[0].mxu0
        %2824 = vmatprep.mubr.f32.mxu0 0.0
        %2825 = vmatmul.mubr.f32.gmra.mrb[0].mxu0 %v2426
        %v2826 = vpop.f32.mrb[0].mxu0
        %v2827 = vadd.f32 %v2604, %v2826
        %v2828 = vpop.f32.mrb[0].mxu0
        %2829 = vmatprep.mubr.f32.mxu0 0.0
        %2830 = vmatmul.mubr.f32.gmra.mrb[0].mxu0 %v2371
        %v2831 = vpop.f32.mrb[0].mxu0
        %v2832 = vadd.f32 %v2609, %v2831
        %v2833 = vpop.f32.mrb[0].mxu0
        %2834 = vmatprep.mubr.f32.mxu0 0.0
        %2835 = vmatmul.mubr.f32.gmra.mrb[0].mxu0 %v2427
        %v2836 = vpop.f32.mrb[0].mxu0
        %v2837 = vadd.f32 %v2614, %v2836
        %v2838 = vpop.f32.mrb[0].mxu0
        %2839 = vmatprep.mubr.f32.mxu0 0.0
        %2840 = vmatmul.mubr.f32.gmra.mrb[0].mxu0 %v2374
        %v2841 = vpop.f32.mrb[0].mxu0
        %v2842 = vadd.f32 %v2619, %v2841
        %v2843 = vpop.f32.mrb[0].mxu0
        %2844 = vmatprep.mubr.f32.mxu0 0.0
        %2845 = vmatmul.mubr.f32.gmra.mrb[0].mxu0 %v2428
        %v2846 = vpop.f32.mrb[0].mxu0
        %v2847 = vadd.f32 %v2624, %v2846
        %v2848 = vpop.f32.mrb[0].mxu0
        %2849 = vmatprep.mubr.f32.mxu0 0.0
        %2850 = vmatmul.mubr.f32.gmra.mrb[0].mxu0 %v2377
        %v2851 = vpop.f32.mrb[0].mxu0
        %v2852 = vadd.f32 %v2629, %v2851
        %v2853 = vpop.f32.mrb[0].mxu0
        %2854 = vmatprep.mubr.f32.mxu0 0.0
        %2855 = vmatmul.mubr.f32.gmra.mrb[0].mxu0 %v2429
        %v2856 = vpop.f32.mrb[0].mxu0
        %v2857 = vadd.f32 %v2634, %v2856
        %v2858 = vpop.f32.mrb[0].mxu0
        %2859 = vmatprep.mubr.f32.mxu0 0.0
        %2860 = vmatmul.mubr.f32.gmra.mrb[0].mxu0 %v2380
        %v2861 = vpop.f32.mrb[0].mxu0
        %v2862 = vadd.f32 %v2639, %v2861
        %v2863 = vpop.f32.mrb[0].mxu0
        %2864 = vmatprep.mubr.f32.mxu0 0.0
        %2865 = vmatmul.mubr.f32.gmra.mrb[0].mxu0 %v2430
        %v2866 = vpop.f32.mrb[0].mxu0
        %v2867 = vadd.f32 %v2644, %v2866
        %v2868 = vpop.f32.mrb[0].mxu0
        %2869 = vmatprep.mubr.f32.mxu0 0.0
        %2870 = vmatmul.mubr.f32.gmra.mrb[0].mxu0 %v2383
        %v2871 = vpop.f32.mrb[0].mxu0
        %v2872 = vpop.f32.mrb[0].mxu0
        %2873 = vmatprep.mubr.f32.mxu0 0.0
        %2874 = vmatmul.mubr.f32.gmra.mrb[0].mxu0 %v2431
        %v2875 = vpop.f32.mrb[0].mxu0
        %v2876 = vpop.f32.mrb[0].mxu0
        %2877 = vdwg.mxu0
        %2878 = vmatprep.subr.mxu0 0.0
        %2879 = vmatpush1.msra.mxu0 %v339
        %2880 = vmatprep.subr.mxu0 0.0
        %2881 = vmatpush1.msra.mxu0 %v340
        %2882 = vmatprep.subr.mxu0 0.0
        %2883 = vmatpush1.msra.mxu0 %v341
        %2884 = vmatprep.subr.mxu0 0.0
        %2885 = vmatpush1.msra.mxu0 %v342
        %2886 = vmatprep.subr.mxu0 0.0
        %2887 = vmatpush1.msra.mxu0 %v343
        %2888 = vmatprep.subr.mxu0 0.0
        %2889 = vmatpush1.msra.mxu0 %v344
        %2890 = vmatprep.subr.mxu0 0.0
        %2891 = vmatpush1.msra.mxu0 %v345
        %2892 = vmatprep.subr.mxu0 0.0
        %2893 = vmatpush1.msra.mxu0 %v346
        %2894 = vmatprep.subr.mxu0 0.0
        %2895 = vmatpush1.msra.mxu0 %v347
        %2896 = vmatprep.subr.mxu0 0.0
        %2897 = vmatpush1.msra.mxu0 %v348
        %2898 = vmatprep.subr.mxu0 0.0
        %2899 = vmatpush1.msra.mxu0 %v349
        %2900 = vmatprep.subr.mxu0 0.0
        %2901 = vmatpush1.msra.mxu0 %v350
        %2902 = vmatprep.subr.mxu0 0.0
        %2903 = vmatpush1.msra.mxu0 %v351
        %2904 = vmatprep.subr.mxu0 0.0
        %2905 = vmatpush1.msra.mxu0 %v352
        %2906 = vmatprep.subr.mxu0 0.0
        %2907 = vmatpush1.msra.mxu0 %v353
        %2908 = vmatprep.subr.mxu0 0.0
        %2909 = vmatpush1.msra.mxu0 %v354
        %2910 = vmatprep.subr.mxu0 0.0
        %2911 = vmatpush1.msra.mxu0 %v355
        %2912 = vmatprep.subr.mxu0 0.0
        %2913 = vmatpush1.msra.mxu0 %v356
        %2914 = vmatprep.subr.mxu0 0.0
        %2915 = vmatpush1.msra.mxu0 %v357
        %2916 = vmatprep.subr.mxu0 0.0
        %2917 = vmatpush1.msra.mxu0 %v358
        %2918 = vmatprep.subr.mxu0 0.0
        %2919 = vmatpush1.msra.mxu0 %v359
        %2920 = vmatprep.subr.mxu0 0.0
        %2921 = vmatpush1.msra.mxu0 %v360
        %2922 = vmatprep.subr.mxu0 0.0
        %2923 = vmatpush1.msra.mxu0 %v361
        %2924 = vmatprep.subr.mxu0 0.0
        %2925 = vmatpush1.msra.mxu0 %v362
        %2926 = vmatprep.subr.mxu0 0.0
        %2927 = vmatpush1.msra.mxu0 %v363
        %2928 = vmatprep.subr.mxu0 0.0
        %2929 = vmatpush1.msra.mxu0 %v364
        %2930 = vmatprep.subr.mxu0 0.0
        %2931 = vmatpush1.msra.mxu0 %v365
        %2932 = vmatprep.subr.mxu0 0.0
        %2933 = vmatpush1.msra.mxu0 %v366
        %2934 = vmatprep.subr.mxu0 0.0
        %2935 = vmatpush1.msra.mxu0 %v367
        %2936 = vmatprep.subr.mxu0 0.0
        %2937 = vmatpush1.msra.mxu0 %v368
        %2938 = vmatprep.subr.mxu0 0.0
        %2939 = vmatpush1.msra.mxu0 %v369
        %2940 = vmatprep.subr.mxu0 0.0
        %2941 = vmatpush1.msra.mxu0 %v370
        %2942 = vmatprep.mubr.f32.mxu0 %v2176
        %2943 = vmatmul.mubr.f32.gmra.mrb[0].mxu0 %v2320
        %v2944 = vpop.f32.mrb[0].mxu0
        %v2945 = vadd.f32 0.0, %v2944
        %v2946 = vpop.f32.mrb[0].mxu0
        %2947 = vmatprep.mubr.f32.mxu0 %v2177
        %2948 = vmatmul.mubr.f32.gmra.mrb[0].mxu0 %v2242
        %v2949 = vpop.f32.mrb[0].mxu0
        %v2950 = vadd.f32 0.0, %v2949
        %v2951 = vpop.f32.mrb[0].mxu0
        %2952 = vmatprep.mubr.f32.mxu0 %v2178
        %2953 = vmatmul.mubr.f32.gmra.mrb[0].mxu0 %v2321
        %v2954 = vpop.f32.mrb[0].mxu0
        %v2955 = vadd.f32 0.0, %v2954
        %v2956 = vpop.f32.mrb[0].mxu0
        %2957 = vmatprep.mubr.f32.mxu0 %v2179
        %2958 = vmatmul.mubr.f32.gmra.mrb[0].mxu0 %v2245
        %v2959 = vpop.f32.mrb[0].mxu0
        %v2960 = vadd.f32 0.0, %v2959
        %v2961 = vpop.f32.mrb[0].mxu0
        %2962 = vmatprep.mubr.f32.mxu0 %v2180
        %2963 = vmatmul.mubr.f32.gmra.mrb[0].mxu0 %v2322
        %v2964 = vpop.f32.mrb[0].mxu0
        %v2965 = vadd.f32 0.0, %v2964
        %v2966 = vpop.f32.mrb[0].mxu0
        %2967 = vmatprep.mubr.f32.mxu0 %v2181
        %2968 = vmatmul.mubr.f32.gmra.mrb[0].mxu0 %v2248
        %v2969 = vpop.f32.mrb[0].mxu0
        %v2970 = vadd.f32 0.0, %v2969
        %v2971 = vpop.f32.mrb[0].mxu0
        %2972 = vmatprep.mubr.f32.mxu0 %v2182
        %2973 = vmatmul.mubr.f32.gmra.mrb[0].mxu0 %v2323
        %v2974 = vpop.f32.mrb[0].mxu0
        %v2975 = vadd.f32 0.0, %v2974
        %v2976 = vpop.f32.mrb[0].mxu0
        %2977 = vmatprep.mubr.f32.mxu0 %v2183
        %2978 = vmatmul.mubr.f32.gmra.mrb[0].mxu0 %v2251
        %v2979 = vpop.f32.mrb[0].mxu0
        %v2980 = vadd.f32 0.0, %v2979
        %v2981 = vpop.f32.mrb[0].mxu0
        %2982 = vmatprep.mubr.f32.mxu0 %v2184
        %2983 = vmatmul.mubr.f32.gmra.mrb[0].mxu0 %v2324
        %v2984 = vpop.f32.mrb[0].mxu0
        %v2985 = vadd.f32 0.0, %v2984
        %v2986 = vpop.f32.mrb[0].mxu0
        %2987 = vmatprep.mubr.f32.mxu0 %v2185
        %2988 = vmatmul.mubr.f32.gmra.mrb[0].mxu0 %v2254
        %v2989 = vpop.f32.mrb[0].mxu0
        %v2990 = vadd.f32 0.0, %v2989
        %v2991 = vpop.f32.mrb[0].mxu0
        %2992 = vmatprep.mubr.f32.mxu0 %v2186
        %2993 = vmatmul.mubr.f32.gmra.mrb[0].mxu0 %v2325
        %v2994 = vpop.f32.mrb[0].mxu0
        %v2995 = vadd.f32 0.0, %v2994
        %v2996 = vpop.f32.mrb[0].mxu0
        %2997 = vmatprep.mubr.f32.mxu0 %v2187
        %2998 = vmatmul.mubr.f32.gmra.mrb[0].mxu0 %v2257
        %v2999 = vpop.f32.mrb[0].mxu0
        %v3000 = vadd.f32 0.0, %v2999
        %v3001 = vpop.f32.mrb[0].mxu0
        %3002 = vmatprep.mubr.f32.mxu0 %v2188
        %3003 = vmatmul.mubr.f32.gmra.mrb[0].mxu0 %v2326
        %v3004 = vpop.f32.mrb[0].mxu0
        %v3005 = vadd.f32 0.0, %v3004
        %v3006 = vpop.f32.mrb[0].mxu0
        %3007 = vmatprep.mubr.f32.mxu0 %v2189
        %3008 = vmatmul.mubr.f32.gmra.mrb[0].mxu0 %v2260
        %v3009 = vpop.f32.mrb[0].mxu0
        %v3010 = vadd.f32 0.0, %v3009
        %v3011 = vpop.f32.mrb[0].mxu0
        %3012 = vmatprep.mubr.f32.mxu0 %v2190
        %3013 = vmatmul.mubr.f32.gmra.mrb[0].mxu0 %v2327
        %v3014 = vpop.f32.mrb[0].mxu0
        %v3015 = vadd.f32 0.0, %v3014
        %v3016 = vpop.f32.mrb[0].mxu0
        %3017 = vmatprep.mubr.f32.mxu0 %v2191
        %3018 = vmatmul.mubr.f32.gmra.mrb[0].mxu0 %v2263
        %v3019 = vpop.f32.mrb[0].mxu0
        %v3020 = vadd.f32 0.0, %v3019
        %v3021 = vpop.f32.mrb[0].mxu0
        %3022 = vmatprep.mubr.f32.mxu0 %v2192
        %3023 = vmatmul.mubr.f32.gmra.mrb[0].mxu0 %v2328
        %v3024 = vpop.f32.mrb[0].mxu0
        %v3025 = vadd.f32 0.0, %v3024
        %v3026 = vpop.f32.mrb[0].mxu0
        %3027 = vmatprep.mubr.f32.mxu0 %v2193
        %3028 = vmatmul.mubr.f32.gmra.mrb[0].mxu0 %v2266
        %v3029 = vpop.f32.mrb[0].mxu0
        %v3030 = vadd.f32 0.0, %v3029
        %v3031 = vpop.f32.mrb[0].mxu0
        %3032 = vmatprep.mubr.f32.mxu0 %v2194
        %3033 = vmatmul.mubr.f32.gmra.mrb[0].mxu0 %v2329
        %v3034 = vpop.f32.mrb[0].mxu0
        %v3035 = vadd.f32 0.0, %v3034
        %v3036 = vpop.f32.mrb[0].mxu0
        %3037 = vmatprep.mubr.f32.mxu0 %v2195
        %3038 = vmatmul.mubr.f32.gmra.mrb[0].mxu0 %v2269
        %v3039 = vpop.f32.mrb[0].mxu0
        %v3040 = vadd.f32 0.0, %v3039
        %v3041 = vpop.f32.mrb[0].mxu0
        %3042 = vmatprep.mubr.f32.mxu0 %v2196
        %3043 = vmatmul.mubr.f32.gmra.mrb[0].mxu0 %v2330
        %v3044 = vpop.f32.mrb[0].mxu0
        %v3045 = vadd.f32 0.0, %v3044
        %v3046 = vpop.f32.mrb[0].mxu0
        %3047 = vmatprep.mubr.f32.mxu0 %v2197
        %3048 = vmatmul.mubr.f32.gmra.mrb[0].mxu0 %v2272
        %v3049 = vpop.f32.mrb[0].mxu0
        %v3050 = vadd.f32 0.0, %v3049
        %v3051 = vpop.f32.mrb[0].mxu0
        %3052 = vmatprep.mubr.f32.mxu0 %v2198
        %3053 = vmatmul.mubr.f32.gmra.mrb[0].mxu0 %v2331
        %v3054 = vpop.f32.mrb[0].mxu0
        %v3055 = vadd.f32 0.0, %v3054
        %v3056 = vpop.f32.mrb[0].mxu0
        %3057 = vmatprep.mubr.f32.mxu0 %v2199
        %3058 = vmatmul.mubr.f32.gmra.mrb[0].mxu0 %v2275
        %v3059 = vpop.f32.mrb[0].mxu0
        %v3060 = vadd.f32 0.0, %v3059
        %v3061 = vpop.f32.mrb[0].mxu0
        %3062 = vmatprep.mubr.f32.mxu0 %v2200
        %3063 = vmatmul.mubr.f32.gmra.mrb[0].mxu0 %v2332
        %v3064 = vpop.f32.mrb[0].mxu0
        %v3065 = vadd.f32 0.0, %v3064
        %v3066 = vpop.f32.mrb[0].mxu0
        %3067 = vmatprep.mubr.f32.mxu0 %v2201
        %3068 = vmatmul.mubr.f32.gmra.mrb[0].mxu0 %v2278
        %v3069 = vpop.f32.mrb[0].mxu0
        %v3070 = vadd.f32 0.0, %v3069
        %v3071 = vpop.f32.mrb[0].mxu0
        %3072 = vmatprep.mubr.f32.mxu0 %v2202
        %3073 = vmatmul.mubr.f32.gmra.mrb[0].mxu0 %v2333
        %v3074 = vpop.f32.mrb[0].mxu0
        %v3075 = vadd.f32 0.0, %v3074
        %v3076 = vpop.f32.mrb[0].mxu0
        %3077 = vmatprep.mubr.f32.mxu0 %v2203
        %3078 = vmatmul.mubr.f32.gmra.mrb[0].mxu0 %v2281
        %v3079 = vpop.f32.mrb[0].mxu0
        %v3080 = vadd.f32 0.0, %v3079
        %v3081 = vpop.f32.mrb[0].mxu0
        %3082 = vmatprep.mubr.f32.mxu0 %v2204
        %3083 = vmatmul.mubr.f32.gmra.mrb[0].mxu0 %v2334
        %v3084 = vpop.f32.mrb[0].mxu0
        %v3085 = vadd.f32 0.0, %v3084
        %v3086 = vpop.f32.mrb[0].mxu0
        %3087 = vmatprep.mubr.f32.mxu0 %v2205
        %3088 = vmatmul.mubr.f32.gmra.mrb[0].mxu0 %v2284
        %v3089 = vpop.f32.mrb[0].mxu0
        %v3090 = vadd.f32 0.0, %v3089
        %v3091 = vpop.f32.mrb[0].mxu0
        %3092 = vmatprep.mubr.f32.mxu0 %v2206
        %3093 = vmatmul.mubr.f32.gmra.mrb[0].mxu0 %v2335
        %v3094 = vpop.f32.mrb[0].mxu0
        %v3095 = vadd.f32 0.0, %v3094
        %v3096 = vpop.f32.mrb[0].mxu0
        %3097 = vmatprep.mubr.f32.mxu0 %v2207
        %3098 = vmatmul.mubr.f32.gmra.mrb[0].mxu0 %v2287
        %v3099 = vpop.f32.mrb[0].mxu0
        %v3100 = vadd.f32 0.0, %v3099
        %v3101 = vpop.f32.mrb[0].mxu0
        %3102 = vdwg.mxu0
        %3103 = vmatprep.subr.mxu0 0.0
        %3104 = vmatpush1.msra.mxu0 %v371
        %3105 = vmatprep.subr.mxu0 0.0
        %3106 = vmatpush1.msra.mxu0 %v372
        %3107 = vmatprep.subr.mxu0 0.0
        %3108 = vmatpush1.msra.mxu0 %v373
        %3109 = vmatprep.subr.mxu0 0.0
        %3110 = vmatpush1.msra.mxu0 %v374
        %3111 = vmatprep.subr.mxu0 0.0
        %3112 = vmatpush1.msra.mxu0 %v375
        %3113 = vmatprep.subr.mxu0 0.0
        %3114 = vmatpush1.msra.mxu0 %v376
        %3115 = vmatprep.subr.mxu0 0.0
        %3116 = vmatpush1.msra.mxu0 %v377
        %3117 = vmatprep.subr.mxu0 0.0
        %3118 = vmatpush1.msra.mxu0 %v378
        %3119 = vmatprep.subr.mxu0 0.0
        %3120 = vmatpush1.msra.mxu0 %v379
        %3121 = vmatprep.subr.mxu0 0.0
        %3122 = vmatpush1.msra.mxu0 %v380
        %3123 = vmatprep.subr.mxu0 0.0
        %3124 = vmatpush1.msra.mxu0 %v381
        %3125 = vmatprep.subr.mxu0 0.0
        %3126 = vmatpush1.msra.mxu0 %v382
        %3127 = vmatprep.subr.mxu0 0.0
        %3128 = vmatpush1.msra.mxu0 %v383
        %3129 = vmatprep.subr.mxu0 0.0
        %3130 = vmatpush1.msra.mxu0 %v384
        %3131 = vmatprep.subr.mxu0 0.0
        %3132 = vmatpush1.msra.mxu0 %v385
        %3133 = vmatprep.subr.mxu0 0.0
        %3134 = vmatpush1.msra.mxu0 %v386
        %3135 = vmatprep.subr.mxu0 0.0
        %3136 = vmatpush1.msra.mxu0 0.0
        %3137 = vmatprep.subr.mxu0 0.0
        %3138 = vmatpush1.msra.mxu0 0.0
        %3139 = vmatprep.subr.mxu0 0.0
        %3140 = vmatpush1.msra.mxu0 0.0
        %3141 = vmatprep.subr.mxu0 0.0
        %3142 = vmatpush1.msra.mxu0 0.0
        %3143 = vmatprep.subr.mxu0 0.0
        %3144 = vmatpush1.msra.mxu0 0.0
        %3145 = vmatprep.subr.mxu0 0.0
        %3146 = vmatpush1.msra.mxu0 0.0
        %3147 = vmatprep.subr.mxu0 0.0
        %3148 = vmatpush1.msra.mxu0 0.0
        %3149 = vmatprep.subr.mxu0 0.0
        %3150 = vmatpush1.msra.mxu0 0.0
        %3151 = vmatprep.subr.mxu0 0.0
        %3152 = vmatpush1.msra.mxu0 0.0
        %3153 = vmatprep.subr.mxu0 0.0
        %3154 = vmatpush1.msra.mxu0 0.0
        %3155 = vmatprep.subr.mxu0 0.0
        %3156 = vmatpush1.msra.mxu0 0.0
        %3157 = vmatprep.subr.mxu0 0.0
        %3158 = vmatpush1.msra.mxu0 0.0
        %3159 = vmatprep.subr.mxu0 0.0
        %3160 = vmatpush1.msra.mxu0 0.0
        %3161 = vmatprep.subr.mxu0 0.0
        %3162 = vmatpush1.msra.mxu0 0.0
        %3163 = vmatprep.subr.mxu0 0.0
        %3164 = vmatpush1.msra.mxu0 0.0
        %3165 = vmatprep.subr.mxu0 0.0
        %3166 = vmatpush1.msra.mxu0 0.0
        %3167 = vmatprep.mubr.f32.mxu0 0.0
        %3168 = vmatmul.mubr.f32.gmra.mrb[0].mxu0 %v2338
        %v3169 = vpop.f32.mrb[0].mxu0
        %v3170 = vadd.f32 %v2945, %v3169
        %v3171 = vpop.f32.mrb[0].mxu0
        %3172 = vmatprep.mubr.f32.mxu0 0.0
        %3173 = vmatmul.mubr.f32.gmra.mrb[0].mxu0 %v2416
        %v3174 = vpop.f32.mrb[0].mxu0
        %v3175 = vadd.f32 %v2950, %v3174
        %v3176 = vpop.f32.mrb[0].mxu0
        %3177 = vmatprep.mubr.f32.mxu0 0.0
        %3178 = vmatmul.mubr.f32.gmra.mrb[0].mxu0 %v2341
        %v3179 = vpop.f32.mrb[0].mxu0
        %v3180 = vadd.f32 %v2955, %v3179
        %v3181 = vpop.f32.mrb[0].mxu0
        %3182 = vmatprep.mubr.f32.mxu0 0.0
        %3183 = vmatmul.mubr.f32.gmra.mrb[0].mxu0 %v2417
        %v3184 = vpop.f32.mrb[0].mxu0
        %v3185 = vadd.f32 %v2960, %v3184
        %v3186 = vpop.f32.mrb[0].mxu0
        %3187 = vmatprep.mubr.f32.mxu0 0.0
        %3188 = vmatmul.mubr.f32.gmra.mrb[0].mxu0 %v2344
        %v3189 = vpop.f32.mrb[0].mxu0
        %v3190 = vadd.f32 %v2965, %v3189
        %v3191 = vpop.f32.mrb[0].mxu0
        %3192 = vmatprep.mubr.f32.mxu0 0.0
        %3193 = vmatmul.mubr.f32.gmra.mrb[0].mxu0 %v2418
        %v3194 = vpop.f32.mrb[0].mxu0
        %v3195 = vadd.f32 %v2970, %v3194
        %v3196 = vpop.f32.mrb[0].mxu0
        %3197 = vmatprep.mubr.f32.mxu0 0.0
        %3198 = vmatmul.mubr.f32.gmra.mrb[0].mxu0 %v2347
        %v3199 = vpop.f32.mrb[0].mxu0
        %v3200 = vadd.f32 %v2975, %v3199
        %v3201 = vpop.f32.mrb[0].mxu0
        %3202 = vmatprep.mubr.f32.mxu0 0.0
        %3203 = vmatmul.mubr.f32.gmra.mrb[0].mxu0 %v2419
        %v3204 = vpop.f32.mrb[0].mxu0
        %v3205 = vadd.f32 %v2980, %v3204
        %v3206 = vpop.f32.mrb[0].mxu0
        %3207 = vmatprep.mubr.f32.mxu0 0.0
        %3208 = vmatmul.mubr.f32.gmra.mrb[0].mxu0 %v2350
        %v3209 = vpop.f32.mrb[0].mxu0
        %v3210 = vadd.f32 %v2985, %v3209
        %v3211 = vpop.f32.mrb[0].mxu0
        %3212 = vmatprep.mubr.f32.mxu0 0.0
        %3213 = vmatmul.mubr.f32.gmra.mrb[0].mxu0 %v2420
        %v3214 = vpop.f32.mrb[0].mxu0
        %v3215 = vadd.f32 %v2990, %v3214
        %v3216 = vpop.f32.mrb[0].mxu0
        %3217 = vmatprep.mubr.f32.mxu0 0.0
        %3218 = vmatmul.mubr.f32.gmra.mrb[0].mxu0 %v2353
        %v3219 = vpop.f32.mrb[0].mxu0
        %v3220 = vadd.f32 %v2995, %v3219
        %v3221 = vpop.f32.mrb[0].mxu0
        %3222 = vmatprep.mubr.f32.mxu0 0.0
        %3223 = vmatmul.mubr.f32.gmra.mrb[0].mxu0 %v2421
        %v3224 = vpop.f32.mrb[0].mxu0
        %v3225 = vadd.f32 %v3000, %v3224
        %v3226 = vpop.f32.mrb[0].mxu0
        %3227 = vmatprep.mubr.f32.mxu0 0.0
        %3228 = vmatmul.mubr.f32.gmra.mrb[0].mxu0 %v2356
        %v3229 = vpop.f32.mrb[0].mxu0
        %v3230 = vadd.f32 %v3005, %v3229
        %v3231 = vpop.f32.mrb[0].mxu0
        %3232 = vmatprep.mubr.f32.mxu0 0.0
        %3233 = vmatmul.mubr.f32.gmra.mrb[0].mxu0 %v2422
        %v3234 = vpop.f32.mrb[0].mxu0
        %v3235 = vadd.f32 %v3010, %v3234
        %v3236 = vpop.f32.mrb[0].mxu0
        %3237 = vmatprep.mubr.f32.mxu0 0.0
        %3238 = vmatmul.mubr.f32.gmra.mrb[0].mxu0 %v2359
        %v3239 = vpop.f32.mrb[0].mxu0
        %v3240 = vadd.f32 %v3015, %v3239
        %v3241 = vpop.f32.mrb[0].mxu0
        %3242 = vmatprep.mubr.f32.mxu0 0.0
        %3243 = vmatmul.mubr.f32.gmra.mrb[0].mxu0 %v2423
        %v3244 = vpop.f32.mrb[0].mxu0
        %v3245 = vadd.f32 %v3020, %v3244
        %v3246 = vpop.f32.mrb[0].mxu0
        %3247 = vmatprep.mubr.f32.mxu0 0.0
        %3248 = vmatmul.mubr.f32.gmra.mrb[0].mxu0 %v2362
        %v3249 = vpop.f32.mrb[0].mxu0
        %v3250 = vadd.f32 %v3025, %v3249
        %v3251 = vpop.f32.mrb[0].mxu0
        %3252 = vmatprep.mubr.f32.mxu0 0.0
        %3253 = vmatmul.mubr.f32.gmra.mrb[0].mxu0 %v2424
        %v3254 = vpop.f32.mrb[0].mxu0
        %v3255 = vadd.f32 %v3030, %v3254
        %v3256 = vpop.f32.mrb[0].mxu0
        %3257 = vmatprep.mubr.f32.mxu0 0.0
        %3258 = vmatmul.mubr.f32.gmra.mrb[0].mxu0 %v2365
        %v3259 = vpop.f32.mrb[0].mxu0
        %v3260 = vadd.f32 %v3035, %v3259
        %v3261 = vpop.f32.mrb[0].mxu0
        %3262 = vmatprep.mubr.f32.mxu0 0.0
        %3263 = vmatmul.mubr.f32.gmra.mrb[0].mxu0 %v2425
        %v3264 = vpop.f32.mrb[0].mxu0
        %v3265 = vadd.f32 %v3040, %v3264
        %v3266 = vpop.f32.mrb[0].mxu0
        %3267 = vmatprep.mubr.f32.mxu0 0.0
        %3268 = vmatmul.mubr.f32.gmra.mrb[0].mxu0 %v2368
        %v3269 = vpop.f32.mrb[0].mxu0
        %v3270 = vadd.f32 %v3045, %v3269
        %v3271 = vpop.f32.mrb[0].mxu0
        %3272 = vmatprep.mubr.f32.mxu0 0.0
        %3273 = vmatmul.mubr.f32.gmra.mrb[0].mxu0 %v2426
        %v3274 = vpop.f32.mrb[0].mxu0
        %v3275 = vadd.f32 %v3050, %v3274
        %v3276 = vpop.f32.mrb[0].mxu0
        %3277 = vmatprep.mubr.f32.mxu0 0.0
        %3278 = vmatmul.mubr.f32.gmra.mrb[0].mxu0 %v2371
        %v3279 = vpop.f32.mrb[0].mxu0
        %v3280 = vadd.f32 %v3055, %v3279
        %v3281 = vpop.f32.mrb[0].mxu0
        %3282 = vmatprep.mubr.f32.mxu0 0.0
        %3283 = vmatmul.mubr.f32.gmra.mrb[0].mxu0 %v2427
        %v3284 = vpop.f32.mrb[0].mxu0
        %v3285 = vadd.f32 %v3060, %v3284
        %v3286 = vpop.f32.mrb[0].mxu0
        %3287 = vmatprep.mubr.f32.mxu0 0.0
        %3288 = vmatmul.mubr.f32.gmra.mrb[0].mxu0 %v2374
        %v3289 = vpop.f32.mrb[0].mxu0
        %v3290 = vadd.f32 %v3065, %v3289
        %v3291 = vpop.f32.mrb[0].mxu0
        %3292 = vmatprep.mubr.f32.mxu0 0.0
        %3293 = vmatmul.mubr.f32.gmra.mrb[0].mxu0 %v2428
        %v3294 = vpop.f32.mrb[0].mxu0
        %v3295 = vadd.f32 %v3070, %v3294
        %v3296 = vpop.f32.mrb[0].mxu0
        %3297 = vmatprep.mubr.f32.mxu0 0.0
        %3298 = vmatmul.mubr.f32.gmra.mrb[0].mxu0 %v2377
        %v3299 = vpop.f32.mrb[0].mxu0
        %v3300 = vadd.f32 %v3075, %v3299
        %v3301 = vpop.f32.mrb[0].mxu0
        %3302 = vmatprep.mubr.f32.mxu0 0.0
        %3303 = vmatmul.mubr.f32.gmra.mrb[0].mxu0 %v2429
        %v3304 = vpop.f32.mrb[0].mxu0
        %v3305 = vadd.f32 %v3080, %v3304
        %v3306 = vpop.f32.mrb[0].mxu0
        %3307 = vmatprep.mubr.f32.mxu0 0.0
        %3308 = vmatmul.mubr.f32.gmra.mrb[0].mxu0 %v2380
        %v3309 = vpop.f32.mrb[0].mxu0
        %v3310 = vadd.f32 %v3085, %v3309
        %v3311 = vpop.f32.mrb[0].mxu0
        %3312 = vmatprep.mubr.f32.mxu0 0.0
        %3313 = vmatmul.mubr.f32.gmra.mrb[0].mxu0 %v2430
        %v3314 = vpop.f32.mrb[0].mxu0
        %v3315 = vadd.f32 %v3090, %v3314
        %v3316 = vpop.f32.mrb[0].mxu0
        %3317 = vmatprep.mubr.f32.mxu0 0.0
        %3318 = vmatmul.mubr.f32.gmra.mrb[0].mxu0 %v2383
        %v3319 = vpop.f32.mrb[0].mxu0
        %v3320 = vadd.f32 %v3095, %v3319
        %v3321 = vpop.f32.mrb[0].mxu0
        %3322 = vmatprep.mubr.f32.mxu0 0.0
        %3323 = vmatmul.mubr.f32.gmra.mrb[0].mxu0 %v2431
        %v3324 = vpop.f32.mrb[0].mxu0
        %v3325 = vadd.f32 %v3100, %v3324
        %v3326 = vpop.f32.mrb[0].mxu0
        %3327 = vdwg.mxu0
        %3328 = vmatprep.subr.mxu0 0.0
        %3329 = vmatpush1.msra.mxu0 %v388
        %3330 = vmatprep.subr.mxu0 0.0
        %3331 = vmatpush1.msra.mxu0 %v389
        %3332 = vmatprep.subr.mxu0 0.0
        %3333 = vmatpush1.msra.mxu0 %v390
        %3334 = vmatprep.subr.mxu0 0.0
        %3335 = vmatpush1.msra.mxu0 %v391
        %3336 = vmatprep.subr.mxu0 0.0
        %3337 = vmatpush1.msra.mxu0 %v392
        %3338 = vmatprep.subr.mxu0 0.0
        %3339 = vmatpush1.msra.mxu0 %v393
        %3340 = vmatprep.subr.mxu0 0.0
        %3341 = vmatpush1.msra.mxu0 %v394
        %3342 = vmatprep.subr.mxu0 0.0
        %3343 = vmatpush1.msra.mxu0 %v395
        %3344 = vmatprep.subr.mxu0 0.0
        %3345 = vmatpush1.msra.mxu0 %v396
        %3346 = vmatprep.subr.mxu0 0.0
        %3347 = vmatpush1.msra.mxu0 %v397
        %3348 = vmatprep.subr.mxu0 0.0
        %3349 = vmatpush1.msra.mxu0 %v398
        %3350 = vmatprep.subr.mxu0 0.0
        %3351 = vmatpush1.msra.mxu0 %v399
        %3352 = vmatprep.subr.mxu0 0.0
        %3353 = vmatpush1.msra.mxu0 %v400
        %3354 = vmatprep.subr.mxu0 0.0
        %3355 = vmatpush1.msra.mxu0 %v401
        %3356 = vmatprep.subr.mxu0 0.0
        %3357 = vmatpush1.msra.mxu0 %v402
        %3358 = vmatprep.subr.mxu0 0.0
        %3359 = vmatpush1.msra.mxu0 %v403
        %3360 = vmatprep.subr.mxu0 0.0
        %3361 = vmatpush1.msra.mxu0 %v404
        %3362 = vmatprep.subr.mxu0 0.0
        %3363 = vmatpush1.msra.mxu0 %v405
        %3364 = vmatprep.subr.mxu0 0.0
        %3365 = vmatpush1.msra.mxu0 %v406
        %3366 = vmatprep.subr.mxu0 0.0
        %3367 = vmatpush1.msra.mxu0 %v407
        %3368 = vmatprep.subr.mxu0 0.0
        %3369 = vmatpush1.msra.mxu0 %v408
        %3370 = vmatprep.subr.mxu0 0.0
        %3371 = vmatpush1.msra.mxu0 %v409
        %3372 = vmatprep.subr.mxu0 0.0
        %3373 = vmatpush1.msra.mxu0 %v410
        %3374 = vmatprep.subr.mxu0 0.0
        %3375 = vmatpush1.msra.mxu0 %v411
        %3376 = vmatprep.subr.mxu0 0.0
        %3377 = vmatpush1.msra.mxu0 %v412
        %3378 = vmatprep.subr.mxu0 0.0
        %3379 = vmatpush1.msra.mxu0 %v413
        %3380 = vmatprep.subr.mxu0 0.0
        %3381 = vmatpush1.msra.mxu0 %v414
        %3382 = vmatprep.subr.mxu0 0.0
        %3383 = vmatpush1.msra.mxu0 %v415
        %3384 = vmatprep.subr.mxu0 0.0
        %3385 = vmatpush1.msra.mxu0 %v416
        %3386 = vmatprep.subr.mxu0 0.0
        %3387 = vmatpush1.msra.mxu0 %v417
        %3388 = vmatprep.subr.mxu0 0.0
        %3389 = vmatpush1.msra.mxu0 %v418
        %3390 = vmatprep.subr.mxu0 0.0
        %3391 = vmatpush1.msra.mxu0 %v419
        %3392 = vmatprep.mubr.f32.mxu0 %v2176
        %3393 = vmatmul.mubr.f32.gmra.mrb[0].mxu0 %v2320
        %v3394 = vpop.f32.mrb[0].mxu0
        %v3395 = vpop.f32.mrb[0].mxu0
        %3396 = vmatprep.mubr.f32.mxu0 %v2177
        %3397 = vmatmul.mubr.f32.gmra.mrb[0].mxu0 %v2242
        %v3398 = vpop.f32.mrb[0].mxu0
        %v3399 = vpop.f32.mrb[0].mxu0
        %3400 = vmatprep.mubr.f32.mxu0 %v2178
        %3401 = vmatmul.mubr.f32.gmra.mrb[0].mxu0 %v2321
        %v3402 = vpop.f32.mrb[0].mxu0
        %v3403 = vadd.f32 0.0, %v3402
        %v3404 = vpop.f32.mrb[0].mxu0
        %3405 = vmatprep.mubr.f32.mxu0 %v2179
        %3406 = vmatmul.mubr.f32.gmra.mrb[0].mxu0 %v2245
        %v3407 = vpop.f32.mrb[0].mxu0
        %v3408 = vadd.f32 0.0, %v3407
        %v3409 = vpop.f32.mrb[0].mxu0
        %3410 = vmatprep.mubr.f32.mxu0 %v2180
        %3411 = vmatmul.mubr.f32.gmra.mrb[0].mxu0 %v2322
        %v3412 = vpop.f32.mrb[0].mxu0
        %v3413 = vadd.f32 0.0, %v3412
        %v3414 = vpop.f32.mrb[0].mxu0
        %3415 = vmatprep.mubr.f32.mxu0 %v2181
        %3416 = vmatmul.mubr.f32.gmra.mrb[0].mxu0 %v2248
        %v3417 = vpop.f32.mrb[0].mxu0
        %v3418 = vadd.f32 0.0, %v3417
        %v3419 = vpop.f32.mrb[0].mxu0
        %3420 = vmatprep.mubr.f32.mxu0 %v2182
        %3421 = vmatmul.mubr.f32.gmra.mrb[0].mxu0 %v2323
        %v3422 = vpop.f32.mrb[0].mxu0
        %v3423 = vadd.f32 0.0, %v3422
        %v3424 = vpop.f32.mrb[0].mxu0
        %3425 = vmatprep.mubr.f32.mxu0 %v2183
        %3426 = vmatmul.mubr.f32.gmra.mrb[0].mxu0 %v2251
        %v3427 = vpop.f32.mrb[0].mxu0
        %v3428 = vadd.f32 0.0, %v3427
        %v3429 = vpop.f32.mrb[0].mxu0
        %3430 = vmatprep.mubr.f32.mxu0 %v2184
        %3431 = vmatmul.mubr.f32.gmra.mrb[0].mxu0 %v2324
        %v3432 = vpop.f32.mrb[0].mxu0
        %v3433 = vadd.f32 0.0, %v3432
        %v3434 = vpop.f32.mrb[0].mxu0
        %3435 = vmatprep.mubr.f32.mxu0 %v2185
        %3436 = vmatmul.mubr.f32.gmra.mrb[0].mxu0 %v2254
        %v3437 = vpop.f32.mrb[0].mxu0
        %v3438 = vadd.f32 0.0, %v3437
        %v3439 = vpop.f32.mrb[0].mxu0
        %3440 = vmatprep.mubr.f32.mxu0 %v2186
        %3441 = vmatmul.mubr.f32.gmra.mrb[0].mxu0 %v2325
        %v3442 = vpop.f32.mrb[0].mxu0
        %v3443 = vadd.f32 0.0, %v3442
        %v3444 = vpop.f32.mrb[0].mxu0
        %3445 = vmatprep.mubr.f32.mxu0 %v2187
        %3446 = vmatmul.mubr.f32.gmra.mrb[0].mxu0 %v2257
        %v3447 = vpop.f32.mrb[0].mxu0
        %v3448 = vadd.f32 0.0, %v3447
        %v3449 = vpop.f32.mrb[0].mxu0
        %3450 = vmatprep.mubr.f32.mxu0 %v2188
        %3451 = vmatmul.mubr.f32.gmra.mrb[0].mxu0 %v2326
        %v3452 = vpop.f32.mrb[0].mxu0
        %v3453 = vadd.f32 0.0, %v3452
        %v3454 = vpop.f32.mrb[0].mxu0
        %3455 = vmatprep.mubr.f32.mxu0 %v2189
        %3456 = vmatmul.mubr.f32.gmra.mrb[0].mxu0 %v2260
        %v3457 = vpop.f32.mrb[0].mxu0
        %v3458 = vadd.f32 0.0, %v3457
        %v3459 = vpop.f32.mrb[0].mxu0
        %3460 = vmatprep.mubr.f32.mxu0 %v2190
        %3461 = vmatmul.mubr.f32.gmra.mrb[0].mxu0 %v2327
        %v3462 = vpop.f32.mrb[0].mxu0
        %v3463 = vadd.f32 0.0, %v3462
        %v3464 = vpop.f32.mrb[0].mxu0
        %3465 = vmatprep.mubr.f32.mxu0 %v2191
        %3466 = vmatmul.mubr.f32.gmra.mrb[0].mxu0 %v2263
        %v3467 = vpop.f32.mrb[0].mxu0
        %v3468 = vadd.f32 0.0, %v3467
        %v3469 = vpop.f32.mrb[0].mxu0
        %3470 = vmatprep.mubr.f32.mxu0 %v2192
        %3471 = vmatmul.mubr.f32.gmra.mrb[0].mxu0 %v2328
        %v3472 = vpop.f32.mrb[0].mxu0
        %v3473 = vadd.f32 0.0, %v3472
        %v3474 = vpop.f32.mrb[0].mxu0
        %3475 = vmatprep.mubr.f32.mxu0 %v2193
        %3476 = vmatmul.mubr.f32.gmra.mrb[0].mxu0 %v2266
        %v3477 = vpop.f32.mrb[0].mxu0
        %v3478 = vadd.f32 0.0, %v3477
        %v3479 = vpop.f32.mrb[0].mxu0
        %3480 = vmatprep.mubr.f32.mxu0 %v2194
        %3481 = vmatmul.mubr.f32.gmra.mrb[0].mxu0 %v2329
        %v3482 = vpop.f32.mrb[0].mxu0
        %v3483 = vadd.f32 0.0, %v3482
        %v3484 = vpop.f32.mrb[0].mxu0
        %3485 = vmatprep.mubr.f32.mxu0 %v2195
        %3486 = vmatmul.mubr.f32.gmra.mrb[0].mxu0 %v2269
        %v3487 = vpop.f32.mrb[0].mxu0
        %v3488 = vadd.f32 0.0, %v3487
        %v3489 = vpop.f32.mrb[0].mxu0
        %3490 = vmatprep.mubr.f32.mxu0 %v2196
        %3491 = vmatmul.mubr.f32.gmra.mrb[0].mxu0 %v2330
        %v3492 = vpop.f32.mrb[0].mxu0
        %v3493 = vadd.f32 0.0, %v3492
        %v3494 = vpop.f32.mrb[0].mxu0
        %3495 = vmatprep.mubr.f32.mxu0 %v2197
        %3496 = vmatmul.mubr.f32.gmra.mrb[0].mxu0 %v2272
        %v3497 = vpop.f32.mrb[0].mxu0
        %v3498 = vadd.f32 0.0, %v3497
        %v3499 = vpop.f32.mrb[0].mxu0
        %3500 = vmatprep.mubr.f32.mxu0 %v2198
        %3501 = vmatmul.mubr.f32.gmra.mrb[0].mxu0 %v2331
        %v3502 = vpop.f32.mrb[0].mxu0
        %v3503 = vadd.f32 0.0, %v3502
        %v3504 = vpop.f32.mrb[0].mxu0
        %3505 = vmatprep.mubr.f32.mxu0 %v2199
        %3506 = vmatmul.mubr.f32.gmra.mrb[0].mxu0 %v2275
        %v3507 = vpop.f32.mrb[0].mxu0
        %v3508 = vadd.f32 0.0, %v3507
        %v3509 = vpop.f32.mrb[0].mxu0
        %3510 = vmatprep.mubr.f32.mxu0 %v2200
        %3511 = vmatmul.mubr.f32.gmra.mrb[0].mxu0 %v2332
        %v3512 = vpop.f32.mrb[0].mxu0
        %v3513 = vadd.f32 0.0, %v3512
        %v3514 = vpop.f32.mrb[0].mxu0
        %3515 = vmatprep.mubr.f32.mxu0 %v2201
        %3516 = vmatmul.mubr.f32.gmra.mrb[0].mxu0 %v2278
        %v3517 = vpop.f32.mrb[0].mxu0
        %v3518 = vadd.f32 0.0, %v3517
        %v3519 = vpop.f32.mrb[0].mxu0
        %3520 = vmatprep.mubr.f32.mxu0 %v2202
        %3521 = vmatmul.mubr.f32.gmra.mrb[0].mxu0 %v2333
        %v3522 = vpop.f32.mrb[0].mxu0
        %v3523 = vadd.f32 0.0, %v3522
        %v3524 = vpop.f32.mrb[0].mxu0
        %3525 = vmatprep.mubr.f32.mxu0 %v2203
        %3526 = vmatmul.mubr.f32.gmra.mrb[0].mxu0 %v2281
        %v3527 = vpop.f32.mrb[0].mxu0
        %v3528 = vadd.f32 0.0, %v3527
        %v3529 = vpop.f32.mrb[0].mxu0
        %3530 = vmatprep.mubr.f32.mxu0 %v2204
        %3531 = vmatmul.mubr.f32.gmra.mrb[0].mxu0 %v2334
        %v3532 = vpop.f32.mrb[0].mxu0
        %v3533 = vadd.f32 0.0, %v3532
        %v3534 = vpop.f32.mrb[0].mxu0
        %3535 = vmatprep.mubr.f32.mxu0 %v2205
        %3536 = vmatmul.mubr.f32.gmra.mrb[0].mxu0 %v2284
        %v3537 = vpop.f32.mrb[0].mxu0
        %v3538 = vadd.f32 0.0, %v3537
        %v3539 = vpop.f32.mrb[0].mxu0
        %3540 = vmatprep.mubr.f32.mxu0 %v2206
        %3541 = vmatmul.mubr.f32.gmra.mrb[0].mxu0 %v2335
        %v3542 = vpop.f32.mrb[0].mxu0
        %v3543 = vadd.f32 0.0, %v3542
        %v3544 = vpop.f32.mrb[0].mxu0
        %3545 = vmatprep.mubr.f32.mxu0 %v2207
        %3546 = vmatmul.mubr.f32.gmra.mrb[0].mxu0 %v2287
        %v3547 = vpop.f32.mrb[0].mxu0
        %v3548 = vadd.f32 0.0, %v3547
        %v3549 = vpop.f32.mrb[0].mxu0
        %3550 = vdwg.mxu0
        %3551 = vmatprep.subr.mxu0 0.0
        %3552 = vmatpush1.msra.mxu0 %v420
        %3553 = vmatprep.subr.mxu0 0.0
        %3554 = vmatpush1.msra.mxu0 %v421
        %3555 = vmatprep.subr.mxu0 0.0
        %3556 = vmatpush1.msra.mxu0 %v422
        %3557 = vmatprep.subr.mxu0 0.0
        %3558 = vmatpush1.msra.mxu0 %v423
        %3559 = vmatprep.subr.mxu0 0.0
        %3560 = vmatpush1.msra.mxu0 %v424
        %3561 = vmatprep.subr.mxu0 0.0
        %3562 = vmatpush1.msra.mxu0 %v425
        %3563 = vmatprep.subr.mxu0 0.0
        %3564 = vmatpush1.msra.mxu0 %v426
        %3565 = vmatprep.subr.mxu0 0.0
        %3566 = vmatpush1.msra.mxu0 %v427
        %3567 = vmatprep.subr.mxu0 0.0
        %3568 = vmatpush1.msra.mxu0 %v428
        %3569 = vmatprep.subr.mxu0 0.0
        %3570 = vmatpush1.msra.mxu0 %v429
        %3571 = vmatprep.subr.mxu0 0.0
        %3572 = vmatpush1.msra.mxu0 %v430
        %3573 = vmatprep.subr.mxu0 0.0
        %3574 = vmatpush1.msra.mxu0 %v431
        %3575 = vmatprep.subr.mxu0 0.0
        %3576 = vmatpush1.msra.mxu0 %v432
        %3577 = vmatprep.subr.mxu0 0.0
        %3578 = vmatpush1.msra.mxu0 %v433
        %3579 = vmatprep.subr.mxu0 0.0
        %3580 = vmatpush1.msra.mxu0 %v434
        %3581 = vmatprep.subr.mxu0 0.0
        %3582 = vmatpush1.msra.mxu0 %v435
        %3583 = vmatprep.subr.mxu0 0.0
        %3584 = vmatpush1.msra.mxu0 0.0
        %3585 = vmatprep.subr.mxu0 0.0
        %3586 = vmatpush1.msra.mxu0 0.0
        %3587 = vmatprep.subr.mxu0 0.0
        %3588 = vmatpush1.msra.mxu0 0.0
        %3589 = vmatprep.subr.mxu0 0.0
        %3590 = vmatpush1.msra.mxu0 0.0
        %3591 = vmatprep.subr.mxu0 0.0
        %3592 = vmatpush1.msra.mxu0 0.0
        %3593 = vmatprep.subr.mxu0 0.0
        %3594 = vmatpush1.msra.mxu0 0.0
        %3595 = vmatprep.subr.mxu0 0.0
        %3596 = vmatpush1.msra.mxu0 0.0
        %3597 = vmatprep.subr.mxu0 0.0
        %3598 = vmatpush1.msra.mxu0 0.0
        %3599 = vmatprep.subr.mxu0 0.0
        %3600 = vmatpush1.msra.mxu0 0.0
        %3601 = vmatprep.subr.mxu0 0.0
        %3602 = vmatpush1.msra.mxu0 0.0
        %3603 = vmatprep.subr.mxu0 0.0
        %3604 = vmatpush1.msra.mxu0 0.0
        %3605 = vmatprep.subr.mxu0 0.0
        %3606 = vmatpush1.msra.mxu0 0.0
        %3607 = vmatprep.subr.mxu0 0.0
        %3608 = vmatpush1.msra.mxu0 0.0
        %3609 = vmatprep.subr.mxu0 0.0
        %3610 = vmatpush1.msra.mxu0 0.0
        %3611 = vmatprep.subr.mxu0 0.0
        %3612 = vmatpush1.msra.mxu0 0.0
        %3613 = vmatprep.subr.mxu0 0.0
        %3614 = vmatpush1.msra.mxu0 0.0
        %3615 = vmatprep.mubr.f32.mxu0 0.0
        %3616 = vmatmul.mubr.f32.gmra.mrb[0].mxu0 %v2338
        %v3617 = vpop.f32.mrb[0].mxu0
        %v3618 = vpop.f32.mrb[0].mxu0
        %3619 = vmatprep.mubr.f32.mxu0 0.0
        %3620 = vmatmul.mubr.f32.gmra.mrb[0].mxu0 %v2416
        %v3621 = vpop.f32.mrb[0].mxu0
        %v3622 = vpop.f32.mrb[0].mxu0
        %3623 = vmatprep.mubr.f32.mxu0 0.0
        %3624 = vmatmul.mubr.f32.gmra.mrb[0].mxu0 %v2341
        %v3625 = vpop.f32.mrb[0].mxu0
        %v3626 = vadd.f32 %v3403, %v3625
        %v3627 = vpop.f32.mrb[0].mxu0
        %3628 = vmatprep.mubr.f32.mxu0 0.0
        %3629 = vmatmul.mubr.f32.gmra.mrb[0].mxu0 %v2417
        %v3630 = vpop.f32.mrb[0].mxu0
        %v3631 = vadd.f32 %v3408, %v3630
        %v3632 = vpop.f32.mrb[0].mxu0
        %3633 = vmatprep.mubr.f32.mxu0 0.0
        %3634 = vmatmul.mubr.f32.gmra.mrb[0].mxu0 %v2344
        %v3635 = vpop.f32.mrb[0].mxu0
        %v3636 = vadd.f32 %v3413, %v3635
        %v3637 = vpop.f32.mrb[0].mxu0
        %3638 = vmatprep.mubr.f32.mxu0 0.0
        %3639 = vmatmul.mubr.f32.gmra.mrb[0].mxu0 %v2418
        %v3640 = vpop.f32.mrb[0].mxu0
        %v3641 = vadd.f32 %v3418, %v3640
        %v3642 = vpop.f32.mrb[0].mxu0
        %3643 = vmatprep.mubr.f32.mxu0 0.0
        %3644 = vmatmul.mubr.f32.gmra.mrb[0].mxu0 %v2347
        %v3645 = vpop.f32.mrb[0].mxu0
        %v3646 = vadd.f32 %v3423, %v3645
        %v3647 = vpop.f32.mrb[0].mxu0
        %3648 = vmatprep.mubr.f32.mxu0 0.0
        %3649 = vmatmul.mubr.f32.gmra.mrb[0].mxu0 %v2419
        %v3650 = vpop.f32.mrb[0].mxu0
        %v3651 = vadd.f32 %v3428, %v3650
        %v3652 = vpop.f32.mrb[0].mxu0
        %3653 = vmatprep.mubr.f32.mxu0 0.0
        %3654 = vmatmul.mubr.f32.gmra.mrb[0].mxu0 %v2350
        %v3655 = vpop.f32.mrb[0].mxu0
        %v3656 = vadd.f32 %v3433, %v3655
        %v3657 = vpop.f32.mrb[0].mxu0
        %3658 = vmatprep.mubr.f32.mxu0 0.0
        %3659 = vmatmul.mubr.f32.gmra.mrb[0].mxu0 %v2420
        %v3660 = vpop.f32.mrb[0].mxu0
        %v3661 = vadd.f32 %v3438, %v3660
        %v3662 = vpop.f32.mrb[0].mxu0
        %3663 = vmatprep.mubr.f32.mxu0 0.0
        %3664 = vmatmul.mubr.f32.gmra.mrb[0].mxu0 %v2353
        %v3665 = vpop.f32.mrb[0].mxu0
        %v3666 = vadd.f32 %v3443, %v3665
        %v3667 = vpop.f32.mrb[0].mxu0
        %3668 = vmatprep.mubr.f32.mxu0 0.0
        %3669 = vmatmul.mubr.f32.gmra.mrb[0].mxu0 %v2421
        %v3670 = vpop.f32.mrb[0].mxu0
        %v3671 = vadd.f32 %v3448, %v3670
        %v3672 = vpop.f32.mrb[0].mxu0
        %3673 = vmatprep.mubr.f32.mxu0 0.0
        %3674 = vmatmul.mubr.f32.gmra.mrb[0].mxu0 %v2356
        %v3675 = vpop.f32.mrb[0].mxu0
        %v3676 = vadd.f32 %v3453, %v3675
        %v3677 = vpop.f32.mrb[0].mxu0
        %3678 = vmatprep.mubr.f32.mxu0 0.0
        %3679 = vmatmul.mubr.f32.gmra.mrb[0].mxu0 %v2422
        %v3680 = vpop.f32.mrb[0].mxu0
        %v3681 = vadd.f32 %v3458, %v3680
        %v3682 = vpop.f32.mrb[0].mxu0
        %3683 = vmatprep.mubr.f32.mxu0 0.0
        %3684 = vmatmul.mubr.f32.gmra.mrb[0].mxu0 %v2359
        %v3685 = vpop.f32.mrb[0].mxu0
        %v3686 = vadd.f32 %v3463, %v3685
        %v3687 = vpop.f32.mrb[0].mxu0
        %3688 = vmatprep.mubr.f32.mxu0 0.0
        %3689 = vmatmul.mubr.f32.gmra.mrb[0].mxu0 %v2423
        %v3690 = vpop.f32.mrb[0].mxu0
        %v3691 = vadd.f32 %v3468, %v3690
        %v3692 = vpop.f32.mrb[0].mxu0
        %3693 = vmatprep.mubr.f32.mxu0 0.0
        %3694 = vmatmul.mubr.f32.gmra.mrb[0].mxu0 %v2362
        %v3695 = vpop.f32.mrb[0].mxu0
        %v3696 = vadd.f32 %v3473, %v3695
        %v3697 = vpop.f32.mrb[0].mxu0
        %3698 = vmatprep.mubr.f32.mxu0 0.0
        %3699 = vmatmul.mubr.f32.gmra.mrb[0].mxu0 %v2424
        %v3700 = vpop.f32.mrb[0].mxu0
        %v3701 = vadd.f32 %v3478, %v3700
        %v3702 = vpop.f32.mrb[0].mxu0
        %3703 = vmatprep.mubr.f32.mxu0 0.0
        %3704 = vmatmul.mubr.f32.gmra.mrb[0].mxu0 %v2365
        %v3705 = vpop.f32.mrb[0].mxu0
        %v3706 = vadd.f32 %v3483, %v3705
        %v3707 = vpop.f32.mrb[0].mxu0
        %3708 = vmatprep.mubr.f32.mxu0 0.0
        %3709 = vmatmul.mubr.f32.gmra.mrb[0].mxu0 %v2425
        %v3710 = vpop.f32.mrb[0].mxu0
        %v3711 = vadd.f32 %v3488, %v3710
        %v3712 = vpop.f32.mrb[0].mxu0
        %3713 = vmatprep.mubr.f32.mxu0 0.0
        %3714 = vmatmul.mubr.f32.gmra.mrb[0].mxu0 %v2368
        %v3715 = vpop.f32.mrb[0].mxu0
        %v3716 = vadd.f32 %v3493, %v3715
        %v3717 = vpop.f32.mrb[0].mxu0
        %3718 = vmatprep.mubr.f32.mxu0 0.0
        %3719 = vmatmul.mubr.f32.gmra.mrb[0].mxu0 %v2426
        %v3720 = vpop.f32.mrb[0].mxu0
        %v3721 = vadd.f32 %v3498, %v3720
        %v3722 = vpop.f32.mrb[0].mxu0
        %3723 = vmatprep.mubr.f32.mxu0 0.0
        %3724 = vmatmul.mubr.f32.gmra.mrb[0].mxu0 %v2371
        %v3725 = vpop.f32.mrb[0].mxu0
        %v3726 = vadd.f32 %v3503, %v3725
        %v3727 = vpop.f32.mrb[0].mxu0
        %3728 = vmatprep.mubr.f32.mxu0 0.0
        %3729 = vmatmul.mubr.f32.gmra.mrb[0].mxu0 %v2427
        %v3730 = vpop.f32.mrb[0].mxu0
        %v3731 = vadd.f32 %v3508, %v3730
        %v3732 = vpop.f32.mrb[0].mxu0
        %3733 = vmatprep.mubr.f32.mxu0 0.0
        %3734 = vmatmul.mubr.f32.gmra.mrb[0].mxu0 %v2374
        %v3735 = vpop.f32.mrb[0].mxu0
        %v3736 = vadd.f32 %v3513, %v3735
        %v3737 = vpop.f32.mrb[0].mxu0
        %3738 = vmatprep.mubr.f32.mxu0 0.0
        %3739 = vmatmul.mubr.f32.gmra.mrb[0].mxu0 %v2428
        %v3740 = vpop.f32.mrb[0].mxu0
        %v3741 = vadd.f32 %v3518, %v3740
        %v3742 = vpop.f32.mrb[0].mxu0
        %3743 = vmatprep.mubr.f32.mxu0 0.0
        %3744 = vmatmul.mubr.f32.gmra.mrb[0].mxu0 %v2377
        %v3745 = vpop.f32.mrb[0].mxu0
        %v3746 = vadd.f32 %v3523, %v3745
        %v3747 = vpop.f32.mrb[0].mxu0
        %3748 = vmatprep.mubr.f32.mxu0 0.0
        %3749 = vmatmul.mubr.f32.gmra.mrb[0].mxu0 %v2429
        %v3750 = vpop.f32.mrb[0].mxu0
        %v3751 = vadd.f32 %v3528, %v3750
        %v3752 = vpop.f32.mrb[0].mxu0
        %3753 = vmatprep.mubr.f32.mxu0 0.0
        %3754 = vmatmul.mubr.f32.gmra.mrb[0].mxu0 %v2380
        %v3755 = vpop.f32.mrb[0].mxu0
        %v3756 = vadd.f32 %v3533, %v3755
        %v3757 = vpop.f32.mrb[0].mxu0
        %3758 = vmatprep.mubr.f32.mxu0 0.0
        %3759 = vmatmul.mubr.f32.gmra.mrb[0].mxu0 %v2430
        %v3760 = vpop.f32.mrb[0].mxu0
        %v3761 = vadd.f32 %v3538, %v3760
        %v3762 = vpop.f32.mrb[0].mxu0
        %3763 = vmatprep.mubr.f32.mxu0 0.0
        %3764 = vmatmul.mubr.f32.gmra.mrb[0].mxu0 %v2383
        %v3765 = vpop.f32.mrb[0].mxu0
        %v3766 = vadd.f32 %v3543, %v3765
        %v3767 = vpop.f32.mrb[0].mxu0
        %3768 = vmatprep.mubr.f32.mxu0 0.0
        %3769 = vmatmul.mubr.f32.gmra.mrb[0].mxu0 %v2431
        %v3770 = vpop.f32.mrb[0].mxu0
        %v3771 = vadd.f32 %v3548, %v3770
        %v3772 = vpop.f32.mrb[0].mxu0
        %3773 = vdwg.mxu0
        %v3774 = vadd.f32 %v3170, 0.0
        %v3775 = vadd.f32 %v3175, 0.0
        %v3776 = vadd.f32 %v3180, %v2722
        %v3777 = vadd.f32 %v3185, %v2727
        %v3778 = vadd.f32 %v3190, %v2732
        %v3779 = vadd.f32 %v3195, %v2737
        %v3780 = vadd.f32 %v3200, %v2742
        %v3781 = vadd.f32 %v3205, %v2747
        %v3782 = vadd.f32 %v3210, %v2752
        %v3783 = vadd.f32 %v3215, %v2757
        %v3784 = vadd.f32 %v3220, %v2762
        %v3785 = vadd.f32 %v3225, %v2767
        %v3786 = vadd.f32 %v3230, %v2772
        %v3787 = vadd.f32 %v3235, %v2777
        %v3788 = vadd.f32 %v3240, %v2782
        %v3789 = vadd.f32 %v3245, %v2787
        %v3790 = vadd.f32 %v3250, %v2792
        %v3791 = vadd.f32 %v3255, %v2797
        %v3792 = vadd.f32 %v3260, %v2802
        %v3793 = vadd.f32 %v3265, %v2807
        %v3794 = vadd.f32 %v3270, %v2812
        %v3795 = vadd.f32 %v3275, %v2817
        %v3796 = vadd.f32 %v3280, %v2822
        %v3797 = vadd.f32 %v3285, %v2827
        %v3798 = vadd.f32 %v3290, %v2832
        %v3799 = vadd.f32 %v3295, %v2837
        %v3800 = vadd.f32 %v3300, %v2842
        %v3801 = vadd.f32 %v3305, %v2847
        %v3802 = vadd.f32 %v3310, %v2852
        %v3803 = vadd.f32 %v3315, %v2857
        %v3804 = vadd.f32 %v3320, %v2862
        %v3805 = vadd.f32 %v3325, %v2867
        %v3806 = vadd.f32 %v3774, %v3626
        %v3807 = vadd.f32 %v3775, %v3631
        %v3808 = vadd.f32 %v3776, %v3636
        %v3809 = vadd.f32 %v3777, %v3641
        %v3810 = vadd.f32 %v3778, %v3646
        %v3811 = vadd.f32 %v3779, %v3651
        %v3812 = vadd.f32 %v3780, %v3656
        %v3813 = vadd.f32 %v3781, %v3661
        %v3814 = vadd.f32 %v3782, %v3666
        %v3815 = vadd.f32 %v3783, %v3671
        %v3816 = vadd.f32 %v3784, %v3676
        %v3817 = vadd.f32 %v3785, %v3681
        %v3818 = vadd.f32 %v3786, %v3686
        %v3819 = vadd.f32 %v3787, %v3691
        %v3820 = vadd.f32 %v3788, %v3696
        %v3821 = vadd.f32 %v3789, %v3701
        %v3822 = vadd.f32 %v3790, %v3706
        %v3823 = vadd.f32 %v3791, %v3711
        %v3824 = vadd.f32 %v3792, %v3716
        %v3825 = vadd.f32 %v3793, %v3721
        %v3826 = vadd.f32 %v3794, %v3726
        %v3827 = vadd.f32 %v3795, %v3731
        %v3828 = vadd.f32 %v3796, %v3736
        %v3829 = vadd.f32 %v3797, %v3741
        %v3830 = vadd.f32 %v3798, %v3746
        %v3831 = vadd.f32 %v3799, %v3751
        %v3832 = vadd.f32 %v3800, %v3756
        %v3833 = vadd.f32 %v3801, %v3761
        %v3834 = vadd.f32 %v3802, %v3766
        %v3835 = vadd.f32 %v3803, %v3771
        %v3836 = vadd.f32 %v3804, 0.0
        %v3837 = vadd.f32 %v3805, 0.0
        %v3838 = vmul.f32 %v3806, %v2072
        %v3839 = vmul.f32 %v3807, %v2072
        %v3840 = vmul.f32 %v3808, %v2072
        %v3841 = vmul.f32 %v3809, %v2072
        %v3842 = vmul.f32 %v3810, %v2072
        %v3843 = vmul.f32 %v3811, %v2072
        %v3844 = vmul.f32 %v3812, %v2072
        %v3845 = vmul.f32 %v3813, %v2072
        %v3846 = vmul.f32 %v3814, %v2072
        %v3847 = vmul.f32 %v3815, %v2072
        %v3848 = vmul.f32 %v3816, %v2072
        %v3849 = vmul.f32 %v3817, %v2072
        %v3850 = vmul.f32 %v3818, %v2072
        %v3851 = vmul.f32 %v3819, %v2072
        %v3852 = vmul.f32 %v3820, %v2072
        %v3853 = vmul.f32 %v3821, %v2072
        %v3854 = vmul.f32 %v3822, %v2072
        %v3855 = vmul.f32 %v3823, %v2072
        %v3856 = vmul.f32 %v3824, %v2072
        %v3857 = vmul.f32 %v3825, %v2072
        %v3858 = vmul.f32 %v3826, %v2072
        %v3859 = vmul.f32 %v3827, %v2072
        %v3860 = vmul.f32 %v3828, %v2072
        %v3861 = vmul.f32 %v3829, %v2072
        %v3862 = vmul.f32 %v3830, %v2072
        %v3863 = vmul.f32 %v3831, %v2072
        %v3864 = vmul.f32 %v3832, %v2072
        %v3865 = vmul.f32 %v3833, %v2072
        %v3866 = vmul.f32 %v3834, %v2072
        %v3867 = vmul.f32 %v3835, %v2072
        %v3868 = vmul.f32 %v3836, %v2072
        %v3869 = vmul.f32 %v3837, %v2072
        %v3870 = vadd.f32 %v3838, %v2110
        %v3871 = vadd.f32 %v3839, %v2110
        %v3872 = vadd.f32 %v3840, %v2110
        %v3873 = vadd.f32 %v3841, %v2110
        %v3874 = vadd.f32 %v3842, %v2110
        %v3875 = vadd.f32 %v3843, %v2110
        %v3876 = vadd.f32 %v3844, %v2110
        %v3877 = vadd.f32 %v3845, %v2110
        %v3878 = vadd.f32 %v3846, %v2110
        %v3879 = vadd.f32 %v3847, %v2110
        %v3880 = vadd.f32 %v3848, %v2110
        %v3881 = vadd.f32 %v3849, %v2110
        %v3882 = vadd.f32 %v3850, %v2110
        %v3883 = vadd.f32 %v3851, %v2110
        %v3884 = vadd.f32 %v3852, %v2110
        %v3885 = vadd.f32 %v3853, %v2110
        %v3886 = vadd.f32 %v3854, %v2110
        %v3887 = vadd.f32 %v3855, %v2110
        %v3888 = vadd.f32 %v3856, %v2110
        %v3889 = vadd.f32 %v3857, %v2110
        %v3890 = vadd.f32 %v3858, %v2110
        %v3891 = vadd.f32 %v3859, %v2110
        %v3892 = vadd.f32 %v3860, %v2110
        %v3893 = vadd.f32 %v3861, %v2110
        %v3894 = vadd.f32 %v3862, %v2110
        %v3895 = vadd.f32 %v3863, %v2110
        %v3896 = vadd.f32 %v3864, %v2110
        %v3897 = vadd.f32 %v3865, %v2110
        %v3898 = vadd.f32 %v3866, %v2110
        %v3899 = vadd.f32 %v3867, %v2110
        %v3900 = vadd.f32 %v3868, %v2110
        %v3901 = vadd.f32 %v3869, %v2110
        %v3902 = vmax.f32 %v3870, 0.0
        %v3903 = vmax.f32 %v3871, 0.0
        %v3904 = vmax.f32 %v3872, 0.0
        %v3905 = vmax.f32 %v3873, 0.0
        %v3906 = vmax.f32 %v3874, 0.0
        %v3907 = vmax.f32 %v3875, 0.0
        %v3908 = vmax.f32 %v3876, 0.0
        %v3909 = vmax.f32 %v3877, 0.0
        %v3910 = vmax.f32 %v3878, 0.0
        %v3911 = vmax.f32 %v3879, 0.0
        %v3912 = vmax.f32 %v3880, 0.0
        %v3913 = vmax.f32 %v3881, 0.0
        %v3914 = vmax.f32 %v3882, 0.0
        %v3915 = vmax.f32 %v3883, 0.0
        %v3916 = vmax.f32 %v3884, 0.0
        %v3917 = vmax.f32 %v3885, 0.0
        %v3918 = vmax.f32 %v3886, 0.0
        %v3919 = vmax.f32 %v3887, 0.0
        %v3920 = vmax.f32 %v3888, 0.0
        %v3921 = vmax.f32 %v3889, 0.0
        %v3922 = vmax.f32 %v3890, 0.0
        %v3923 = vmax.f32 %v3891, 0.0
        %v3924 = vmax.f32 %v3892, 0.0
        %v3925 = vmax.f32 %v3893, 0.0
        %v3926 = vmax.f32 %v3894, 0.0
        %v3927 = vmax.f32 %v3895, 0.0
        %v3928 = vmax.f32 %v3896, 0.0
        %v3929 = vmax.f32 %v3897, 0.0
        %v3930 = vmax.f32 %v3898, 0.0
        %v3931 = vmax.f32 %v3899, 0.0
        %v3932 = vmax.f32 %v3900, 0.0
        %v3933 = vmax.f32 %v3901, 0.0
        %v3934 = vadd.f32 %v256, %v3902
        %v3935 = vadd.f32 %v257, %v3903
        %v3936 = vadd.f32 %v258, %v3904
        %v3937 = vadd.f32 %v259, %v3905
        %v3938 = vadd.f32 %v260, %v3906
        %v3939 = vadd.f32 %v261, %v3907
        %v3940 = vadd.f32 %v262, %v3908
        %v3941 = vadd.f32 %v263, %v3909
        %v3942 = vadd.f32 %v264, %v3910
        %v3943 = vadd.f32 %v265, %v3911
        %v3944 = vadd.f32 %v266, %v3912
        %v3945 = vadd.f32 %v267, %v3913
        %v3946 = vadd.f32 %v268, %v3914
        %v3947 = vadd.f32 %v269, %v3915
        %v3948 = vadd.f32 %v270, %v3916
        %v3949 = vadd.f32 %v271, %v3917
        %v3950 = vadd.f32 %v272, %v3918
        %v3951 = vadd.f32 %v273, %v3919
        %v3952 = vadd.f32 %v274, %v3920
        %v3953 = vadd.f32 %v275, %v3921
        %v3954 = vadd.f32 %v276, %v3922
        %v3955 = vadd.f32 %v277, %v3923
        %v3956 = vadd.f32 %v278, %v3924
        %v3957 = vadd.f32 %v279, %v3925
        %v3958 = vadd.f32 %v280, %v3926
        %v3959 = vadd.f32 %v281, %v3927
        %v3960 = vadd.f32 %v282, %v3928
        %v3961 = vadd.f32 %v283, %v3929
        %v3962 = vadd.f32 %v284, %v3930
        %v3963 = vadd.f32 %v285, %v3931
        %v3964 = vadd.f32 %v286, %v3932
        %v3965 = vadd.f32 %v287, %v3933
        %v3998 = vrot.slane %v3934, 7
        %v3999 = vrot.slane %v3935, 7
        %v4000 = vsel %vm468, %v3998, %v3999
        %v4001 = vrot.slane %v3936, 7
        %v4002 = vrot.slane %v3937, 7
        %v4003 = vsel %vm468, %v4001, %v4002
        %v4004 = vrot.slane %v3938, 7
        %v4005 = vrot.slane %v3939, 7
        %v4006 = vsel %vm468, %v4004, %v4005
        %v4007 = vrot.slane %v3940, 7
        %v4008 = vrot.slane %v3941, 7
        %v4009 = vsel %vm468, %v4007, %v4008
        %v4010 = vrot.slane %v3942, 7
        %v4011 = vrot.slane %v3943, 7
        %v4012 = vsel %vm468, %v4010, %v4011
        %v4013 = vrot.slane %v3944, 7
        %v4014 = vrot.slane %v3945, 7
        %v4015 = vsel %vm468, %v4013, %v4014
        %v4016 = vrot.slane %v3946, 7
        %v4017 = vrot.slane %v3947, 7
        %v4018 = vsel %vm468, %v4016, %v4017
        %v4019 = vrot.slane %v3948, 7
        %v4020 = vrot.slane %v3949, 7
        %v4021 = vsel %vm468, %v4019, %v4020
        %v4022 = vrot.slane %v3950, 7
        %v4023 = vrot.slane %v3951, 7
        %v4024 = vsel %vm468, %v4022, %v4023
        %v4025 = vrot.slane %v3952, 7
        %v4026 = vrot.slane %v3953, 7
        %v4027 = vsel %vm468, %v4025, %v4026
        %v4028 = vrot.slane %v3954, 7
        %v4029 = vrot.slane %v3955, 7
        %v4030 = vsel %vm468, %v4028, %v4029
        %v4031 = vrot.slane %v3956, 7
        %v4032 = vrot.slane %v3957, 7
        %v4033 = vsel %vm468, %v4031, %v4032
        %v4034 = vrot.slane %v3958, 7
        %v4035 = vrot.slane %v3959, 7
        %v4036 = vsel %vm468, %v4034, %v4035
        %v4037 = vrot.slane %v3960, 7
        %v4038 = vrot.slane %v3961, 7
        %v4039 = vsel %vm468, %v4037, %v4038
        %v4040 = vrot.slane %v3962, 7
        %v4041 = vrot.slane %v3963, 7
        %v4042 = vsel %vm468, %v4040, %v4041
        %v4043 = vrot.slane %v3964, 7
        %v4044 = vrot.slane %v3965, 7
        %v4045 = vsel %vm468, %v4043, %v4044
        %v4078 = vsel %vm468, 0.0, %v3998
        %v4079 = vsel %vm468, 0.0, %v4001
        %v4080 = vsel %vm468, 0.0, %v4004
        %v4081 = vsel %vm468, 0.0, %v4007
        %v4082 = vsel %vm468, 0.0, %v4010
        %v4083 = vsel %vm468, 0.0, %v4013
        %v4084 = vsel %vm468, 0.0, %v4016
        %v4085 = vsel %vm468, 0.0, %v4019
        %v4086 = vsel %vm468, 0.0, %v4022
        %v4087 = vsel %vm468, 0.0, %v4025
        %v4088 = vsel %vm468, 0.0, %v4028
        %v4089 = vsel %vm468, 0.0, %v4031
        %v4090 = vsel %vm468, 0.0, %v4034
        %v4091 = vsel %vm468, 0.0, %v4037
        %v4092 = vsel %vm468, 0.0, %v4040
        %v4093 = vsel %vm468, 0.0, %v4043
        %v4094 = vrot.slane %v3934, 1
        %v4095 = vrot.slane %v3935, 1
        %v4096 = vsel %vm565, %v4094, %v4095
        %v4097 = vrot.slane %v3936, 1
        %v4098 = vrot.slane %v3937, 1
        %v4099 = vsel %vm565, %v4097, %v4098
        %v4100 = vrot.slane %v3938, 1
        %v4101 = vrot.slane %v3939, 1
        %v4102 = vsel %vm565, %v4100, %v4101
        %v4103 = vrot.slane %v3940, 1
        %v4104 = vrot.slane %v3941, 1
        %v4105 = vsel %vm565, %v4103, %v4104
        %v4106 = vrot.slane %v3942, 1
        %v4107 = vrot.slane %v3943, 1
        %v4108 = vsel %vm565, %v4106, %v4107
        %v4109 = vrot.slane %v3944, 1
        %v4110 = vrot.slane %v3945, 1
        %v4111 = vsel %vm565, %v4109, %v4110
        %v4112 = vrot.slane %v3946, 1
        %v4113 = vrot.slane %v3947, 1
        %v4114 = vsel %vm565, %v4112, %v4113
        %v4115 = vrot.slane %v3948, 1
        %v4116 = vrot.slane %v3949, 1
        %v4117 = vsel %vm565, %v4115, %v4116
        %v4118 = vrot.slane %v3950, 1
        %v4119 = vrot.slane %v3951, 1
        %v4120 = vsel %vm565, %v4118, %v4119
        %v4121 = vrot.slane %v3952, 1
        %v4122 = vrot.slane %v3953, 1
        %v4123 = vsel %vm565, %v4121, %v4122
        %v4124 = vrot.slane %v3954, 1
        %v4125 = vrot.slane %v3955, 1
        %v4126 = vsel %vm565, %v4124, %v4125
        %v4127 = vrot.slane %v3956, 1
        %v4128 = vrot.slane %v3957, 1
        %v4129 = vsel %vm565, %v4127, %v4128
        %v4130 = vrot.slane %v3958, 1
        %v4131 = vrot.slane %v3959, 1
        %v4132 = vsel %vm565, %v4130, %v4131
        %v4133 = vrot.slane %v3960, 1
        %v4134 = vrot.slane %v3961, 1
        %v4135 = vsel %vm565, %v4133, %v4134
        %v4136 = vrot.slane %v3962, 1
        %v4137 = vrot.slane %v3963, 1
        %v4138 = vsel %vm565, %v4136, %v4137
        %v4139 = vrot.slane %v3964, 1
        %v4140 = vrot.slane %v3965, 1
        %v4141 = vsel %vm565, %v4139, %v4140
        %v4174 = vsel %vm565, %v4095, 0.0
        %v4175 = vsel %vm565, %v4098, 0.0
        %v4176 = vsel %vm565, %v4101, 0.0
        %v4177 = vsel %vm565, %v4104, 0.0
        %v4178 = vsel %vm565, %v4107, 0.0
        %v4179 = vsel %vm565, %v4110, 0.0
        %v4180 = vsel %vm565, %v4113, 0.0
        %v4181 = vsel %vm565, %v4116, 0.0
        %v4182 = vsel %vm565, %v4119, 0.0
        %v4183 = vsel %vm565, %v4122, 0.0
        %v4184 = vsel %vm565, %v4125, 0.0
        %v4185 = vsel %vm565, %v4128, 0.0
        %v4186 = vsel %vm565, %v4131, 0.0
        %v4187 = vsel %vm565, %v4134, 0.0
        %v4188 = vsel %vm565, %v4137, 0.0
        %v4189 = vsel %vm565, %v4140, 0.0
        %4190 = vmatprep.subr.mxu0 0.0
        %4191 = vmatpush1.msra.mxu0 %v290
        %4192 = vmatprep.subr.mxu0 0.0
        %4193 = vmatpush1.msra.mxu0 %v291
        %4194 = vmatprep.subr.mxu0 0.0
        %4195 = vmatpush1.msra.mxu0 %v292
        %4196 = vmatprep.subr.mxu0 0.0
        %4197 = vmatpush1.msra.mxu0 %v293
        %4198 = vmatprep.subr.mxu0 0.0
        %4199 = vmatpush1.msra.mxu0 %v294
        %4200 = vmatprep.subr.mxu0 0.0
        %4201 = vmatpush1.msra.mxu0 %v295
        %4202 = vmatprep.subr.mxu0 0.0
        %4203 = vmatpush1.msra.mxu0 %v296
        %4204 = vmatprep.subr.mxu0 0.0
        %4205 = vmatpush1.msra.mxu0 %v297
        %4206 = vmatprep.subr.mxu0 0.0
        %4207 = vmatpush1.msra.mxu0 %v298
        %4208 = vmatprep.subr.mxu0 0.0
        %4209 = vmatpush1.msra.mxu0 %v299
        %4210 = vmatprep.subr.mxu0 0.0
        %4211 = vmatpush1.msra.mxu0 %v300
        %4212 = vmatprep.subr.mxu0 0.0
        %4213 = vmatpush1.msra.mxu0 %v301
        %4214 = vmatprep.subr.mxu0 0.0
        %4215 = vmatpush1.msra.mxu0 %v302
        %4216 = vmatprep.subr.mxu0 0.0
        %4217 = vmatpush1.msra.mxu0 %v303
        %4218 = vmatprep.subr.mxu0 0.0
        %4219 = vmatpush1.msra.mxu0 %v304
        %4220 = vmatprep.subr.mxu0 0.0
        %4221 = vmatpush1.msra.mxu0 %v305
        %4222 = vmatprep.subr.mxu0 0.0
        %4223 = vmatpush1.msra.mxu0 %v306
        %4224 = vmatprep.subr.mxu0 0.0
        %4225 = vmatpush1.msra.mxu0 %v307
        %4226 = vmatprep.subr.mxu0 0.0
        %4227 = vmatpush1.msra.mxu0 %v308
        %4228 = vmatprep.subr.mxu0 0.0
        %4229 = vmatpush1.msra.mxu0 %v309
        %4230 = vmatprep.subr.mxu0 0.0
        %4231 = vmatpush1.msra.mxu0 %v310
        %4232 = vmatprep.subr.mxu0 0.0
        %4233 = vmatpush1.msra.mxu0 %v311
        %4234 = vmatprep.subr.mxu0 0.0
        %4235 = vmatpush1.msra.mxu0 %v312
        %4236 = vmatprep.subr.mxu0 0.0
        %4237 = vmatpush1.msra.mxu0 %v313
        %4238 = vmatprep.subr.mxu0 0.0
        %4239 = vmatpush1.msra.mxu0 %v314
        %4240 = vmatprep.subr.mxu0 0.0
        %4241 = vmatpush1.msra.mxu0 %v315
        %4242 = vmatprep.subr.mxu0 0.0
        %4243 = vmatpush1.msra.mxu0 %v316
        %4244 = vmatprep.subr.mxu0 0.0
        %4245 = vmatpush1.msra.mxu0 %v317
        %4246 = vmatprep.subr.mxu0 0.0
        %4247 = vmatpush1.msra.mxu0 %v318
        %4248 = vmatprep.subr.mxu0 0.0
        %4249 = vmatpush1.msra.mxu0 %v319
        %4250 = vmatprep.subr.mxu0 0.0
        %4251 = vmatpush1.msra.mxu0 %v320
        %4252 = vmatprep.subr.mxu0 0.0
        %4253 = vmatpush1.msra.mxu0 %v321
        %4254 = vmatprep.mubr.f32.mxu0 %v3934
        %4255 = vmatmul.mubr.f32.gmra.mrb[0].mxu0 %v4078
        %v4256 = vpop.f32.mrb[0].mxu0
        %v4257 = vadd.f32 0.0, %v4256
        %v4258 = vpop.f32.mrb[0].mxu0
        %4259 = vmatprep.mubr.f32.mxu0 %v3935
        %4260 = vmatmul.mubr.f32.gmra.mrb[0].mxu0 %v4000
        %v4261 = vpop.f32.mrb[0].mxu0
        %v4262 = vadd.f32 0.0, %v4261
        %v4263 = vpop.f32.mrb[0].mxu0
        %4264 = vmatprep.mubr.f32.mxu0 %v3936
        %4265 = vmatmul.mubr.f32.gmra.mrb[0].mxu0 %v4079
        %v4266 = vpop.f32.mrb[0].mxu0
        %v4267 = vadd.f32 0.0, %v4266
        %v4268 = vpop.f32.mrb[0].mxu0
        %4269 = vmatprep.mubr.f32.mxu0 %v3937
        %4270 = vmatmul.mubr.f32.gmra.mrb[0].mxu0 %v4003
        %v4271 = vpop.f32.mrb[0].mxu0
        %v4272 = vadd.f32 0.0, %v4271
        %v4273 = vpop.f32.mrb[0].mxu0
        %4274 = vmatprep.mubr.f32.mxu0 %v3938
        %4275 = vmatmul.mubr.f32.gmra.mrb[0].mxu0 %v4080
        %v4276 = vpop.f32.mrb[0].mxu0
        %v4277 = vadd.f32 0.0, %v4276
        %v4278 = vpop.f32.mrb[0].mxu0
        %4279 = vmatprep.mubr.f32.mxu0 %v3939
        %4280 = vmatmul.mubr.f32.gmra.mrb[0].mxu0 %v4006
        %v4281 = vpop.f32.mrb[0].mxu0
        %v4282 = vadd.f32 0.0, %v4281
        %v4283 = vpop.f32.mrb[0].mxu0
        %4284 = vmatprep.mubr.f32.mxu0 %v3940
        %4285 = vmatmul.mubr.f32.gmra.mrb[0].mxu0 %v4081
        %v4286 = vpop.f32.mrb[0].mxu0
        %v4287 = vadd.f32 0.0, %v4286
        %v4288 = vpop.f32.mrb[0].mxu0
        %4289 = vmatprep.mubr.f32.mxu0 %v3941
        %4290 = vmatmul.mubr.f32.gmra.mrb[0].mxu0 %v4009
        %v4291 = vpop.f32.mrb[0].mxu0
        %v4292 = vadd.f32 0.0, %v4291
        %v4293 = vpop.f32.mrb[0].mxu0
        %4294 = vmatprep.mubr.f32.mxu0 %v3942
        %4295 = vmatmul.mubr.f32.gmra.mrb[0].mxu0 %v4082
        %v4296 = vpop.f32.mrb[0].mxu0
        %v4297 = vadd.f32 0.0, %v4296
        %v4298 = vpop.f32.mrb[0].mxu0
        %4299 = vmatprep.mubr.f32.mxu0 %v3943
        %4300 = vmatmul.mubr.f32.gmra.mrb[0].mxu0 %v4012
        %v4301 = vpop.f32.mrb[0].mxu0
        %v4302 = vadd.f32 0.0, %v4301
        %v4303 = vpop.f32.mrb[0].mxu0
        %4304 = vmatprep.mubr.f32.mxu0 %v3944
        %4305 = vmatmul.mubr.f32.gmra.mrb[0].mxu0 %v4083
        %v4306 = vpop.f32.mrb[0].mxu0
        %v4307 = vadd.f32 0.0, %v4306
        %v4308 = vpop.f32.mrb[0].mxu0
        %4309 = vmatprep.mubr.f32.mxu0 %v3945
        %4310 = vmatmul.mubr.f32.gmra.mrb[0].mxu0 %v4015
        %v4311 = vpop.f32.mrb[0].mxu0
        %v4312 = vadd.f32 0.0, %v4311
        %v4313 = vpop.f32.mrb[0].mxu0
        %4314 = vmatprep.mubr.f32.mxu0 %v3946
        %4315 = vmatmul.mubr.f32.gmra.mrb[0].mxu0 %v4084
        %v4316 = vpop.f32.mrb[0].mxu0
        %v4317 = vadd.f32 0.0, %v4316
        %v4318 = vpop.f32.mrb[0].mxu0
        %4319 = vmatprep.mubr.f32.mxu0 %v3947
        %4320 = vmatmul.mubr.f32.gmra.mrb[0].mxu0 %v4018
        %v4321 = vpop.f32.mrb[0].mxu0
        %v4322 = vadd.f32 0.0, %v4321
        %v4323 = vpop.f32.mrb[0].mxu0
        %4324 = vmatprep.mubr.f32.mxu0 %v3948
        %4325 = vmatmul.mubr.f32.gmra.mrb[0].mxu0 %v4085
        %v4326 = vpop.f32.mrb[0].mxu0
        %v4327 = vadd.f32 0.0, %v4326
        %v4328 = vpop.f32.mrb[0].mxu0
        %4329 = vmatprep.mubr.f32.mxu0 %v3949
        %4330 = vmatmul.mubr.f32.gmra.mrb[0].mxu0 %v4021
        %v4331 = vpop.f32.mrb[0].mxu0
        %v4332 = vadd.f32 0.0, %v4331
        %v4333 = vpop.f32.mrb[0].mxu0
        %4334 = vmatprep.mubr.f32.mxu0 %v3950
        %4335 = vmatmul.mubr.f32.gmra.mrb[0].mxu0 %v4086
        %v4336 = vpop.f32.mrb[0].mxu0
        %v4337 = vadd.f32 0.0, %v4336
        %v4338 = vpop.f32.mrb[0].mxu0
        %4339 = vmatprep.mubr.f32.mxu0 %v3951
        %4340 = vmatmul.mubr.f32.gmra.mrb[0].mxu0 %v4024
        %v4341 = vpop.f32.mrb[0].mxu0
        %v4342 = vadd.f32 0.0, %v4341
        %v4343 = vpop.f32.mrb[0].mxu0
        %4344 = vmatprep.mubr.f32.mxu0 %v3952
        %4345 = vmatmul.mubr.f32.gmra.mrb[0].mxu0 %v4087
        %v4346 = vpop.f32.mrb[0].mxu0
        %v4347 = vadd.f32 0.0, %v4346
        %v4348 = vpop.f32.mrb[0].mxu0
        %4349 = vmatprep.mubr.f32.mxu0 %v3953
        %4350 = vmatmul.mubr.f32.gmra.mrb[0].mxu0 %v4027
        %v4351 = vpop.f32.mrb[0].mxu0
        %v4352 = vadd.f32 0.0, %v4351
        %v4353 = vpop.f32.mrb[0].mxu0
        %4354 = vmatprep.mubr.f32.mxu0 %v3954
        %4355 = vmatmul.mubr.f32.gmra.mrb[0].mxu0 %v4088
        %v4356 = vpop.f32.mrb[0].mxu0
        %v4357 = vadd.f32 0.0, %v4356
        %v4358 = vpop.f32.mrb[0].mxu0
        %4359 = vmatprep.mubr.f32.mxu0 %v3955
        %4360 = vmatmul.mubr.f32.gmra.mrb[0].mxu0 %v4030
        %v4361 = vpop.f32.mrb[0].mxu0
        %v4362 = vadd.f32 0.0, %v4361
        %v4363 = vpop.f32.mrb[0].mxu0
        %4364 = vmatprep.mubr.f32.mxu0 %v3956
        %4365 = vmatmul.mubr.f32.gmra.mrb[0].mxu0 %v4089
        %v4366 = vpop.f32.mrb[0].mxu0
        %v4367 = vadd.f32 0.0, %v4366
        %v4368 = vpop.f32.mrb[0].mxu0
        %4369 = vmatprep.mubr.f32.mxu0 %v3957
        %4370 = vmatmul.mubr.f32.gmra.mrb[0].mxu0 %v4033
        %v4371 = vpop.f32.mrb[0].mxu0
        %v4372 = vadd.f32 0.0, %v4371
        %v4373 = vpop.f32.mrb[0].mxu0
        %4374 = vmatprep.mubr.f32.mxu0 %v3958
        %4375 = vmatmul.mubr.f32.gmra.mrb[0].mxu0 %v4090
        %v4376 = vpop.f32.mrb[0].mxu0
        %v4377 = vadd.f32 0.0, %v4376
        %v4378 = vpop.f32.mrb[0].mxu0
        %4379 = vmatprep.mubr.f32.mxu0 %v3959
        %4380 = vmatmul.mubr.f32.gmra.mrb[0].mxu0 %v4036
        %v4381 = vpop.f32.mrb[0].mxu0
        %v4382 = vadd.f32 0.0, %v4381
        %v4383 = vpop.f32.mrb[0].mxu0
        %4384 = vmatprep.mubr.f32.mxu0 %v3960
        %4385 = vmatmul.mubr.f32.gmra.mrb[0].mxu0 %v4091
        %v4386 = vpop.f32.mrb[0].mxu0
        %v4387 = vadd.f32 0.0, %v4386
        %v4388 = vpop.f32.mrb[0].mxu0
        %4389 = vmatprep.mubr.f32.mxu0 %v3961
        %4390 = vmatmul.mubr.f32.gmra.mrb[0].mxu0 %v4039
        %v4391 = vpop.f32.mrb[0].mxu0
        %v4392 = vadd.f32 0.0, %v4391
        %v4393 = vpop.f32.mrb[0].mxu0
        %4394 = vmatprep.mubr.f32.mxu0 %v3962
        %4395 = vmatmul.mubr.f32.gmra.mrb[0].mxu0 %v4092
        %v4396 = vpop.f32.mrb[0].mxu0
        %v4397 = vadd.f32 0.0, %v4396
        %v4398 = vpop.f32.mrb[0].mxu0
        %4399 = vmatprep.mubr.f32.mxu0 %v3963
        %4400 = vmatmul.mubr.f32.gmra.mrb[0].mxu0 %v4042
        %v4401 = vpop.f32.mrb[0].mxu0
        %v4402 = vadd.f32 0.0, %v4401
        %v4403 = vpop.f32.mrb[0].mxu0
        %4404 = vmatprep.mubr.f32.mxu0 %v3964
        %4405 = vmatmul.mubr.f32.gmra.mrb[0].mxu0 %v4093
        %v4406 = vpop.f32.mrb[0].mxu0
        %v4407 = vpop.f32.mrb[0].mxu0
        %4408 = vmatprep.mubr.f32.mxu0 %v3965
        %4409 = vmatmul.mubr.f32.gmra.mrb[0].mxu0 %v4045
        %v4410 = vpop.f32.mrb[0].mxu0
        %v4411 = vpop.f32.mrb[0].mxu0
        %4412 = vdwg.mxu0
        %4413 = vmatprep.subr.mxu0 0.0
        %4414 = vmatpush1.msra.mxu0 %v322
        %4415 = vmatprep.subr.mxu0 0.0
        %4416 = vmatpush1.msra.mxu0 %v323
        %4417 = vmatprep.subr.mxu0 0.0
        %4418 = vmatpush1.msra.mxu0 %v324
        %4419 = vmatprep.subr.mxu0 0.0
        %4420 = vmatpush1.msra.mxu0 %v325
        %4421 = vmatprep.subr.mxu0 0.0
        %4422 = vmatpush1.msra.mxu0 %v326
        %4423 = vmatprep.subr.mxu0 0.0
        %4424 = vmatpush1.msra.mxu0 %v327
        %4425 = vmatprep.subr.mxu0 0.0
        %4426 = vmatpush1.msra.mxu0 %v328
        %4427 = vmatprep.subr.mxu0 0.0
        %4428 = vmatpush1.msra.mxu0 %v329
        %4429 = vmatprep.subr.mxu0 0.0
        %4430 = vmatpush1.msra.mxu0 %v330
        %4431 = vmatprep.subr.mxu0 0.0
        %4432 = vmatpush1.msra.mxu0 %v331
        %4433 = vmatprep.subr.mxu0 0.0
        %4434 = vmatpush1.msra.mxu0 %v332
        %4435 = vmatprep.subr.mxu0 0.0
        %4436 = vmatpush1.msra.mxu0 %v333
        %4437 = vmatprep.subr.mxu0 0.0
        %4438 = vmatpush1.msra.mxu0 %v334
        %4439 = vmatprep.subr.mxu0 0.0
        %4440 = vmatpush1.msra.mxu0 %v335
        %4441 = vmatprep.subr.mxu0 0.0
        %4442 = vmatpush1.msra.mxu0 %v336
        %4443 = vmatprep.subr.mxu0 0.0
        %4444 = vmatpush1.msra.mxu0 %v337
        %4445 = vmatprep.subr.mxu0 0.0
        %4446 = vmatpush1.msra.mxu0 0.0
        %4447 = vmatprep.subr.mxu0 0.0
        %4448 = vmatpush1.msra.mxu0 0.0
        %4449 = vmatprep.subr.mxu0 0.0
        %4450 = vmatpush1.msra.mxu0 0.0
        %4451 = vmatprep.subr.mxu0 0.0
        %4452 = vmatpush1.msra.mxu0 0.0
        %4453 = vmatprep.subr.mxu0 0.0
        %4454 = vmatpush1.msra.mxu0 0.0
        %4455 = vmatprep.subr.mxu0 0.0
        %4456 = vmatpush1.msra.mxu0 0.0
        %4457 = vmatprep.subr.mxu0 0.0
        %4458 = vmatpush1.msra.mxu0 0.0
        %4459 = vmatprep.subr.mxu0 0.0
        %4460 = vmatpush1.msra.mxu0 0.0
        %4461 = vmatprep.subr.mxu0 0.0
        %4462 = vmatpush1.msra.mxu0 0.0
        %4463 = vmatprep.subr.mxu0 0.0
        %4464 = vmatpush1.msra.mxu0 0.0
        %4465 = vmatprep.subr.mxu0 0.0
        %4466 = vmatpush1.msra.mxu0 0.0
        %4467 = vmatprep.subr.mxu0 0.0
        %4468 = vmatpush1.msra.mxu0 0.0
        %4469 = vmatprep.subr.mxu0 0.0
        %4470 = vmatpush1.msra.mxu0 0.0
        %4471 = vmatprep.subr.mxu0 0.0
        %4472 = vmatpush1.msra.mxu0 0.0
        %4473 = vmatprep.subr.mxu0 0.0
        %4474 = vmatpush1.msra.mxu0 0.0
        %4475 = vmatprep.subr.mxu0 0.0
        %4476 = vmatpush1.msra.mxu0 0.0
        %4477 = vmatprep.mubr.f32.mxu0 0.0
        %4478 = vmatmul.mubr.f32.gmra.mrb[0].mxu0 %v4096
        %v4479 = vpop.f32.mrb[0].mxu0
        %v4480 = vadd.f32 %v4257, %v4479
        %v4481 = vpop.f32.mrb[0].mxu0
        %4482 = vmatprep.mubr.f32.mxu0 0.0
        %4483 = vmatmul.mubr.f32.gmra.mrb[0].mxu0 %v4174
        %v4484 = vpop.f32.mrb[0].mxu0
        %v4485 = vadd.f32 %v4262, %v4484
        %v4486 = vpop.f32.mrb[0].mxu0
        %4487 = vmatprep.mubr.f32.mxu0 0.0
        %4488 = vmatmul.mubr.f32.gmra.mrb[0].mxu0 %v4099
        %v4489 = vpop.f32.mrb[0].mxu0
        %v4490 = vadd.f32 %v4267, %v4489
        %v4491 = vpop.f32.mrb[0].mxu0
        %4492 = vmatprep.mubr.f32.mxu0 0.0
        %4493 = vmatmul.mubr.f32.gmra.mrb[0].mxu0 %v4175
        %v4494 = vpop.f32.mrb[0].mxu0
        %v4495 = vadd.f32 %v4272, %v4494
        %v4496 = vpop.f32.mrb[0].mxu0
        %4497 = vmatprep.mubr.f32.mxu0 0.0
        %4498 = vmatmul.mubr.f32.gmra.mrb[0].mxu0 %v4102
        %v4499 = vpop.f32.mrb[0].mxu0
        %v4500 = vadd.f32 %v4277, %v4499
        %v4501 = vpop.f32.mrb[0].mxu0
        %4502 = vmatprep.mubr.f32.mxu0 0.0
        %4503 = vmatmul.mubr.f32.gmra.mrb[0].mxu0 %v4176
        %v4504 = vpop.f32.mrb[0].mxu0
        %v4505 = vadd.f32 %v4282, %v4504
        %v4506 = vpop.f32.mrb[0].mxu0
        %4507 = vmatprep.mubr.f32.mxu0 0.0
        %4508 = vmatmul.mubr.f32.gmra.mrb[0].mxu0 %v4105
        %v4509 = vpop.f32.mrb[0].mxu0
        %v4510 = vadd.f32 %v4287, %v4509
        %v4511 = vpop.f32.mrb[0].mxu0
        %4512 = vmatprep.mubr.f32.mxu0 0.0
        %4513 = vmatmul.mubr.f32.gmra.mrb[0].mxu0 %v4177
        %v4514 = vpop.f32.mrb[0].mxu0
        %v4515 = vadd.f32 %v4292, %v4514
        %v4516 = vpop.f32.mrb[0].mxu0
        %4517 = vmatprep.mubr.f32.mxu0 0.0
        %4518 = vmatmul.mubr.f32.gmra.mrb[0].mxu0 %v4108
        %v4519 = vpop.f32.mrb[0].mxu0
        %v4520 = vadd.f32 %v4297, %v4519
        %v4521 = vpop.f32.mrb[0].mxu0
        %4522 = vmatprep.mubr.f32.mxu0 0.0
        %4523 = vmatmul.mubr.f32.gmra.mrb[0].mxu0 %v4178
        %v4524 = vpop.f32.mrb[0].mxu0
        %v4525 = vadd.f32 %v4302, %v4524
        %v4526 = vpop.f32.mrb[0].mxu0
        %4527 = vmatprep.mubr.f32.mxu0 0.0
        %4528 = vmatmul.mubr.f32.gmra.mrb[0].mxu0 %v4111
        %v4529 = vpop.f32.mrb[0].mxu0
        %v4530 = vadd.f32 %v4307, %v4529
        %v4531 = vpop.f32.mrb[0].mxu0
        %4532 = vmatprep.mubr.f32.mxu0 0.0
        %4533 = vmatmul.mubr.f32.gmra.mrb[0].mxu0 %v4179
        %v4534 = vpop.f32.mrb[0].mxu0
        %v4535 = vadd.f32 %v4312, %v4534
        %v4536 = vpop.f32.mrb[0].mxu0
        %4537 = vmatprep.mubr.f32.mxu0 0.0
        %4538 = vmatmul.mubr.f32.gmra.mrb[0].mxu0 %v4114
        %v4539 = vpop.f32.mrb[0].mxu0
        %v4540 = vadd.f32 %v4317, %v4539
        %v4541 = vpop.f32.mrb[0].mxu0
        %4542 = vmatprep.mubr.f32.mxu0 0.0
        %4543 = vmatmul.mubr.f32.gmra.mrb[0].mxu0 %v4180
        %v4544 = vpop.f32.mrb[0].mxu0
        %v4545 = vadd.f32 %v4322, %v4544
        %v4546 = vpop.f32.mrb[0].mxu0
        %4547 = vmatprep.mubr.f32.mxu0 0.0
        %4548 = vmatmul.mubr.f32.gmra.mrb[0].mxu0 %v4117
        %v4549 = vpop.f32.mrb[0].mxu0
        %v4550 = vadd.f32 %v4327, %v4549
        %v4551 = vpop.f32.mrb[0].mxu0
        %4552 = vmatprep.mubr.f32.mxu0 0.0
        %4553 = vmatmul.mubr.f32.gmra.mrb[0].mxu0 %v4181
        %v4554 = vpop.f32.mrb[0].mxu0
        %v4555 = vadd.f32 %v4332, %v4554
        %v4556 = vpop.f32.mrb[0].mxu0
        %4557 = vmatprep.mubr.f32.mxu0 0.0
        %4558 = vmatmul.mubr.f32.gmra.mrb[0].mxu0 %v4120
        %v4559 = vpop.f32.mrb[0].mxu0
        %v4560 = vadd.f32 %v4337, %v4559
        %v4561 = vpop.f32.mrb[0].mxu0
        %4562 = vmatprep.mubr.f32.mxu0 0.0
        %4563 = vmatmul.mubr.f32.gmra.mrb[0].mxu0 %v4182
        %v4564 = vpop.f32.mrb[0].mxu0
        %v4565 = vadd.f32 %v4342, %v4564
        %v4566 = vpop.f32.mrb[0].mxu0
        %4567 = vmatprep.mubr.f32.mxu0 0.0
        %4568 = vmatmul.mubr.f32.gmra.mrb[0].mxu0 %v4123
        %v4569 = vpop.f32.mrb[0].mxu0
        %v4570 = vadd.f32 %v4347, %v4569
        %v4571 = vpop.f32.mrb[0].mxu0
        %4572 = vmatprep.mubr.f32.mxu0 0.0
        %4573 = vmatmul.mubr.f32.gmra.mrb[0].mxu0 %v4183
        %v4574 = vpop.f32.mrb[0].mxu0
        %v4575 = vadd.f32 %v4352, %v4574
        %v4576 = vpop.f32.mrb[0].mxu0
        %4577 = vmatprep.mubr.f32.mxu0 0.0
        %4578 = vmatmul.mubr.f32.gmra.mrb[0].mxu0 %v4126
        %v4579 = vpop.f32.mrb[0].mxu0
        %v4580 = vadd.f32 %v4357, %v4579
        %v4581 = vpop.f32.mrb[0].mxu0
        %4582 = vmatprep.mubr.f32.mxu0 0.0
        %4583 = vmatmul.mubr.f32.gmra.mrb[0].mxu0 %v4184
        %v4584 = vpop.f32.mrb[0].mxu0
        %v4585 = vadd.f32 %v4362, %v4584
        %v4586 = vpop.f32.mrb[0].mxu0
        %4587 = vmatprep.mubr.f32.mxu0 0.0
        %4588 = vmatmul.mubr.f32.gmra.mrb[0].mxu0 %v4129
        %v4589 = vpop.f32.mrb[0].mxu0
        %v4590 = vadd.f32 %v4367, %v4589
        %v4591 = vpop.f32.mrb[0].mxu0
        %4592 = vmatprep.mubr.f32.mxu0 0.0
        %4593 = vmatmul.mubr.f32.gmra.mrb[0].mxu0 %v4185
        %v4594 = vpop.f32.mrb[0].mxu0
        %v4595 = vadd.f32 %v4372, %v4594
        %v4596 = vpop.f32.mrb[0].mxu0
        %4597 = vmatprep.mubr.f32.mxu0 0.0
        %4598 = vmatmul.mubr.f32.gmra.mrb[0].mxu0 %v4132
        %v4599 = vpop.f32.mrb[0].mxu0
        %v4600 = vadd.f32 %v4377, %v4599
        %v4601 = vpop.f32.mrb[0].mxu0
        %4602 = vmatprep.mubr.f32.mxu0 0.0
        %4603 = vmatmul.mubr.f32.gmra.mrb[0].mxu0 %v4186
        %v4604 = vpop.f32.mrb[0].mxu0
        %v4605 = vadd.f32 %v4382, %v4604
        %v4606 = vpop.f32.mrb[0].mxu0
        %4607 = vmatprep.mubr.f32.mxu0 0.0
        %4608 = vmatmul.mubr.f32.gmra.mrb[0].mxu0 %v4135
        %v4609 = vpop.f32.mrb[0].mxu0
        %v4610 = vadd.f32 %v4387, %v4609
        %v4611 = vpop.f32.mrb[0].mxu0
        %4612 = vmatprep.mubr.f32.mxu0 0.0
        %4613 = vmatmul.mubr.f32.gmra.mrb[0].mxu0 %v4187
        %v4614 = vpop.f32.mrb[0].mxu0
        %v4615 = vadd.f32 %v4392, %v4614
        %v4616 = vpop.f32.mrb[0].mxu0
        %4617 = vmatprep.mubr.f32.mxu0 0.0
        %4618 = vmatmul.mubr.f32.gmra.mrb[0].mxu0 %v4138
        %v4619 = vpop.f32.mrb[0].mxu0
        %v4620 = vadd.f32 %v4397, %v4619
        %v4621 = vpop.f32.mrb[0].mxu0
        %4622 = vmatprep.mubr.f32.mxu0 0.0
        %4623 = vmatmul.mubr.f32.gmra.mrb[0].mxu0 %v4188
        %v4624 = vpop.f32.mrb[0].mxu0
        %v4625 = vadd.f32 %v4402, %v4624
        %v4626 = vpop.f32.mrb[0].mxu0
        %4627 = vmatprep.mubr.f32.mxu0 0.0
        %4628 = vmatmul.mubr.f32.gmra.mrb[0].mxu0 %v4141
        %v4629 = vpop.f32.mrb[0].mxu0
        %v4630 = vpop.f32.mrb[0].mxu0
        %4631 = vmatprep.mubr.f32.mxu0 0.0
        %4632 = vmatmul.mubr.f32.gmra.mrb[0].mxu0 %v4189
        %v4633 = vpop.f32.mrb[0].mxu0
        %v4634 = vpop.f32.mrb[0].mxu0
        %4635 = vdwg.mxu0
        %4636 = vmatprep.subr.mxu0 0.0
        %4637 = vmatpush1.msra.mxu0 %v339
        %4638 = vmatprep.subr.mxu0 0.0
        %4639 = vmatpush1.msra.mxu0 %v340
        %4640 = vmatprep.subr.mxu0 0.0
        %4641 = vmatpush1.msra.mxu0 %v341
        %4642 = vmatprep.subr.mxu0 0.0
        %4643 = vmatpush1.msra.mxu0 %v342
        %4644 = vmatprep.subr.mxu0 0.0
        %4645 = vmatpush1.msra.mxu0 %v343
        %4646 = vmatprep.subr.mxu0 0.0
        %4647 = vmatpush1.msra.mxu0 %v344
        %4648 = vmatprep.subr.mxu0 0.0
        %4649 = vmatpush1.msra.mxu0 %v345
        %4650 = vmatprep.subr.mxu0 0.0
        %4651 = vmatpush1.msra.mxu0 %v346
        %4652 = vmatprep.subr.mxu0 0.0
        %4653 = vmatpush1.msra.mxu0 %v347
        %4654 = vmatprep.subr.mxu0 0.0
        %4655 = vmatpush1.msra.mxu0 %v348
        %4656 = vmatprep.subr.mxu0 0.0
        %4657 = vmatpush1.msra.mxu0 %v349
        %4658 = vmatprep.subr.mxu0 0.0
        %4659 = vmatpush1.msra.mxu0 %v350
        %4660 = vmatprep.subr.mxu0 0.0
        %4661 = vmatpush1.msra.mxu0 %v351
        %4662 = vmatprep.subr.mxu0 0.0
        %4663 = vmatpush1.msra.mxu0 %v352
        %4664 = vmatprep.subr.mxu0 0.0
        %4665 = vmatpush1.msra.mxu0 %v353
        %4666 = vmatprep.subr.mxu0 0.0
        %4667 = vmatpush1.msra.mxu0 %v354
        %4668 = vmatprep.subr.mxu0 0.0
        %4669 = vmatpush1.msra.mxu0 %v355
        %4670 = vmatprep.subr.mxu0 0.0
        %4671 = vmatpush1.msra.mxu0 %v356
        %4672 = vmatprep.subr.mxu0 0.0
        %4673 = vmatpush1.msra.mxu0 %v357
        %4674 = vmatprep.subr.mxu0 0.0
        %4675 = vmatpush1.msra.mxu0 %v358
        %4676 = vmatprep.subr.mxu0 0.0
        %4677 = vmatpush1.msra.mxu0 %v359
        %4678 = vmatprep.subr.mxu0 0.0
        %4679 = vmatpush1.msra.mxu0 %v360
        %4680 = vmatprep.subr.mxu0 0.0
        %4681 = vmatpush1.msra.mxu0 %v361
        %4682 = vmatprep.subr.mxu0 0.0
        %4683 = vmatpush1.msra.mxu0 %v362
        %4684 = vmatprep.subr.mxu0 0.0
        %4685 = vmatpush1.msra.mxu0 %v363
        %4686 = vmatprep.subr.mxu0 0.0
        %4687 = vmatpush1.msra.mxu0 %v364
        %4688 = vmatprep.subr.mxu0 0.0
        %4689 = vmatpush1.msra.mxu0 %v365
        %4690 = vmatprep.subr.mxu0 0.0
        %4691 = vmatpush1.msra.mxu0 %v366
        %4692 = vmatprep.subr.mxu0 0.0
        %4693 = vmatpush1.msra.mxu0 %v367
        %4694 = vmatprep.subr.mxu0 0.0
        %4695 = vmatpush1.msra.mxu0 %v368
        %4696 = vmatprep.subr.mxu0 0.0
        %4697 = vmatpush1.msra.mxu0 %v369
        %4698 = vmatprep.subr.mxu0 0.0
        %4699 = vmatpush1.msra.mxu0 %v370
        %4700 = vmatprep.mubr.f32.mxu0 %v3934
        %4701 = vmatmul.mubr.f32.gmra.mrb[0].mxu0 %v4078
        %v4702 = vpop.f32.mrb[0].mxu0
        %v4703 = vadd.f32 0.0, %v4702
        %v4704 = vpop.f32.mrb[0].mxu0
        %4705 = vmatprep.mubr.f32.mxu0 %v3935
        %4706 = vmatmul.mubr.f32.gmra.mrb[0].mxu0 %v4000
        %v4707 = vpop.f32.mrb[0].mxu0
        %v4708 = vadd.f32 0.0, %v4707
        %v4709 = vpop.f32.mrb[0].mxu0
        %4710 = vmatprep.mubr.f32.mxu0 %v3936
        %4711 = vmatmul.mubr.f32.gmra.mrb[0].mxu0 %v4079
        %v4712 = vpop.f32.mrb[0].mxu0
        %v4713 = vadd.f32 0.0, %v4712
        %v4714 = vpop.f32.mrb[0].mxu0
        %4715 = vmatprep.mubr.f32.mxu0 %v3937
        %4716 = vmatmul.mubr.f32.gmra.mrb[0].mxu0 %v4003
        %v4717 = vpop.f32.mrb[0].mxu0
        %v4718 = vadd.f32 0.0, %v4717
        %v4719 = vpop.f32.mrb[0].mxu0
        %4720 = vmatprep.mubr.f32.mxu0 %v3938
        %4721 = vmatmul.mubr.f32.gmra.mrb[0].mxu0 %v4080
        %v4722 = vpop.f32.mrb[0].mxu0
        %v4723 = vadd.f32 0.0, %v4722
        %v4724 = vpop.f32.mrb[0].mxu0
        %4725 = vmatprep.mubr.f32.mxu0 %v3939
        %4726 = vmatmul.mubr.f32.gmra.mrb[0].mxu0 %v4006
        %v4727 = vpop.f32.mrb[0].mxu0
        %v4728 = vadd.f32 0.0, %v4727
        %v4729 = vpop.f32.mrb[0].mxu0
        %4730 = vmatprep.mubr.f32.mxu0 %v3940
        %4731 = vmatmul.mubr.f32.gmra.mrb[0].mxu0 %v4081
        %v4732 = vpop.f32.mrb[0].mxu0
        %v4733 = vadd.f32 0.0, %v4732
        %v4734 = vpop.f32.mrb[0].mxu0
        %4735 = vmatprep.mubr.f32.mxu0 %v3941
        %4736 = vmatmul.mubr.f32.gmra.mrb[0].mxu0 %v4009
        %v4737 = vpop.f32.mrb[0].mxu0
        %v4738 = vadd.f32 0.0, %v4737
        %v4739 = vpop.f32.mrb[0].mxu0
        %4740 = vmatprep.mubr.f32.mxu0 %v3942
        %4741 = vmatmul.mubr.f32.gmra.mrb[0].mxu0 %v4082
        %v4742 = vpop.f32.mrb[0].mxu0
        %v4743 = vadd.f32 0.0, %v4742
        %v4744 = vpop.f32.mrb[0].mxu0
        %4745 = vmatprep.mubr.f32.mxu0 %v3943
        %4746 = vmatmul.mubr.f32.gmra.mrb[0].mxu0 %v4012
        %v4747 = vpop.f32.mrb[0].mxu0
        %v4748 = vadd.f32 0.0, %v4747
        %v4749 = vpop.f32.mrb[0].mxu0
        %4750 = vmatprep.mubr.f32.mxu0 %v3944
        %4751 = vmatmul.mubr.f32.gmra.mrb[0].mxu0 %v4083
        %v4752 = vpop.f32.mrb[0].mxu0
        %v4753 = vadd.f32 0.0, %v4752
        %v4754 = vpop.f32.mrb[0].mxu0
        %4755 = vmatprep.mubr.f32.mxu0 %v3945
        %4756 = vmatmul.mubr.f32.gmra.mrb[0].mxu0 %v4015
        %v4757 = vpop.f32.mrb[0].mxu0
        %v4758 = vadd.f32 0.0, %v4757
        %v4759 = vpop.f32.mrb[0].mxu0
        %4760 = vmatprep.mubr.f32.mxu0 %v3946
        %4761 = vmatmul.mubr.f32.gmra.mrb[0].mxu0 %v4084
        %v4762 = vpop.f32.mrb[0].mxu0
        %v4763 = vadd.f32 0.0, %v4762
        %v4764 = vpop.f32.mrb[0].mxu0
        %4765 = vmatprep.mubr.f32.mxu0 %v3947
        %4766 = vmatmul.mubr.f32.gmra.mrb[0].mxu0 %v4018
        %v4767 = vpop.f32.mrb[0].mxu0
        %v4768 = vadd.f32 0.0, %v4767
        %v4769 = vpop.f32.mrb[0].mxu0
        %4770 = vmatprep.mubr.f32.mxu0 %v3948
        %4771 = vmatmul.mubr.f32.gmra.mrb[0].mxu0 %v4085
        %v4772 = vpop.f32.mrb[0].mxu0
        %v4773 = vadd.f32 0.0, %v4772
        %v4774 = vpop.f32.mrb[0].mxu0
        %4775 = vmatprep.mubr.f32.mxu0 %v3949
        %4776 = vmatmul.mubr.f32.gmra.mrb[0].mxu0 %v4021
        %v4777 = vpop.f32.mrb[0].mxu0
        %v4778 = vadd.f32 0.0, %v4777
        %v4779 = vpop.f32.mrb[0].mxu0
        %4780 = vmatprep.mubr.f32.mxu0 %v3950
        %4781 = vmatmul.mubr.f32.gmra.mrb[0].mxu0 %v4086
        %v4782 = vpop.f32.mrb[0].mxu0
        %v4783 = vadd.f32 0.0, %v4782
        %v4784 = vpop.f32.mrb[0].mxu0
        %4785 = vmatprep.mubr.f32.mxu0 %v3951
        %4786 = vmatmul.mubr.f32.gmra.mrb[0].mxu0 %v4024
        %v4787 = vpop.f32.mrb[0].mxu0
        %v4788 = vadd.f32 0.0, %v4787
        %v4789 = vpop.f32.mrb[0].mxu0
        %4790 = vmatprep.mubr.f32.mxu0 %v3952
        %4791 = vmatmul.mubr.f32.gmra.mrb[0].mxu0 %v4087
        %v4792 = vpop.f32.mrb[0].mxu0
        %v4793 = vadd.f32 0.0, %v4792
        %v4794 = vpop.f32.mrb[0].mxu0
        %4795 = vmatprep.mubr.f32.mxu0 %v3953
        %4796 = vmatmul.mubr.f32.gmra.mrb[0].mxu0 %v4027
        %v4797 = vpop.f32.mrb[0].mxu0
        %v4798 = vadd.f32 0.0, %v4797
        %v4799 = vpop.f32.mrb[0].mxu0
        %4800 = vmatprep.mubr.f32.mxu0 %v3954
        %4801 = vmatmul.mubr.f32.gmra.mrb[0].mxu0 %v4088
        %v4802 = vpop.f32.mrb[0].mxu0
        %v4803 = vadd.f32 0.0, %v4802
        %v4804 = vpop.f32.mrb[0].mxu0
        %4805 = vmatprep.mubr.f32.mxu0 %v3955
        %4806 = vmatmul.mubr.f32.gmra.mrb[0].mxu0 %v4030
        %v4807 = vpop.f32.mrb[0].mxu0
        %v4808 = vadd.f32 0.0, %v4807
        %v4809 = vpop.f32.mrb[0].mxu0
        %4810 = vmatprep.mubr.f32.mxu0 %v3956
        %4811 = vmatmul.mubr.f32.gmra.mrb[0].mxu0 %v4089
        %v4812 = vpop.f32.mrb[0].mxu0
        %v4813 = vadd.f32 0.0, %v4812
        %v4814 = vpop.f32.mrb[0].mxu0
        %4815 = vmatprep.mubr.f32.mxu0 %v3957
        %4816 = vmatmul.mubr.f32.gmra.mrb[0].mxu0 %v4033
        %v4817 = vpop.f32.mrb[0].mxu0
        %v4818 = vadd.f32 0.0, %v4817
        %v4819 = vpop.f32.mrb[0].mxu0
        %4820 = vmatprep.mubr.f32.mxu0 %v3958
        %4821 = vmatmul.mubr.f32.gmra.mrb[0].mxu0 %v4090
        %v4822 = vpop.f32.mrb[0].mxu0
        %v4823 = vadd.f32 0.0, %v4822
        %v4824 = vpop.f32.mrb[0].mxu0
        %4825 = vmatprep.mubr.f32.mxu0 %v3959
        %4826 = vmatmul.mubr.f32.gmra.mrb[0].mxu0 %v4036
        %v4827 = vpop.f32.mrb[0].mxu0
        %v4828 = vadd.f32 0.0, %v4827
        %v4829 = vpop.f32.mrb[0].mxu0
        %4830 = vmatprep.mubr.f32.mxu0 %v3960
        %4831 = vmatmul.mubr.f32.gmra.mrb[0].mxu0 %v4091
        %v4832 = vpop.f32.mrb[0].mxu0
        %v4833 = vadd.f32 0.0, %v4832
        %v4834 = vpop.f32.mrb[0].mxu0
        %4835 = vmatprep.mubr.f32.mxu0 %v3961
        %4836 = vmatmul.mubr.f32.gmra.mrb[0].mxu0 %v4039
        %v4837 = vpop.f32.mrb[0].mxu0
        %v4838 = vadd.f32 0.0, %v4837
        %v4839 = vpop.f32.mrb[0].mxu0
        %4840 = vmatprep.mubr.f32.mxu0 %v3962
        %4841 = vmatmul.mubr.f32.gmra.mrb[0].mxu0 %v4092
        %v4842 = vpop.f32.mrb[0].mxu0
        %v4843 = vadd.f32 0.0, %v4842
        %v4844 = vpop.f32.mrb[0].mxu0
        %4845 = vmatprep.mubr.f32.mxu0 %v3963
        %4846 = vmatmul.mubr.f32.gmra.mrb[0].mxu0 %v4042
        %v4847 = vpop.f32.mrb[0].mxu0
        %v4848 = vadd.f32 0.0, %v4847
        %v4849 = vpop.f32.mrb[0].mxu0
        %4850 = vmatprep.mubr.f32.mxu0 %v3964
        %4851 = vmatmul.mubr.f32.gmra.mrb[0].mxu0 %v4093
        %v4852 = vpop.f32.mrb[0].mxu0
        %v4853 = vadd.f32 0.0, %v4852
        %v4854 = vpop.f32.mrb[0].mxu0
        %4855 = vmatprep.mubr.f32.mxu0 %v3965
        %4856 = vmatmul.mubr.f32.gmra.mrb[0].mxu0 %v4045
        %v4857 = vpop.f32.mrb[0].mxu0
        %v4858 = vadd.f32 0.0, %v4857
        %v4859 = vpop.f32.mrb[0].mxu0
        %4860 = vdwg.mxu0
        %4861 = vmatprep.subr.mxu0 0.0
        %4862 = vmatpush1.msra.mxu0 %v371
        %4863 = vmatprep.subr.mxu0 0.0
        %4864 = vmatpush1.msra.mxu0 %v372
        %4865 = vmatprep.subr.mxu0 0.0
        %4866 = vmatpush1.msra.mxu0 %v373
        %4867 = vmatprep.subr.mxu0 0.0
        %4868 = vmatpush1.msra.mxu0 %v374
        %4869 = vmatprep.subr.mxu0 0.0
        %4870 = vmatpush1.msra.mxu0 %v375
        %4871 = vmatprep.subr.mxu0 0.0
        %4872 = vmatpush1.msra.mxu0 %v376
        %4873 = vmatprep.subr.mxu0 0.0
        %4874 = vmatpush1.msra.mxu0 %v377
        %4875 = vmatprep.subr.mxu0 0.0
        %4876 = vmatpush1.msra.mxu0 %v378
        %4877 = vmatprep.subr.mxu0 0.0
        %4878 = vmatpush1.msra.mxu0 %v379
        %4879 = vmatprep.subr.mxu0 0.0
        %4880 = vmatpush1.msra.mxu0 %v380
        %4881 = vmatprep.subr.mxu0 0.0
        %4882 = vmatpush1.msra.mxu0 %v381
        %4883 = vmatprep.subr.mxu0 0.0
        %4884 = vmatpush1.msra.mxu0 %v382
        %4885 = vmatprep.subr.mxu0 0.0
        %4886 = vmatpush1.msra.mxu0 %v383
        %4887 = vmatprep.subr.mxu0 0.0
        %4888 = vmatpush1.msra.mxu0 %v384
        %4889 = vmatprep.subr.mxu0 0.0
        %4890 = vmatpush1.msra.mxu0 %v385
        %4891 = vmatprep.subr.mxu0 0.0
        %4892 = vmatpush1.msra.mxu0 %v386
        %4893 = vmatprep.subr.mxu0 0.0
        %4894 = vmatpush1.msra.mxu0 0.0
        %4895 = vmatprep.subr.mxu0 0.0
        %4896 = vmatpush1.msra.mxu0 0.0
        %4897 = vmatprep.subr.mxu0 0.0
        %4898 = vmatpush1.msra.mxu0 0.0
        %4899 = vmatprep.subr.mxu0 0.0
        %4900 = vmatpush1.msra.mxu0 0.0
        %4901 = vmatprep.subr.mxu0 0.0
        %4902 = vmatpush1.msra.mxu0 0.0
        %4903 = vmatprep.subr.mxu0 0.0
        %4904 = vmatpush1.msra.mxu0 0.0
        %4905 = vmatprep.subr.mxu0 0.0
        %4906 = vmatpush1.msra.mxu0 0.0
        %4907 = vmatprep.subr.mxu0 0.0
        %4908 = vmatpush1.msra.mxu0 0.0
        %4909 = vmatprep.subr.mxu0 0.0
        %4910 = vmatpush1.msra.mxu0 0.0
        %4911 = vmatprep.subr.mxu0 0.0
        %4912 = vmatpush1.msra.mxu0 0.0
        %4913 = vmatprep.subr.mxu0 0.0
        %4914 = vmatpush1.msra.mxu0 0.0
        %4915 = vmatprep.subr.mxu0 0.0
        %4916 = vmatpush1.msra.mxu0 0.0
        %4917 = vmatprep.subr.mxu0 0.0
        %4918 = vmatpush1.msra.mxu0 0.0
        %4919 = vmatprep.subr.mxu0 0.0
        %4920 = vmatpush1.msra.mxu0 0.0
        %4921 = vmatprep.subr.mxu0 0.0
        %4922 = vmatpush1.msra.mxu0 0.0
        %4923 = vmatprep.subr.mxu0 0.0
        %4924 = vmatpush1.msra.mxu0 0.0
        %4925 = vmatprep.mubr.f32.mxu0 0.0
        %4926 = vmatmul.mubr.f32.gmra.mrb[0].mxu0 %v4096
        %v4927 = vpop.f32.mrb[0].mxu0
        %v4928 = vadd.f32 %v4703, %v4927
        %v4929 = vpop.f32.mrb[0].mxu0
        %4930 = vmatprep.mubr.f32.mxu0 0.0
        %4931 = vmatmul.mubr.f32.gmra.mrb[0].mxu0 %v4174
        %v4932 = vpop.f32.mrb[0].mxu0
        %v4933 = vadd.f32 %v4708, %v4932
        %v4934 = vpop.f32.mrb[0].mxu0
        %4935 = vmatprep.mubr.f32.mxu0 0.0
        %4936 = vmatmul.mubr.f32.gmra.mrb[0].mxu0 %v4099
        %v4937 = vpop.f32.mrb[0].mxu0
        %v4938 = vadd.f32 %v4713, %v4937
        %v4939 = vpop.f32.mrb[0].mxu0
        %4940 = vmatprep.mubr.f32.mxu0 0.0
        %4941 = vmatmul.mubr.f32.gmra.mrb[0].mxu0 %v4175
        %v4942 = vpop.f32.mrb[0].mxu0
        %v4943 = vadd.f32 %v4718, %v4942
        %v4944 = vpop.f32.mrb[0].mxu0
        %4945 = vmatprep.mubr.f32.mxu0 0.0
        %4946 = vmatmul.mubr.f32.gmra.mrb[0].mxu0 %v4102
        %v4947 = vpop.f32.mrb[0].mxu0
        %v4948 = vadd.f32 %v4723, %v4947
        %v4949 = vpop.f32.mrb[0].mxu0
        %4950 = vmatprep.mubr.f32.mxu0 0.0
        %4951 = vmatmul.mubr.f32.gmra.mrb[0].mxu0 %v4176
        %v4952 = vpop.f32.mrb[0].mxu0
        %v4953 = vadd.f32 %v4728, %v4952
        %v4954 = vpop.f32.mrb[0].mxu0
        %4955 = vmatprep.mubr.f32.mxu0 0.0
        %4956 = vmatmul.mubr.f32.gmra.mrb[0].mxu0 %v4105
        %v4957 = vpop.f32.mrb[0].mxu0
        %v4958 = vadd.f32 %v4733, %v4957
        %v4959 = vpop.f32.mrb[0].mxu0
        %4960 = vmatprep.mubr.f32.mxu0 0.0
        %4961 = vmatmul.mubr.f32.gmra.mrb[0].mxu0 %v4177
        %v4962 = vpop.f32.mrb[0].mxu0
        %v4963 = vadd.f32 %v4738, %v4962
        %v4964 = vpop.f32.mrb[0].mxu0
        %4965 = vmatprep.mubr.f32.mxu0 0.0
        %4966 = vmatmul.mubr.f32.gmra.mrb[0].mxu0 %v4108
        %v4967 = vpop.f32.mrb[0].mxu0
        %v4968 = vadd.f32 %v4743, %v4967
        %v4969 = vpop.f32.mrb[0].mxu0
        %4970 = vmatprep.mubr.f32.mxu0 0.0
        %4971 = vmatmul.mubr.f32.gmra.mrb[0].mxu0 %v4178
        %v4972 = vpop.f32.mrb[0].mxu0
        %v4973 = vadd.f32 %v4748, %v4972
        %v4974 = vpop.f32.mrb[0].mxu0
        %4975 = vmatprep.mubr.f32.mxu0 0.0
        %4976 = vmatmul.mubr.f32.gmra.mrb[0].mxu0 %v4111
        %v4977 = vpop.f32.mrb[0].mxu0
        %v4978 = vadd.f32 %v4753, %v4977
        %v4979 = vpop.f32.mrb[0].mxu0
        %4980 = vmatprep.mubr.f32.mxu0 0.0
        %4981 = vmatmul.mubr.f32.gmra.mrb[0].mxu0 %v4179
        %v4982 = vpop.f32.mrb[0].mxu0
        %v4983 = vadd.f32 %v4758, %v4982
        %v4984 = vpop.f32.mrb[0].mxu0
        %4985 = vmatprep.mubr.f32.mxu0 0.0
        %4986 = vmatmul.mubr.f32.gmra.mrb[0].mxu0 %v4114
        %v4987 = vpop.f32.mrb[0].mxu0
        %v4988 = vadd.f32 %v4763, %v4987
        %v4989 = vpop.f32.mrb[0].mxu0
        %4990 = vmatprep.mubr.f32.mxu0 0.0
        %4991 = vmatmul.mubr.f32.gmra.mrb[0].mxu0 %v4180
        %v4992 = vpop.f32.mrb[0].mxu0
        %v4993 = vadd.f32 %v4768, %v4992
        %v4994 = vpop.f32.mrb[0].mxu0
        %4995 = vmatprep.mubr.f32.mxu0 0.0
        %4996 = vmatmul.mubr.f32.gmra.mrb[0].mxu0 %v4117
        %v4997 = vpop.f32.mrb[0].mxu0
        %v4998 = vadd.f32 %v4773, %v4997
        %v4999 = vpop.f32.mrb[0].mxu0
        %5000 = vmatprep.mubr.f32.mxu0 0.0
        %5001 = vmatmul.mubr.f32.gmra.mrb[0].mxu0 %v4181
        %v5002 = vpop.f32.mrb[0].mxu0
        %v5003 = vadd.f32 %v4778, %v5002
        %v5004 = vpop.f32.mrb[0].mxu0
        %5005 = vmatprep.mubr.f32.mxu0 0.0
        %5006 = vmatmul.mubr.f32.gmra.mrb[0].mxu0 %v4120
        %v5007 = vpop.f32.mrb[0].mxu0
        %v5008 = vadd.f32 %v4783, %v5007
        %v5009 = vpop.f32.mrb[0].mxu0
        %5010 = vmatprep.mubr.f32.mxu0 0.0
        %5011 = vmatmul.mubr.f32.gmra.mrb[0].mxu0 %v4182
        %v5012 = vpop.f32.mrb[0].mxu0
        %v5013 = vadd.f32 %v4788, %v5012
        %v5014 = vpop.f32.mrb[0].mxu0
        %5015 = vmatprep.mubr.f32.mxu0 0.0
        %5016 = vmatmul.mubr.f32.gmra.mrb[0].mxu0 %v4123
        %v5017 = vpop.f32.mrb[0].mxu0
        %v5018 = vadd.f32 %v4793, %v5017
        %v5019 = vpop.f32.mrb[0].mxu0
        %5020 = vmatprep.mubr.f32.mxu0 0.0
        %5021 = vmatmul.mubr.f32.gmra.mrb[0].mxu0 %v4183
        %v5022 = vpop.f32.mrb[0].mxu0
        %v5023 = vadd.f32 %v4798, %v5022
        %v5024 = vpop.f32.mrb[0].mxu0
        %5025 = vmatprep.mubr.f32.mxu0 0.0
        %5026 = vmatmul.mubr.f32.gmra.mrb[0].mxu0 %v4126
        %v5027 = vpop.f32.mrb[0].mxu0
        %v5028 = vadd.f32 %v4803, %v5027
        %v5029 = vpop.f32.mrb[0].mxu0
        %5030 = vmatprep.mubr.f32.mxu0 0.0
        %5031 = vmatmul.mubr.f32.gmra.mrb[0].mxu0 %v4184
        %v5032 = vpop.f32.mrb[0].mxu0
        %v5033 = vadd.f32 %v4808, %v5032
        %v5034 = vpop.f32.mrb[0].mxu0
        %5035 = vmatprep.mubr.f32.mxu0 0.0
        %5036 = vmatmul.mubr.f32.gmra.mrb[0].mxu0 %v4129
        %v5037 = vpop.f32.mrb[0].mxu0
        %v5038 = vadd.f32 %v4813, %v5037
        %v5039 = vpop.f32.mrb[0].mxu0
        %5040 = vmatprep.mubr.f32.mxu0 0.0
        %5041 = vmatmul.mubr.f32.gmra.mrb[0].mxu0 %v4185
        %v5042 = vpop.f32.mrb[0].mxu0
        %v5043 = vadd.f32 %v4818, %v5042
        %v5044 = vpop.f32.mrb[0].mxu0
        %5045 = vmatprep.mubr.f32.mxu0 0.0
        %5046 = vmatmul.mubr.f32.gmra.mrb[0].mxu0 %v4132
        %v5047 = vpop.f32.mrb[0].mxu0
        %v5048 = vadd.f32 %v4823, %v5047
        %v5049 = vpop.f32.mrb[0].mxu0
        %5050 = vmatprep.mubr.f32.mxu0 0.0
        %5051 = vmatmul.mubr.f32.gmra.mrb[0].mxu0 %v4186
        %v5052 = vpop.f32.mrb[0].mxu0
        %v5053 = vadd.f32 %v4828, %v5052
        %v5054 = vpop.f32.mrb[0].mxu0
        %5055 = vmatprep.mubr.f32.mxu0 0.0
        %5056 = vmatmul.mubr.f32.gmra.mrb[0].mxu0 %v4135
        %v5057 = vpop.f32.mrb[0].mxu0
        %v5058 = vadd.f32 %v4833, %v5057
        %v5059 = vpop.f32.mrb[0].mxu0
        %5060 = vmatprep.mubr.f32.mxu0 0.0
        %5061 = vmatmul.mubr.f32.gmra.mrb[0].mxu0 %v4187
        %v5062 = vpop.f32.mrb[0].mxu0
        %v5063 = vadd.f32 %v4838, %v5062
        %v5064 = vpop.f32.mrb[0].mxu0
        %5065 = vmatprep.mubr.f32.mxu0 0.0
        %5066 = vmatmul.mubr.f32.gmra.mrb[0].mxu0 %v4138
        %v5067 = vpop.f32.mrb[0].mxu0
        %v5068 = vadd.f32 %v4843, %v5067
        %v5069 = vpop.f32.mrb[0].mxu0
        %5070 = vmatprep.mubr.f32.mxu0 0.0
        %5071 = vmatmul.mubr.f32.gmra.mrb[0].mxu0 %v4188
        %v5072 = vpop.f32.mrb[0].mxu0
        %v5073 = vadd.f32 %v4848, %v5072
        %v5074 = vpop.f32.mrb[0].mxu0
        %5075 = vmatprep.mubr.f32.mxu0 0.0
        %5076 = vmatmul.mubr.f32.gmra.mrb[0].mxu0 %v4141
        %v5077 = vpop.f32.mrb[0].mxu0
        %v5078 = vadd.f32 %v4853, %v5077
        %v5079 = vpop.f32.mrb[0].mxu0
        %5080 = vmatprep.mubr.f32.mxu0 0.0
        %5081 = vmatmul.mubr.f32.gmra.mrb[0].mxu0 %v4189
        %v5082 = vpop.f32.mrb[0].mxu0
        %v5083 = vadd.f32 %v4858, %v5082
        %v5084 = vpop.f32.mrb[0].mxu0
        %5085 = vdwg.mxu0
        %5086 = vmatprep.subr.mxu0 0.0
        %5087 = vmatpush1.msra.mxu0 %v388
        %5088 = vmatprep.subr.mxu0 0.0
        %5089 = vmatpush1.msra.mxu0 %v389
        %5090 = vmatprep.subr.mxu0 0.0
        %5091 = vmatpush1.msra.mxu0 %v390
        %5092 = vmatprep.subr.mxu0 0.0
        %5093 = vmatpush1.msra.mxu0 %v391
        %5094 = vmatprep.subr.mxu0 0.0
        %5095 = vmatpush1.msra.mxu0 %v392
        %5096 = vmatprep.subr.mxu0 0.0
        %5097 = vmatpush1.msra.mxu0 %v393
        %5098 = vmatprep.subr.mxu0 0.0
        %5099 = vmatpush1.msra.mxu0 %v394
        %5100 = vmatprep.subr.mxu0 0.0
        %5101 = vmatpush1.msra.mxu0 %v395
        %5102 = vmatprep.subr.mxu0 0.0
        %5103 = vmatpush1.msra.mxu0 %v396
        %5104 = vmatprep.subr.mxu0 0.0
        %5105 = vmatpush1.msra.mxu0 %v397
        %5106 = vmatprep.subr.mxu0 0.0
        %5107 = vmatpush1.msra.mxu0 %v398
        %5108 = vmatprep.subr.mxu0 0.0
        %5109 = vmatpush1.msra.mxu0 %v399
        %5110 = vmatprep.subr.mxu0 0.0
        %5111 = vmatpush1.msra.mxu0 %v400
        %5112 = vmatprep.subr.mxu0 0.0
        %5113 = vmatpush1.msra.mxu0 %v401
        %5114 = vmatprep.subr.mxu0 0.0
        %5115 = vmatpush1.msra.mxu0 %v402
        %5116 = vmatprep.subr.mxu0 0.0
        %5117 = vmatpush1.msra.mxu0 %v403
        %5118 = vmatprep.subr.mxu0 0.0
        %5119 = vmatpush1.msra.mxu0 %v404
        %5120 = vmatprep.subr.mxu0 0.0
        %5121 = vmatpush1.msra.mxu0 %v405
        %5122 = vmatprep.subr.mxu0 0.0
        %5123 = vmatpush1.msra.mxu0 %v406
        %5124 = vmatprep.subr.mxu0 0.0
        %5125 = vmatpush1.msra.mxu0 %v407
        %5126 = vmatprep.subr.mxu0 0.0
        %5127 = vmatpush1.msra.mxu0 %v408
        %5128 = vmatprep.subr.mxu0 0.0
        %5129 = vmatpush1.msra.mxu0 %v409
        %5130 = vmatprep.subr.mxu0 0.0
        %5131 = vmatpush1.msra.mxu0 %v410
        %5132 = vmatprep.subr.mxu0 0.0
        %5133 = vmatpush1.msra.mxu0 %v411
        %5134 = vmatprep.subr.mxu0 0.0
        %5135 = vmatpush1.msra.mxu0 %v412
        %5136 = vmatprep.subr.mxu0 0.0
        %5137 = vmatpush1.msra.mxu0 %v413
        %5138 = vmatprep.subr.mxu0 0.0
        %5139 = vmatpush1.msra.mxu0 %v414
        %5140 = vmatprep.subr.mxu0 0.0
        %5141 = vmatpush1.msra.mxu0 %v415
        %5142 = vmatprep.subr.mxu0 0.0
        %5143 = vmatpush1.msra.mxu0 %v416
        %5144 = vmatprep.subr.mxu0 0.0
        %5145 = vmatpush1.msra.mxu0 %v417
        %5146 = vmatprep.subr.mxu0 0.0
        %5147 = vmatpush1.msra.mxu0 %v418
        %5148 = vmatprep.subr.mxu0 0.0
        %5149 = vmatpush1.msra.mxu0 %v419
        %5150 = vmatprep.mubr.f32.mxu0 %v3934
        %5151 = vmatmul.mubr.f32.gmra.mrb[0].mxu0 %v4078
        %v5152 = vpop.f32.mrb[0].mxu0
        %v5153 = vpop.f32.mrb[0].mxu0
        %5154 = vmatprep.mubr.f32.mxu0 %v3935
        %5155 = vmatmul.mubr.f32.gmra.mrb[0].mxu0 %v4000
        %v5156 = vpop.f32.mrb[0].mxu0
        %v5157 = vpop.f32.mrb[0].mxu0
        %5158 = vmatprep.mubr.f32.mxu0 %v3936
        %5159 = vmatmul.mubr.f32.gmra.mrb[0].mxu0 %v4079
        %v5160 = vpop.f32.mrb[0].mxu0
        %v5161 = vadd.f32 0.0, %v5160
        %v5162 = vpop.f32.mrb[0].mxu0
        %5163 = vmatprep.mubr.f32.mxu0 %v3937
        %5164 = vmatmul.mubr.f32.gmra.mrb[0].mxu0 %v4003
        %v5165 = vpop.f32.mrb[0].mxu0
        %v5166 = vadd.f32 0.0, %v5165
        %v5167 = vpop.f32.mrb[0].mxu0
        %5168 = vmatprep.mubr.f32.mxu0 %v3938
        %5169 = vmatmul.mubr.f32.gmra.mrb[0].mxu0 %v4080
        %v5170 = vpop.f32.mrb[0].mxu0
        %v5171 = vadd.f32 0.0, %v5170
        %v5172 = vpop.f32.mrb[0].mxu0
        %5173 = vmatprep.mubr.f32.mxu0 %v3939
        %5174 = vmatmul.mubr.f32.gmra.mrb[0].mxu0 %v4006
        %v5175 = vpop.f32.mrb[0].mxu0
        %v5176 = vadd.f32 0.0, %v5175
        %v5177 = vpop.f32.mrb[0].mxu0
        %5178 = vmatprep.mubr.f32.mxu0 %v3940
        %5179 = vmatmul.mubr.f32.gmra.mrb[0].mxu0 %v4081
        %v5180 = vpop.f32.mrb[0].mxu0
        %v5181 = vadd.f32 0.0, %v5180
        %v5182 = vpop.f32.mrb[0].mxu0
        %5183 = vmatprep.mubr.f32.mxu0 %v3941
        %5184 = vmatmul.mubr.f32.gmra.mrb[0].mxu0 %v4009
        %v5185 = vpop.f32.mrb[0].mxu0
        %v5186 = vadd.f32 0.0, %v5185
        %v5187 = vpop.f32.mrb[0].mxu0
        %5188 = vmatprep.mubr.f32.mxu0 %v3942
        %5189 = vmatmul.mubr.f32.gmra.mrb[0].mxu0 %v4082
        %v5190 = vpop.f32.mrb[0].mxu0
        %v5191 = vadd.f32 0.0, %v5190
        %v5192 = vpop.f32.mrb[0].mxu0
        %5193 = vmatprep.mubr.f32.mxu0 %v3943
        %5194 = vmatmul.mubr.f32.gmra.mrb[0].mxu0 %v4012
        %v5195 = vpop.f32.mrb[0].mxu0
        %v5196 = vadd.f32 0.0, %v5195
        %v5197 = vpop.f32.mrb[0].mxu0
        %5198 = vmatprep.mubr.f32.mxu0 %v3944
        %5199 = vmatmul.mubr.f32.gmra.mrb[0].mxu0 %v4083
        %v5200 = vpop.f32.mrb[0].mxu0
        %v5201 = vadd.f32 0.0, %v5200
        %v5202 = vpop.f32.mrb[0].mxu0
        %5203 = vmatprep.mubr.f32.mxu0 %v3945
        %5204 = vmatmul.mubr.f32.gmra.mrb[0].mxu0 %v4015
        %v5205 = vpop.f32.mrb[0].mxu0
        %v5206 = vadd.f32 0.0, %v5205
        %v5207 = vpop.f32.mrb[0].mxu0
        %5208 = vmatprep.mubr.f32.mxu0 %v3946
        %5209 = vmatmul.mubr.f32.gmra.mrb[0].mxu0 %v4084
        %v5210 = vpop.f32.mrb[0].mxu0
        %v5211 = vadd.f32 0.0, %v5210
        %v5212 = vpop.f32.mrb[0].mxu0
        %5213 = vmatprep.mubr.f32.mxu0 %v3947
        %5214 = vmatmul.mubr.f32.gmra.mrb[0].mxu0 %v4018
        %v5215 = vpop.f32.mrb[0].mxu0
        %v5216 = vadd.f32 0.0, %v5215
        %v5217 = vpop.f32.mrb[0].mxu0
        %5218 = vmatprep.mubr.f32.mxu0 %v3948
        %5219 = vmatmul.mubr.f32.gmra.mrb[0].mxu0 %v4085
        %v5220 = vpop.f32.mrb[0].mxu0
        %v5221 = vadd.f32 0.0, %v5220
        %v5222 = vpop.f32.mrb[0].mxu0
        %5223 = vmatprep.mubr.f32.mxu0 %v3949
        %5224 = vmatmul.mubr.f32.gmra.mrb[0].mxu0 %v4021
        %v5225 = vpop.f32.mrb[0].mxu0
        %v5226 = vadd.f32 0.0, %v5225
        %v5227 = vpop.f32.mrb[0].mxu0
        %5228 = vmatprep.mubr.f32.mxu0 %v3950
        %5229 = vmatmul.mubr.f32.gmra.mrb[0].mxu0 %v4086
        %v5230 = vpop.f32.mrb[0].mxu0
        %v5231 = vadd.f32 0.0, %v5230
        %v5232 = vpop.f32.mrb[0].mxu0
        %5233 = vmatprep.mubr.f32.mxu0 %v3951
        %5234 = vmatmul.mubr.f32.gmra.mrb[0].mxu0 %v4024
        %v5235 = vpop.f32.mrb[0].mxu0
        %v5236 = vadd.f32 0.0, %v5235
        %v5237 = vpop.f32.mrb[0].mxu0
        %5238 = vmatprep.mubr.f32.mxu0 %v3952
        %5239 = vmatmul.mubr.f32.gmra.mrb[0].mxu0 %v4087
        %v5240 = vpop.f32.mrb[0].mxu0
        %v5241 = vadd.f32 0.0, %v5240
        %v5242 = vpop.f32.mrb[0].mxu0
        %5243 = vmatprep.mubr.f32.mxu0 %v3953
        %5244 = vmatmul.mubr.f32.gmra.mrb[0].mxu0 %v4027
        %v5245 = vpop.f32.mrb[0].mxu0
        %v5246 = vadd.f32 0.0, %v5245
        %v5247 = vpop.f32.mrb[0].mxu0
        %5248 = vmatprep.mubr.f32.mxu0 %v3954
        %5249 = vmatmul.mubr.f32.gmra.mrb[0].mxu0 %v4088
        %v5250 = vpop.f32.mrb[0].mxu0
        %v5251 = vadd.f32 0.0, %v5250
        %v5252 = vpop.f32.mrb[0].mxu0
        %5253 = vmatprep.mubr.f32.mxu0 %v3955
        %5254 = vmatmul.mubr.f32.gmra.mrb[0].mxu0 %v4030
        %v5255 = vpop.f32.mrb[0].mxu0
        %v5256 = vadd.f32 0.0, %v5255
        %v5257 = vpop.f32.mrb[0].mxu0
        %5258 = vmatprep.mubr.f32.mxu0 %v3956
        %5259 = vmatmul.mubr.f32.gmra.mrb[0].mxu0 %v4089
        %v5260 = vpop.f32.mrb[0].mxu0
        %v5261 = vadd.f32 0.0, %v5260
        %v5262 = vpop.f32.mrb[0].mxu0
        %5263 = vmatprep.mubr.f32.mxu0 %v3957
        %5264 = vmatmul.mubr.f32.gmra.mrb[0].mxu0 %v4033
        %v5265 = vpop.f32.mrb[0].mxu0
        %v5266 = vadd.f32 0.0, %v5265
        %v5267 = vpop.f32.mrb[0].mxu0
        %5268 = vmatprep.mubr.f32.mxu0 %v3958
        %5269 = vmatmul.mubr.f32.gmra.mrb[0].mxu0 %v4090
        %v5270 = vpop.f32.mrb[0].mxu0
        %v5271 = vadd.f32 0.0, %v5270
        %v5272 = vpop.f32.mrb[0].mxu0
        %5273 = vmatprep.mubr.f32.mxu0 %v3959
        %5274 = vmatmul.mubr.f32.gmra.mrb[0].mxu0 %v4036
        %v5275 = vpop.f32.mrb[0].mxu0
        %v5276 = vadd.f32 0.0, %v5275
        %v5277 = vpop.f32.mrb[0].mxu0
        %5278 = vmatprep.mubr.f32.mxu0 %v3960
        %5279 = vmatmul.mubr.f32.gmra.mrb[0].mxu0 %v4091
        %v5280 = vpop.f32.mrb[0].mxu0
        %v5281 = vadd.f32 0.0, %v5280
        %v5282 = vpop.f32.mrb[0].mxu0
        %5283 = vmatprep.mubr.f32.mxu0 %v3961
        %5284 = vmatmul.mubr.f32.gmra.mrb[0].mxu0 %v4039
        %v5285 = vpop.f32.mrb[0].mxu0
        %v5286 = vadd.f32 0.0, %v5285
        %v5287 = vpop.f32.mrb[0].mxu0
        %5288 = vmatprep.mubr.f32.mxu0 %v3962
        %5289 = vmatmul.mubr.f32.gmra.mrb[0].mxu0 %v4092
        %v5290 = vpop.f32.mrb[0].mxu0
        %v5291 = vadd.f32 0.0, %v5290
        %v5292 = vpop.f32.mrb[0].mxu0
        %5293 = vmatprep.mubr.f32.mxu0 %v3963
        %5294 = vmatmul.mubr.f32.gmra.mrb[0].mxu0 %v4042
        %v5295 = vpop.f32.mrb[0].mxu0
        %v5296 = vadd.f32 0.0, %v5295
        %v5297 = vpop.f32.mrb[0].mxu0
        %5298 = vmatprep.mubr.f32.mxu0 %v3964
        %5299 = vmatmul.mubr.f32.gmra.mrb[0].mxu0 %v4093
        %v5300 = vpop.f32.mrb[0].mxu0
        %v5301 = vadd.f32 0.0, %v5300
        %v5302 = vpop.f32.mrb[0].mxu0
        %5303 = vmatprep.mubr.f32.mxu0 %v3965
        %5304 = vmatmul.mubr.f32.gmra.mrb[0].mxu0 %v4045
        %v5305 = vpop.f32.mrb[0].mxu0
        %v5306 = vadd.f32 0.0, %v5305
        %v5307 = vpop.f32.mrb[0].mxu0
        %5308 = vdwg.mxu0
        %5309 = vmatprep.subr.mxu0 0.0
        %5310 = vmatpush1.msra.mxu0 %v420
        %5311 = vmatprep.subr.mxu0 0.0
        %5312 = vmatpush1.msra.mxu0 %v421
        %5313 = vmatprep.subr.mxu0 0.0
        %5314 = vmatpush1.msra.mxu0 %v422
        %5315 = vmatprep.subr.mxu0 0.0
        %5316 = vmatpush1.msra.mxu0 %v423
        %5317 = vmatprep.subr.mxu0 0.0
        %5318 = vmatpush1.msra.mxu0 %v424
        %5319 = vmatprep.subr.mxu0 0.0
        %5320 = vmatpush1.msra.mxu0 %v425
        %5321 = vmatprep.subr.mxu0 0.0
        %5322 = vmatpush1.msra.mxu0 %v426
        %5323 = vmatprep.subr.mxu0 0.0
        %5324 = vmatpush1.msra.mxu0 %v427
        %5325 = vmatprep.subr.mxu0 0.0
        %5326 = vmatpush1.msra.mxu0 %v428
        %5327 = vmatprep.subr.mxu0 0.0
        %5328 = vmatpush1.msra.mxu0 %v429
        %5329 = vmatprep.subr.mxu0 0.0
        %5330 = vmatpush1.msra.mxu0 %v430
        %5331 = vmatprep.subr.mxu0 0.0
        %5332 = vmatpush1.msra.mxu0 %v431
        %5333 = vmatprep.subr.mxu0 0.0
        %5334 = vmatpush1.msra.mxu0 %v432
        %5335 = vmatprep.subr.mxu0 0.0
        %5336 = vmatpush1.msra.mxu0 %v433
        %5337 = vmatprep.subr.mxu0 0.0
        %5338 = vmatpush1.msra.mxu0 %v434
        %5339 = vmatprep.subr.mxu0 0.0
        %5340 = vmatpush1.msra.mxu0 %v435
        %5341 = vmatprep.subr.mxu0 0.0
        %5342 = vmatpush1.msra.mxu0 0.0
        %5343 = vmatprep.subr.mxu0 0.0
        %5344 = vmatpush1.msra.mxu0 0.0
        %5345 = vmatprep.subr.mxu0 0.0
        %5346 = vmatpush1.msra.mxu0 0.0
        %5347 = vmatprep.subr.mxu0 0.0
        %5348 = vmatpush1.msra.mxu0 0.0
        %5349 = vmatprep.subr.mxu0 0.0
        %5350 = vmatpush1.msra.mxu0 0.0
        %5351 = vmatprep.subr.mxu0 0.0
        %5352 = vmatpush1.msra.mxu0 0.0
        %5353 = vmatprep.subr.mxu0 0.0
        %5354 = vmatpush1.msra.mxu0 0.0
        %5355 = vmatprep.subr.mxu0 0.0
        %5356 = vmatpush1.msra.mxu0 0.0
        %5357 = vmatprep.subr.mxu0 0.0
        %5358 = vmatpush1.msra.mxu0 0.0
        %5359 = vmatprep.subr.mxu0 0.0
        %5360 = vmatpush1.msra.mxu0 0.0
        %5361 = vmatprep.subr.mxu0 0.0
        %5362 = vmatpush1.msra.mxu0 0.0
        %5363 = vmatprep.subr.mxu0 0.0
        %5364 = vmatpush1.msra.mxu0 0.0
        %5365 = vmatprep.subr.mxu0 0.0
        %5366 = vmatpush1.msra.mxu0 0.0
        %5367 = vmatprep.subr.mxu0 0.0
        %5368 = vmatpush1.msra.mxu0 0.0
        %5369 = vmatprep.subr.mxu0 0.0
        %5370 = vmatpush1.msra.mxu0 0.0
        %5371 = vmatprep.subr.mxu0 0.0
        %5372 = vmatpush1.msra.mxu0 0.0
        %5373 = vmatprep.mubr.f32.mxu0 0.0
        %5374 = vmatmul.mubr.f32.gmra.mrb[0].mxu0 %v4096
        %v5375 = vpop.f32.mrb[0].mxu0
        %v5376 = vpop.f32.mrb[0].mxu0
        %5377 = vmatprep.mubr.f32.mxu0 0.0
        %5378 = vmatmul.mubr.f32.gmra.mrb[0].mxu0 %v4174
        %v5379 = vpop.f32.mrb[0].mxu0
        %v5380 = vpop.f32.mrb[0].mxu0
        %5381 = vmatprep.mubr.f32.mxu0 0.0
        %5382 = vmatmul.mubr.f32.gmra.mrb[0].mxu0 %v4099
        %v5383 = vpop.f32.mrb[0].mxu0
        %v5384 = vadd.f32 %v5161, %v5383
        %v5385 = vpop.f32.mrb[0].mxu0
        %5386 = vmatprep.mubr.f32.mxu0 0.0
        %5387 = vmatmul.mubr.f32.gmra.mrb[0].mxu0 %v4175
        %v5388 = vpop.f32.mrb[0].mxu0
        %v5389 = vadd.f32 %v5166, %v5388
        %v5390 = vpop.f32.mrb[0].mxu0
        %5391 = vmatprep.mubr.f32.mxu0 0.0
        %5392 = vmatmul.mubr.f32.gmra.mrb[0].mxu0 %v4102
        %v5393 = vpop.f32.mrb[0].mxu0
        %v5394 = vadd.f32 %v5171, %v5393
        %v5395 = vpop.f32.mrb[0].mxu0
        %5396 = vmatprep.mubr.f32.mxu0 0.0
        %5397 = vmatmul.mubr.f32.gmra.mrb[0].mxu0 %v4176
        %v5398 = vpop.f32.mrb[0].mxu0
        %v5399 = vadd.f32 %v5176, %v5398
        %v5400 = vpop.f32.mrb[0].mxu0
        %5401 = vmatprep.mubr.f32.mxu0 0.0
        %5402 = vmatmul.mubr.f32.gmra.mrb[0].mxu0 %v4105
        %v5403 = vpop.f32.mrb[0].mxu0
        %v5404 = vadd.f32 %v5181, %v5403
        %v5405 = vpop.f32.mrb[0].mxu0
        %5406 = vmatprep.mubr.f32.mxu0 0.0
        %5407 = vmatmul.mubr.f32.gmra.mrb[0].mxu0 %v4177
        %v5408 = vpop.f32.mrb[0].mxu0
        %v5409 = vadd.f32 %v5186, %v5408
        %v5410 = vpop.f32.mrb[0].mxu0
        %5411 = vmatprep.mubr.f32.mxu0 0.0
        %5412 = vmatmul.mubr.f32.gmra.mrb[0].mxu0 %v4108
        %v5413 = vpop.f32.mrb[0].mxu0
        %v5414 = vadd.f32 %v5191, %v5413
        %v5415 = vpop.f32.mrb[0].mxu0
        %5416 = vmatprep.mubr.f32.mxu0 0.0
        %5417 = vmatmul.mubr.f32.gmra.mrb[0].mxu0 %v4178
        %v5418 = vpop.f32.mrb[0].mxu0
        %v5419 = vadd.f32 %v5196, %v5418
        %v5420 = vpop.f32.mrb[0].mxu0
        %5421 = vmatprep.mubr.f32.mxu0 0.0
        %5422 = vmatmul.mubr.f32.gmra.mrb[0].mxu0 %v4111
        %v5423 = vpop.f32.mrb[0].mxu0
        %v5424 = vadd.f32 %v5201, %v5423
        %v5425 = vpop.f32.mrb[0].mxu0
        %5426 = vmatprep.mubr.f32.mxu0 0.0
        %5427 = vmatmul.mubr.f32.gmra.mrb[0].mxu0 %v4179
        %v5428 = vpop.f32.mrb[0].mxu0
        %v5429 = vadd.f32 %v5206, %v5428
        %v5430 = vpop.f32.mrb[0].mxu0
        %5431 = vmatprep.mubr.f32.mxu0 0.0
        %5432 = vmatmul.mubr.f32.gmra.mrb[0].mxu0 %v4114
        %v5433 = vpop.f32.mrb[0].mxu0
        %v5434 = vadd.f32 %v5211, %v5433
        %v5435 = vpop.f32.mrb[0].mxu0
        %5436 = vmatprep.mubr.f32.mxu0 0.0
        %5437 = vmatmul.mubr.f32.gmra.mrb[0].mxu0 %v4180
        %v5438 = vpop.f32.mrb[0].mxu0
        %v5439 = vadd.f32 %v5216, %v5438
        %v5440 = vpop.f32.mrb[0].mxu0
        %5441 = vmatprep.mubr.f32.mxu0 0.0
        %5442 = vmatmul.mubr.f32.gmra.mrb[0].mxu0 %v4117
        %v5443 = vpop.f32.mrb[0].mxu0
        %v5444 = vadd.f32 %v5221, %v5443
        %v5445 = vpop.f32.mrb[0].mxu0
        %5446 = vmatprep.mubr.f32.mxu0 0.0
        %5447 = vmatmul.mubr.f32.gmra.mrb[0].mxu0 %v4181
        %v5448 = vpop.f32.mrb[0].mxu0
        %v5449 = vadd.f32 %v5226, %v5448
        %v5450 = vpop.f32.mrb[0].mxu0
        %5451 = vmatprep.mubr.f32.mxu0 0.0
        %5452 = vmatmul.mubr.f32.gmra.mrb[0].mxu0 %v4120
        %v5453 = vpop.f32.mrb[0].mxu0
        %v5454 = vadd.f32 %v5231, %v5453
        %v5455 = vpop.f32.mrb[0].mxu0
        %5456 = vmatprep.mubr.f32.mxu0 0.0
        %5457 = vmatmul.mubr.f32.gmra.mrb[0].mxu0 %v4182
        %v5458 = vpop.f32.mrb[0].mxu0
        %v5459 = vadd.f32 %v5236, %v5458
        %v5460 = vpop.f32.mrb[0].mxu0
        %5461 = vmatprep.mubr.f32.mxu0 0.0
        %5462 = vmatmul.mubr.f32.gmra.mrb[0].mxu0 %v4123
        %v5463 = vpop.f32.mrb[0].mxu0
        %v5464 = vadd.f32 %v5241, %v5463
        %v5465 = vpop.f32.mrb[0].mxu0
        %5466 = vmatprep.mubr.f32.mxu0 0.0
        %5467 = vmatmul.mubr.f32.gmra.mrb[0].mxu0 %v4183
        %v5468 = vpop.f32.mrb[0].mxu0
        %v5469 = vadd.f32 %v5246, %v5468
        %v5470 = vpop.f32.mrb[0].mxu0
        %5471 = vmatprep.mubr.f32.mxu0 0.0
        %5472 = vmatmul.mubr.f32.gmra.mrb[0].mxu0 %v4126
        %v5473 = vpop.f32.mrb[0].mxu0
        %v5474 = vadd.f32 %v5251, %v5473
        %v5475 = vpop.f32.mrb[0].mxu0
        %5476 = vmatprep.mubr.f32.mxu0 0.0
        %5477 = vmatmul.mubr.f32.gmra.mrb[0].mxu0 %v4184
        %v5478 = vpop.f32.mrb[0].mxu0
        %v5479 = vadd.f32 %v5256, %v5478
        %v5480 = vpop.f32.mrb[0].mxu0
        %5481 = vmatprep.mubr.f32.mxu0 0.0
        %5482 = vmatmul.mubr.f32.gmra.mrb[0].mxu0 %v4129
        %v5483 = vpop.f32.mrb[0].mxu0
        %v5484 = vadd.f32 %v5261, %v5483
        %v5485 = vpop.f32.mrb[0].mxu0
        %5486 = vmatprep.mubr.f32.mxu0 0.0
        %5487 = vmatmul.mubr.f32.gmra.mrb[0].mxu0 %v4185
        %v5488 = vpop.f32.mrb[0].mxu0
        %v5489 = vadd.f32 %v5266, %v5488
        %v5490 = vpop.f32.mrb[0].mxu0
        %5491 = vmatprep.mubr.f32.mxu0 0.0
        %5492 = vmatmul.mubr.f32.gmra.mrb[0].mxu0 %v4132
        %v5493 = vpop.f32.mrb[0].mxu0
        %v5494 = vadd.f32 %v5271, %v5493
        %v5495 = vpop.f32.mrb[0].mxu0
        %5496 = vmatprep.mubr.f32.mxu0 0.0
        %5497 = vmatmul.mubr.f32.gmra.mrb[0].mxu0 %v4186
        %v5498 = vpop.f32.mrb[0].mxu0
        %v5499 = vadd.f32 %v5276, %v5498
        %v5500 = vpop.f32.mrb[0].mxu0
        %5501 = vmatprep.mubr.f32.mxu0 0.0
        %5502 = vmatmul.mubr.f32.gmra.mrb[0].mxu0 %v4135
        %v5503 = vpop.f32.mrb[0].mxu0
        %v5504 = vadd.f32 %v5281, %v5503
        %v5505 = vpop.f32.mrb[0].mxu0
        %5506 = vmatprep.mubr.f32.mxu0 0.0
        %5507 = vmatmul.mubr.f32.gmra.mrb[0].mxu0 %v4187
        %v5508 = vpop.f32.mrb[0].mxu0
        %v5509 = vadd.f32 %v5286, %v5508
        %v5510 = vpop.f32.mrb[0].mxu0
        %5511 = vmatprep.mubr.f32.mxu0 0.0
        %5512 = vmatmul.mubr.f32.gmra.mrb[0].mxu0 %v4138
        %v5513 = vpop.f32.mrb[0].mxu0
        %v5514 = vadd.f32 %v5291, %v5513
        %v5515 = vpop.f32.mrb[0].mxu0
        %5516 = vmatprep.mubr.f32.mxu0 0.0
        %5517 = vmatmul.mubr.f32.gmra.mrb[0].mxu0 %v4188
        %v5518 = vpop.f32.mrb[0].mxu0
        %v5519 = vadd.f32 %v5296, %v5518
        %v5520 = vpop.f32.mrb[0].mxu0
        %5521 = vmatprep.mubr.f32.mxu0 0.0
        %5522 = vmatmul.mubr.f32.gmra.mrb[0].mxu0 %v4141
        %v5523 = vpop.f32.mrb[0].mxu0
        %v5524 = vadd.f32 %v5301, %v5523
        %v5525 = vpop.f32.mrb[0].mxu0
        %5526 = vmatprep.mubr.f32.mxu0 0.0
        %5527 = vmatmul.mubr.f32.gmra.mrb[0].mxu0 %v4189
        %v5528 = vpop.f32.mrb[0].mxu0
        %v5529 = vadd.f32 %v5306, %v5528
        %v5530 = vpop.f32.mrb[0].mxu0
        %5531 = vdwg.mxu0
        %v5532 = vadd.f32 %v4928, 0.0
        %v5533 = vadd.f32 %v4933, 0.0
        %v5534 = vadd.f32 %v4938, %v4480
        %v5535 = vadd.f32 %v4943, %v4485
        %v5536 = vadd.f32 %v4948, %v4490
        %v5537 = vadd.f32 %v4953, %v4495
        %v5538 = vadd.f32 %v4958, %v4500
        %v5539 = vadd.f32 %v4963, %v4505
        %v5540 = vadd.f32 %v4968, %v4510
        %v5541 = vadd.f32 %v4973, %v4515
        %v5542 = vadd.f32 %v4978, %v4520
        %v5543 = vadd.f32 %v4983, %v4525
        %v5544 = vadd.f32 %v4988, %v4530
        %v5545 = vadd.f32 %v4993, %v4535
        %v5546 = vadd.f32 %v4998, %v4540
        %v5547 = vadd.f32 %v5003, %v4545
        %v5548 = vadd.f32 %v5008, %v4550
        %v5549 = vadd.f32 %v5013, %v4555
        %v5550 = vadd.f32 %v5018, %v4560
        %v5551 = vadd.f32 %v5023, %v4565
        %v5552 = vadd.f32 %v5028, %v4570
        %v5553 = vadd.f32 %v5033, %v4575
        %v5554 = vadd.f32 %v5038, %v4580
        %v5555 = vadd.f32 %v5043, %v4585
        %v5556 = vadd.f32 %v5048, %v4590
        %v5557 = vadd.f32 %v5053, %v4595
        %v5558 = vadd.f32 %v5058, %v4600
        %v5559 = vadd.f32 %v5063, %v4605
        %v5560 = vadd.f32 %v5068, %v4610
        %v5561 = vadd.f32 %v5073, %v4615
        %v5562 = vadd.f32 %v5078, %v4620
        %v5563 = vadd.f32 %v5083, %v4625
        %v5564 = vadd.f32 %v5532, %v5384
        %v5565 = vadd.f32 %v5533, %v5389
        %v5566 = vadd.f32 %v5534, %v5394
        %v5567 = vadd.f32 %v5535, %v5399
        %v5568 = vadd.f32 %v5536, %v5404
        %v5569 = vadd.f32 %v5537, %v5409
        %v5570 = vadd.f32 %v5538, %v5414
        %v5571 = vadd.f32 %v5539, %v5419
        %v5572 = vadd.f32 %v5540, %v5424
        %v5573 = vadd.f32 %v5541, %v5429
        %v5574 = vadd.f32 %v5542, %v5434
        %v5575 = vadd.f32 %v5543, %v5439
        %v5576 = vadd.f32 %v5544, %v5444
        %v5577 = vadd.f32 %v5545, %v5449
        %v5578 = vadd.f32 %v5546, %v5454
        %v5579 = vadd.f32 %v5547, %v5459
        %v5580 = vadd.f32 %v5548, %v5464
        %v5581 = vadd.f32 %v5549, %v5469
        %v5582 = vadd.f32 %v5550, %v5474
        %v5583 = vadd.f32 %v5551, %v5479
        %v5584 = vadd.f32 %v5552, %v5484
        %v5585 = vadd.f32 %v5553, %v5489
        %v5586 = vadd.f32 %v5554, %v5494
        %v5587 = vadd.f32 %v5555, %v5499
        %v5588 = vadd.f32 %v5556, %v5504
        %v5589 = vadd.f32 %v5557, %v5509
        %v5590 = vadd.f32 %v5558, %v5514
        %v5591 = vadd.f32 %v5559, %v5519
        %v5592 = vadd.f32 %v5560, %v5524
        %v5593 = vadd.f32 %v5561, %v5529
        %v5594 = vadd.f32 %v5562, 0.0
        %v5595 = vadd.f32 %v5563, 0.0
        %v5596 = vmul.f32 %v5564, %v2072
        %v5597 = vmul.f32 %v5565, %v2072
        %v5598 = vmul.f32 %v5566, %v2072
        %v5599 = vmul.f32 %v5567, %v2072
        %v5600 = vmul.f32 %v5568, %v2072
        %v5601 = vmul.f32 %v5569, %v2072
        %v5602 = vmul.f32 %v5570, %v2072
        %v5603 = vmul.f32 %v5571, %v2072
        %v5604 = vmul.f32 %v5572, %v2072
        %v5605 = vmul.f32 %v5573, %v2072
        %v5606 = vmul.f32 %v5574, %v2072
        %v5607 = vmul.f32 %v5575, %v2072
        %v5608 = vmul.f32 %v5576, %v2072
        %v5609 = vmul.f32 %v5577, %v2072
        %v5610 = vmul.f32 %v5578, %v2072
        %v5611 = vmul.f32 %v5579, %v2072
        %v5612 = vmul.f32 %v5580, %v2072
        %v5613 = vmul.f32 %v5581, %v2072
        %v5614 = vmul.f32 %v5582, %v2072
        %v5615 = vmul.f32 %v5583, %v2072
        %v5616 = vmul.f32 %v5584, %v2072
        %v5617 = vmul.f32 %v5585, %v2072
        %v5618 = vmul.f32 %v5586, %v2072
        %v5619 = vmul.f32 %v5587, %v2072
        %v5620 = vmul.f32 %v5588, %v2072
        %v5621 = vmul.f32 %v5589, %v2072
        %v5622 = vmul.f32 %v5590, %v2072
        %v5623 = vmul.f32 %v5591, %v2072
        %v5624 = vmul.f32 %v5592, %v2072
        %v5625 = vmul.f32 %v5593, %v2072
        %v5626 = vmul.f32 %v5594, %v2072
        %v5627 = vmul.f32 %v5595, %v2072
        %v5628 = vadd.f32 %v5596, %v2110
        %v5629 = vadd.f32 %v5597, %v2110
        %v5630 = vadd.f32 %v5598, %v2110
        %v5631 = vadd.f32 %v5599, %v2110
        %v5632 = vadd.f32 %v5600, %v2110
        %v5633 = vadd.f32 %v5601, %v2110
        %v5634 = vadd.f32 %v5602, %v2110
        %v5635 = vadd.f32 %v5603, %v2110
        %v5636 = vadd.f32 %v5604, %v2110
        %v5637 = vadd.f32 %v5605, %v2110
        %v5638 = vadd.f32 %v5606, %v2110
        %v5639 = vadd.f32 %v5607, %v2110
        %v5640 = vadd.f32 %v5608, %v2110
        %v5641 = vadd.f32 %v5609, %v2110
        %v5642 = vadd.f32 %v5610, %v2110
        %v5643 = vadd.f32 %v5611, %v2110
        %v5644 = vadd.f32 %v5612, %v2110
        %v5645 = vadd.f32 %v5613, %v2110
        %v5646 = vadd.f32 %v5614, %v2110
        %v5647 = vadd.f32 %v5615, %v2110
        %v5648 = vadd.f32 %v5616, %v2110
        %v5649 = vadd.f32 %v5617, %v2110
        %v5650 = vadd.f32 %v5618, %v2110
        %v5651 = vadd.f32 %v5619, %v2110
        %v5652 = vadd.f32 %v5620, %v2110
        %v5653 = vadd.f32 %v5621, %v2110
        %v5654 = vadd.f32 %v5622, %v2110
        %v5655 = vadd.f32 %v5623, %v2110
        %v5656 = vadd.f32 %v5624, %v2110
        %v5657 = vadd.f32 %v5625, %v2110
        %v5658 = vadd.f32 %v5626, %v2110
        %v5659 = vadd.f32 %v5627, %v2110
        %v5660 = vmax.f32 %v5628, 0.0
        %v5661 = vmax.f32 %v5629, 0.0
        %v5662 = vmax.f32 %v5630, 0.0
        %v5663 = vmax.f32 %v5631, 0.0
        %v5664 = vmax.f32 %v5632, 0.0
        %v5665 = vmax.f32 %v5633, 0.0
        %v5666 = vmax.f32 %v5634, 0.0
        %v5667 = vmax.f32 %v5635, 0.0
        %v5668 = vmax.f32 %v5636, 0.0
        %v5669 = vmax.f32 %v5637, 0.0
        %v5670 = vmax.f32 %v5638, 0.0
        %v5671 = vmax.f32 %v5639, 0.0
        %v5672 = vmax.f32 %v5640, 0.0
        %v5673 = vmax.f32 %v5641, 0.0
        %v5674 = vmax.f32 %v5642, 0.0
        %v5675 = vmax.f32 %v5643, 0.0
        %v5676 = vmax.f32 %v5644, 0.0
        %v5677 = vmax.f32 %v5645, 0.0
        %v5678 = vmax.f32 %v5646, 0.0
        %v5679 = vmax.f32 %v5647, 0.0
        %v5680 = vmax.f32 %v5648, 0.0
        %v5681 = vmax.f32 %v5649, 0.0
        %v5682 = vmax.f32 %v5650, 0.0
        %v5683 = vmax.f32 %v5651, 0.0
        %v5684 = vmax.f32 %v5652, 0.0
        %v5685 = vmax.f32 %v5653, 0.0
        %v5686 = vmax.f32 %v5654, 0.0
        %v5687 = vmax.f32 %v5655, 0.0
        %v5688 = vmax.f32 %v5656, 0.0
        %v5689 = vmax.f32 %v5657, 0.0
        %v5690 = vmax.f32 %v5658, 0.0
        %v5691 = vmax.f32 %v5659, 0.0
        %5692 = vst [vmem:[%s255] sm:$0xff] %v5660
        %5693 = vst [vmem:[%s255 + $0x8] sm:$0xff] %v5661
        %5694 = vst [vmem:[%s255 + $0x10] sm:$0xff] %v5662
        %5695 = vst [vmem:[%s255 + $0x18] sm:$0xff] %v5663
        %5696 = vst [vmem:[%s255 + $0x20] sm:$0xff] %v5664
        %5697 = vst [vmem:[%s255 + $0x28] sm:$0xff] %v5665
        %5698 = vst [vmem:[%s255 + $0x30] sm:$0xff] %v5666
        %5699 = vst [vmem:[%s255 + $0x38] sm:$0xff] %v5667
        %5700 = vst [vmem:[%s255 + $0x40] sm:$0xff] %v5668
        %5701 = vst [vmem:[%s255 + $0x48] sm:$0xff] %v5669
        %5702 = vst [vmem:[%s255 + $0x50] sm:$0xff] %v5670
        %5703 = vst [vmem:[%s255 + $0x58] sm:$0xff] %v5671
        %5704 = vst [vmem:[%s255 + $0x60] sm:$0xff] %v5672
        %5705 = vst [vmem:[%s255 + $0x68] sm:$0xff] %v5673
        %5706 = vst [vmem:[%s255 + $0x70] sm:$0xff] %v5674
        %5707 = vst [vmem:[%s255 + $0x78] sm:$0xff] %v5675
        %5708 = vst [vmem:[%s255 + $0x80] sm:$0xff] %v5676
        %5709 = vst [vmem:[%s255 + $0x88] sm:$0xff] %v5677
        %5710 = vst [vmem:[%s255 + $0x90] sm:$0xff] %v5678
        %5711 = vst [vmem:[%s255 + $0x98] sm:$0xff] %v5679
        %5712 = vst [vmem:[%s255 + $0xa0] sm:$0xff] %v5680
        %5713 = vst [vmem:[%s255 + $0xa8] sm:$0xff] %v5681
        %5714 = vst [vmem:[%s255 + $0xb0] sm:$0xff] %v5682
        %5715 = vst [vmem:[%s255 + $0xb8] sm:$0xff] %v5683
        %5716 = vst [vmem:[%s255 + $0xc0] sm:$0xff] %v5684
        %5717 = vst [vmem:[%s255 + $0xc8] sm:$0xff] %v5685
        %5718 = vst [vmem:[%s255 + $0xd0] sm:$0xff] %v5686
        %5719 = vst [vmem:[%s255 + $0xd8] sm:$0xff] %v5687
        %5720 = vst [vmem:[%s255 + $0xe0] sm:$0xff] %v5688
        %5721 = vst [vmem:[%s255 + $0xe8] sm:$0xff] %v5689
        %5722 = vst [vmem:[%s255 + $0xf0] sm:$0xff] %v5690
        %5723 = vst [vmem:[%s255 + $0xf8] sm:$0xff] %v5691
        %s5724 = sand.u32 %s120, 1
        %s5725 = scalar_lea.sflag [#allocation4], %s5724
        %s5726 = sand.u32 %s120, 1
        %s5727 = smul.addr %s5726, 256
        %s5728 = scalar_lea.vmem [#allocation10], %s5727
        // Predicated region
        $region53: #{tpu_custom_call.1} parent=35 // pred_check
          %p5729 = pneg %p130
        $region54: #{tpu_custom_call.1} parent=35 // pred_check_branch
          %5731 = sbr.rel (%p5729) target = $region56
        $region55: #{tpu_custom_call.1} parent=35 // pred_region
          %s5733 = ssub.s32 4096, 4096
          %5734 = vsyncadd %s5725, %s5733
          %s5735 = smul.addr %s23, 32
          %s5736 = smul.addr %s5735, 128
          %s5737 = scalar_lea.hbm %s4, %s5736
          %s5738 = sshll.u32 %s5728, 4
          %s5739 = int_to_ptr.vmem [resolvable:$true] %s5738
          %5744 = dma.vmem_to_hbm [thread:$0]  %s5739, 4096, %s5737, %s5725, 128, 128, 8
        $region56: #{tpu_custom_call.1} parent=35 // pred_fallthru
          _
      $region36: #{tpu_custom_call.1} parent=5 // pred_fallthru
        _
      %p5745 = scmp.le.s32.totalorder 2, %s18
      // Predicated region
      $region57: #{tpu_custom_call.1} parent=5 // pred_check
        %p5746 = pneg %p5745
      $region58: #{tpu_custom_call.1} parent=5 // pred_check_branch
        %5748 = sbr.rel (%p5746) target = $region60
      $region59: #{tpu_custom_call.1} parent=5 // pred_region
        %s5749 = ssub.s32 %s18, 2
        // Predicated region
        $region61: #{tpu_custom_call.1} parent=59 // pred_check
          %p5750 = pneg %p136
        $region62: #{tpu_custom_call.1} parent=59 // pred_check_branch
          %5752 = sbr.rel (%p5750) target = $region64
        $region63: #{tpu_custom_call.1} parent=59 // pred_region
          %s5753 = sand.u32 %s121, 1
          %s5754 = scalar_lea.sflag [#allocation4], %s5753
          %s5755 = sand.u32 %s121, 1
          %s5756 = smul.addr %s5755, 256
          %s5757 = scalar_lea.vmem [#allocation10], %s5756
          %5758 = dma.done %s5754, 4096
        $region64: #{tpu_custom_call.1} parent=59 // pred_fallthru
          _
      $region60: #{tpu_custom_call.1} parent=5 // pred_fallthru
        _
    $region6: #{tpu_custom_call.1} parent=1 // loop_footer
      %s22 = sadd.s32 1, %s18
    $region7: #{tpu_custom_call.1} parent=1 // loop_footer_branch
      %17 = sbr.rel target = $region3
    $region8: #{tpu_custom_call.1} parent=1 // loop_exit
      _
    %5759 = vsyncpa [#allocation3], 1
    %s5760 = scalar_lea.sflag [#allocation3], 1
    %5761 = vsyncpa %s5760, 1
    %5762 = vsyncpa [#allocation6], 1
    %5763 = vsyncpa [#allocation9], 1
    %5764 = vsyncpa [#allocation4], 1
    %s5765 = scalar_lea.sflag [#allocation4], 1
    %5766 = vsyncpa %s5765, 1

</llo_original>
